<compile_context>
chip_gen: v7x
topology: tpu7x:2x2x1
jax: 0.10.0
libtpu: 0.0.40
codegen_flags: <defaults>
</compile_context>

<pallas_src>
import jax
import jax.numpy as jnp
from jax import lax
from jax.experimental import pallas as pl
from jax.experimental.pallas import tpu as pltpu


# --------------------------- small helpers ----------------------------------

def _cdiv(a, b):
    return -(-a // b)


def _round_down(a, m):
    return (a // m) * m


def _vmem_caps():
    """Generation-aware (budget_for_tiles, vmem_limit_cap) in bytes."""
    cap = None
    try:
        info = pltpu.get_tpu_info()
        cap = getattr(info, "vmem_capacity_bytes", None)
    except Exception:
        cap = None
    if not cap or cap <= 0:
        cap = 64 * 1024 * 1024          # conservative default (v7x per-TC VMEM)
    budget = min(cap // 2, 64 * 1024 * 1024)
    limit_cap = min((cap * 3) // 4, 96 * 1024 * 1024)
    return int(budget), int(limit_cap)


def _spec(shape, index_map, buffers=None):
    """BlockSpec with optional deeper input pipelining (ignored if unsupported)."""
    if buffers is not None and buffers != 2:
        try:
            return pl.BlockSpec(shape, index_map,
                                pipeline_mode=pl.Buffered(buffers))
        except (TypeError, AttributeError):
            pass
    return pl.BlockSpec(shape, index_map)


def _normalize_pool(maxpool_kernel):
    if maxpool_kernel is None:
        return None
    if isinstance(maxpool_kernel, int):
        k = (maxpool_kernel, maxpool_kernel)
    else:
        k = tuple(int(v) for v in maxpool_kernel)
    if k == (1, 1):
        return None
    return k


def _flat_per_col(in_ch, hid, num_classes, in_isz, out_isz, x_buffers):
    # Per-column VMEM bytes: multi-buffered x tile, f32 hidden activation,
    # f32 logits/exp/prob temporaries, two double-buffered output tiles.
    return (x_buffers * in_ch * in_isz
            + hid * 4
            + 3 * num_classes * 4
            + 4 * num_classes * out_isz)


def _fused_per_col(in_ch, hid, num_classes, in_isz, out_isz):
    # Double-buffered x tile + in-kernel pooled copy + f32 temporaries + outputs.
    return (2 * in_ch * in_isz
            + in_ch * in_isz
            + hid * 4
            + 3 * num_classes * 4
            + 4 * num_classes * out_isz)


def _pick_tile_flat(hw, batch, per_col, budget, max_tile):
    """Largest lane-dense spatial tile fitting the VMEM budget."""
    cap = max(128, _round_down(budget // per_col, 128))
    tile = min(max_tile, cap)
    if hw <= tile:
        tile = hw                      # full-row block (legal: equals array dim)
    if batch * _cdiv(hw, tile) < 2 and hw > 128:
        # Keep >=2 total grid steps so both v7x TensorCores get work.
        tile = max(128, _round_down(_cdiv(hw, 2), 128))
    return tile


def _pick_fused_rows(hp, kh, w, batch, per_col, budget, max_cols):
    """Pooled rows per block for the fused path (None -> not feasible)."""
    max_fit_cols = budget // per_col
    legal = [r for r in range(1, hp + 1)
             if hp % r == 0 and ((kh * r * w) % 128 == 0 or r == hp)]
    fitting = [r for r in legal if kh * r * w <= max_fit_cols]
    if not fitting:
        return None
    preferred = [r for r in fitting if kh * r * w <= max_cols] or fitting[:1]
    rows = max(preferred)
    if batch == 1 and hp // rows < 2:          # >=2 grid steps for megacore
        smaller = [r for r in preferred if hp // r >= 2]
        if smaller:
            rows = max(smaller)
    return rows


# ------------------------------ kernel ---------------------------------------

def _make_head_kernel(offsets, t_sel):
    """Fused (optional max-pool) + ClassifierFCN (two 1x1 convs + ReLU) + softmax.

    The feature block is a flat [1, C, block_cols] slab of the NCHW map.
    `offsets` are static flat-column offsets whose elementwise max forms the
    (optionally pooled) feature columns; offsets == (0,) means no pooling.
    Only the first `t_sel` columns of each output block are written.
    """
    def kernel(x_ref, w1_ref, b1_ref, w2_ref, b2_ref, logits_ref, probs_ref):
        cdt = jnp.promote_types(x_ref.dtype, w1_ref.dtype)

        # Optional k x k max over statically-offset views of the raw block.
        acc = x_ref[0, :, pl.ds(0, t_sel)]                       # [C, t_sel]
        for off in offsets[1:]:
            acc = jnp.maximum(acc, x_ref[0, :, pl.ds(off, t_sel)])

        # 1x1 conv == matmul over the channel axis; f32 accumulation on MXU.
        w1 = w1_ref[...].astype(cdt)
        h = jnp.dot(w1, acc.astype(cdt), preferred_element_type=jnp.float32)
        h = jnp.maximum(h + b1_ref[...].astype(jnp.float32), 0.0)
        # TODO(synk): Dropout is eval-mode identity (no RNG mask applied).

        w2 = w2_ref[...].astype(cdt)
        logits = jnp.dot(w2, h.astype(cdt), preferred_element_type=jnp.float32)
        logits = logits + b2_ref[...].astype(jnp.float32)        # [NCLS, t_sel]
        logits_ref[0, :, pl.ds(0, t_sel)] = logits.astype(logits_ref.dtype)

        # Softmax over the class axis (few sublane rows -> cheap VPU work).
        m = jnp.max(logits, axis=0, keepdims=True)
        e = jnp.exp(logits - m)
        s = jnp.sum(e, axis=0, keepdims=True)
        probs_ref[0, :, pl.ds(0, t_sel)] = (e / s).astype(probs_ref.dtype)

    return kernel


def _run_head_kernel(x3, w1, b1c, w2, b2c, num_classes, block_cols, offsets,
                     t_sel, out_dtype, vmem_limit, x_buffers=2):
    """pallas_call over grid (batch, column blocks) of the flat [B, C, N] map."""
    B, C, n_cols = x3.shape
    hid = w1.shape[0]
    grid = (B, _cdiv(n_cols, block_cols))
    kern = _make_head_kernel(tuple(offsets), t_sel)

    out_shapes = (
        jax.ShapeDtypeStruct((B, num_classes, n_cols), out_dtype),  # logits
        jax.ShapeDtypeStruct((B, num_classes, n_cols), out_dtype),  # softmax
    )
    return pl.pallas_call(
        kern,
        out_shape=out_shapes,
        grid_spec=pltpu.PrefetchScalarGridSpec(
            num_scalar_prefetch=0,
            grid=grid,
            in_specs=[
                _spec((1, C, block_cols), lambda b, i: (b, 0, i),
                      buffers=x_buffers),                          # features
                pl.BlockSpec((hid, C), lambda b, i: (0, 0)),        # w1 resident
                pl.BlockSpec((hid, 1), lambda b, i: (0, 0)),        # b1
                pl.BlockSpec((num_classes, hid), lambda b, i: (0, 0)),  # w2
                pl.BlockSpec((num_classes, 1), lambda b, i: (0, 0)),    # b2
            ],
            out_specs=[
                pl.BlockSpec((1, num_classes, block_cols), lambda b, i: (b, 0, i)),
                pl.BlockSpec((1, num_classes, block_cols), lambda b, i: (b, 0, i)),
            ],
        ),
        compiler_params=pltpu.CompilerParams(
            dimension_semantics=("parallel", "parallel"),
            vmem_limit_bytes=int(vmem_limit)),
    )(x3, w1, b1c, w2, b2c)


# ------------------------------ forward --------------------------------------

def init_params(key, in_ch, hidden, num_classes, dtype=jnp.float32):
    """Synthetic ClassifierFCN params in PyTorch 1x1-conv layout."""
    k1, k2, k3, k4 = jax.random.split(key, 4)
    w1 = jax.random.normal(k1, (hidden, in_ch), dtype) * (1.0 / jnp.sqrt(in_ch))
    b1 = jax.random.normal(k2, (hidden,), dtype) * 0.01
    w2 = jax.random.normal(k3, (num_classes, hidden), dtype) * (1.0 / jnp.sqrt(hidden))
    b2 = jax.random.normal(k4, (num_classes,), dtype) * 0.01
    return {"w1": w1, "b1": b1, "w2": w2, "b2": b2}


def head_dense_segmentation(x_nchw, params, num_classes, maxpool_kernel=None,
                            head_name="head_0", max_tile=8192):
    """Forward pass. Returns {'model.logits.<name>', 'model.output.<name>'}."""
    # torch.cat over conv_inputs: a single feature-map input is assumed here.
    # TODO(synk): multiple conv_inputs would be a caller-side channel concat.
    x = x_nchw                                  # keep incoming dtype (bf16 friendly)
    w1, b1, w2, b2 = params["w1"], params["b1"], params["w2"], params["b2"]
    hid = w1.shape[0]
    B, C, H, W = x.shape
    assert w1.shape == (hid, C) and w2.shape == (num_classes, hid)
    b1c = b1.reshape(hid, 1)
    b2c = b2.reshape(num_classes, 1)

    out_dtype = x.dtype                         # store logits/probs in input dtype
    in_isz = x.dtype.itemsize
    out_isz = jnp.dtype(out_dtype).itemsize
    w_isz = w1.dtype.itemsize

    budget, limit_cap = _vmem_caps()
    fixed = 2 * (hid * C + num_classes * hid + hid + num_classes) * w_isz
    budget = max(budget - fixed, 1 << 20)

    pool = _normalize_pool(maxpool_kernel)

    if pool is not None:
        kh, kw = pool
        Hp, Wp = H // kh, W // kw
        rows = None
        if (H % kh == 0 and Wp >= 1 and kh * kw <= 16
                and 3 * num_classes <= C):
            per_col = _fused_per_col(C, hid, num_classes, in_isz, out_isz)
            rows = _pick_fused_rows(Hp, kh, W, B, per_col, budget, max_tile)
        if rows is not None:
            # Fused max-pool path: read raw rows, take the k x k max of k^2
            # statically-offset views inside the kernel (no pooled HBM
            # intermediate); outputs keep the window-base columns in place and
            # a cheap strided slice over the small class-channel maps compacts
            # them afterwards.
            block_cols = kh * rows * W
            offsets = tuple(i * W + j for i in range(kh) for j in range(kw))
            t_sel = block_cols - (kh - 1) * W - (kw - 1)
            est = fixed + block_cols * per_col
            vmem_limit = min(max(2 * est, 32 * 1024 * 1024), limit_cap)
            x3 = x.reshape(B, C, H * W)          # free contiguous merge
            logits3, probs3 = _run_head_kernel(
                x3, w1, b1c, w2, b2c, num_classes, block_cols, offsets, t_sel,
                out_dtype, vmem_limit, x_buffers=2)
            logits = logits3.reshape(B, num_classes, H, W)[
                :, :, : Hp * kh : kh, : Wp * kw : kw]
            probs = probs3.reshape(B, num_classes, H, W)[
                :, :, : Hp * kh : kh, : Wp * kw : kw]
            return {"model.logits." + head_name: logits,
                    "model.output." + head_name: probs}

        # TODO(synk): fully lane-compacted in-kernel pooling (deinterleave)
        # does not lower robustly; fall back to a standalone max-pool, which
        # costs one extra HBM round trip of the pooled map.
        x = lax.reduce_window(x, jnp.asarray(-jnp.inf, x.dtype), lax.max,
                              window_dimensions=(1, 1, kh, kw),
                              window_strides=(1, 1, kh, kw),
                              padding="VALID")
        B, C, H, W = x.shape

    # ---- plain (no in-kernel pooling) path ----
    HW = H * W
    x3 = x.reshape(B, C, HW)
    hw_pad = HW
    if HW % 128 != 0 and HW <= 1024:
        # Small maps: pad to a lane-dense width (cheap) to avoid masked stores.
        hw_pad = _cdiv(HW, 128) * 128
        x3 = jnp.pad(x3, ((0, 0), (0, 0), (0, hw_pad - HW)))

    x_buffers = 3
    per_col = _flat_per_col(C, hid, num_classes, in_isz, out_isz, x_buffers)
    tile = _pick_tile_flat(hw_pad, B, per_col, budget, max_tile)
    est = fixed + tile * per_col
    vmem_limit = min(max(2 * est, 32 * 1024 * 1024), limit_cap)

    logits3, probs3 = _run_head_kernel(
        x3, w1, b1c, w2, b2c, num_classes, tile, (0,), tile,
        out_dtype, vmem_limit, x_buffers=x_buffers)
    if hw_pad != HW:
        logits3 = logits3[:, :, :HW]
        probs3 = probs3[:, :, :HW]
    logits = logits3.reshape(B, num_classes, H, W)
    probs = probs3.reshape(B, num_classes, H, W)
    return {"model.logits." + head_name: logits,
            "model.output." + head_name: probs}


# ------------------------------ self-test -------------------------------------

if __name__ == "__main__":
    key = jax.random.PRNGKey(0)
    k_x, k_p = jax.random.split(key)

    # Small shapes: batch=2, in_ch=32, spatial 16x128, hidden 64, 3 classes,
    # maxpool 2x2 -> pooled 8x64.  W=128 keeps the fused-pool path lane-dense.
    B, C, H, W = 2, 32, 16, 128
    hidden, num_classes, maxpool_kernel = 64, 3, 2

    x = jax.random.normal(k_x, (B, C, H, W), jnp.float32)
    params = init_params(k_p, C, hidden, num_classes)

    # Shared pure-JAX reference pieces.
    def _classifier_ref(feat):
        hr = jnp.maximum(jnp.einsum("oc,bchw->bohw", params["w1"], feat)
                         + params["b1"][None, :, None, None], 0.0)
        lr = (jnp.einsum("oc,bchw->bohw", params["w2"], hr)
              + params["b2"][None, :, None, None])
        return lr, jax.nn.softmax(lr, axis=1)

    # --- 1) pooled path (fused max-pool kernel) ---
    out = head_dense_segmentation(x, params, num_classes,
                                  maxpool_kernel=maxpool_kernel)
    logits = jax.block_until_ready(out["model.logits.head_0"])
    probs = jax.block_until_ready(out["model.output.head_0"])
    Hp, Wp = H // maxpool_kernel, W // maxpool_kernel
    assert logits.shape == (B, num_classes, Hp, Wp)
    assert probs.shape == logits.shape

    xr = lax.reduce_window(x, jnp.asarray(-jnp.inf, x.dtype), lax.max,
                           (1, 1, maxpool_kernel, maxpool_kernel),
                           (1, 1, maxpool_kernel, maxpool_kernel), "VALID")
    lr, pr = _classifier_ref(xr)
    assert float(jnp.max(jnp.abs(logits - lr))) < 2e-3
    assert float(jnp.max(jnp.abs(probs - pr))) < 1e-3
    assert bool(jnp.all(jnp.abs(jnp.sum(probs, axis=1) - 1.0) < 1e-3))

    # --- 2) un-pooled path (plain fused-classifier kernel) ---
    out2 = head_dense_segmentation(x, params, num_classes, maxpool_kernel=None)
    logits2 = jax.block_until_ready(out2["model.logits.head_0"])
    probs2 = jax.block_until_ready(out2["model.output.head_0"])
    assert logits2.shape == (B, num_classes, H, W)
    lr2, pr2 = _classifier_ref(x)
    assert float(jnp.max(jnp.abs(logits2 - lr2))) < 2e-3
    assert float(jnp.max(jnp.abs(probs2 - pr2))) < 1e-3

    print("KERNEL_OK")
</pallas_src>

<mosaic_0001>
module attributes {stable_mosaic.version = 11 : i64} {
  func.func @kernel(%arg0: i32, %arg1: i32, %arg2: memref<1x32x2048xf32, #tpu.memory_space<vmem>>, %arg3: memref<64x32xf32, #tpu.memory_space<vmem>>, %arg4: memref<64x1xf32, #tpu.memory_space<vmem>>, %arg5: memref<3x64xf32, #tpu.memory_space<vmem>>, %arg6: memref<3x1xf32, #tpu.memory_space<vmem>>, %arg7: memref<1x3x2048xf32, #tpu.memory_space<vmem>>, %arg8: memref<1x3x2048xf32, #tpu.memory_space<vmem>>) attributes {dimension_semantics = [#tpu.dimension_semantics<parallel>, #tpu.dimension_semantics<parallel>], iteration_bounds = array<i64: 2, 1>, scalar_prefetch = 0 : i64, scratch_operands = 0 : i64, tpu.core_type = #tpu.core_type<tc>, window_params = [{transform_indices = @transform_0, window_bounds = array<i64: 1, 32, 2048>}, {pipeline_mode = #tpu.pipeline_mode<synchronous>, transform_indices = @transform_1, window_bounds = array<i64: 64, 32>}, {pipeline_mode = #tpu.pipeline_mode<synchronous>, transform_indices = @transform_2, window_bounds = array<i64: 64, 1>}, {pipeline_mode = #tpu.pipeline_mode<synchronous>, transform_indices = @transform_3, window_bounds = array<i64: 3, 64>}, {pipeline_mode = #tpu.pipeline_mode<synchronous>, transform_indices = @transform_4, window_bounds = array<i64: 3, 1>}, {transform_indices = @transform_5, window_bounds = array<i64: 1, 3, 2048>}, {transform_indices = @transform_6, window_bounds = array<i64: 1, 3, 2048>}]} {
    %c0 = arith.constant 0 : index
    %c0_0 = arith.constant 0 : index
    %c0_1 = arith.constant 0 : index
    %0 = vector.load %arg2[%c0, %c0_0, %c0_1] : memref<1x32x2048xf32, #tpu.memory_space<vmem>>, vector<1x32x1919xf32>
    %1 = vector.shape_cast %0 : vector<1x32x1919xf32> to vector<32x1919xf32>
    %c0_2 = arith.constant 0 : index
    %c0_3 = arith.constant 0 : index
    %c1 = arith.constant 1 : index
    %2 = vector.load %arg2[%c0_2, %c0_3, %c1] : memref<1x32x2048xf32, #tpu.memory_space<vmem>>, vector<1x32x1919xf32>
    %3 = vector.shape_cast %2 : vector<1x32x1919xf32> to vector<32x1919xf32>
    %4 = arith.maximumf %1, %3 : vector<32x1919xf32>
    %c0_4 = arith.constant 0 : index
    %c0_5 = arith.constant 0 : index
    %c128 = arith.constant 128 : index
    %5 = vector.load %arg2[%c0_4, %c0_5, %c128] : memref<1x32x2048xf32, #tpu.memory_space<vmem>>, vector<1x32x1919xf32>
    %6 = vector.shape_cast %5 : vector<1x32x1919xf32> to vector<32x1919xf32>
    %7 = arith.maximumf %4, %6 : vector<32x1919xf32>
    %c0_6 = arith.constant 0 : index
    %c0_7 = arith.constant 0 : index
    %c129 = arith.constant 129 : index
    %8 = vector.load %arg2[%c0_6, %c0_7, %c129] : memref<1x32x2048xf32, #tpu.memory_space<vmem>>, vector<1x32x1919xf32>
    %9 = vector.shape_cast %8 : vector<1x32x1919xf32> to vector<32x1919xf32>
    %10 = arith.maximumf %7, %9 : vector<32x1919xf32>
    %c0_8 = arith.constant 0 : index
    %c0_9 = arith.constant 0 : index
    %11 = vector.load %arg3[%c0_8, %c0_9] : memref<64x32xf32, #tpu.memory_space<vmem>>, vector<64x32xf32>
    %cst = arith.constant dense<0.000000e+00> : vector<64x1919xf32>
    %12 = tpu.matmul %11, %10, %cst {dimension_numbers = #tpu.dot_dimension_numbers<[1], [0], [0], [1], [0, 0, 1, 1], [], []>} : vector<64x32xf32>, vector<32x1919xf32>, vector<64x1919xf32> -> vector<64x1919xf32>
    %c0_10 = arith.constant 0 : index
    %c0_11 = arith.constant 0 : index
    %13 = vector.load %arg4[%c0_10, %c0_11] : memref<64x1xf32, #tpu.memory_space<vmem>>, vector<64x1xf32>
    %14 = vector.broadcast %13 : vector<64x1xf32> to vector<64x1919xf32>
    %15 = arith.addf %12, %14 : vector<64x1919xf32>
    %cst_12 = arith.constant 0.000000e+00 : f32
    %16 = vector.broadcast %cst_12 : f32 to vector<64x1919xf32>
    %17 = arith.maximumf %15, %16 : vector<64x1919xf32>
    %c0_13 = arith.constant 0 : index
    %c0_14 = arith.constant 0 : index
    %18 = vector.load %arg5[%c0_13, %c0_14] : memref<3x64xf32, #tpu.memory_space<vmem>>, vector<3x64xf32>
    %cst_15 = arith.constant dense<0.000000e+00> : vector<3x1919xf32>
    %19 = tpu.matmul %18, %17, %cst_15 {dimension_numbers = #tpu.dot_dimension_numbers<[1], [0], [0], [1], [0, 0, 1, 1], [], []>} : vector<3x64xf32>, vector<64x1919xf32>, vector<3x1919xf32> -> vector<3x1919xf32>
    %c0_16 = arith.constant 0 : index
    %c0_17 = arith.constant 0 : index
    %20 = vector.load %arg6[%c0_16, %c0_17] : memref<3x1xf32, #tpu.memory_space<vmem>>, vector<3x1xf32>
    %21 = vector.broadcast %20 : vector<3x1xf32> to vector<3x1919xf32>
    %22 = arith.addf %19, %21 : vector<3x1919xf32>
    %c0_18 = arith.constant 0 : index
    %c0_19 = arith.constant 0 : index
    %c0_20 = arith.constant 0 : index
    %23 = vector.load %arg7[%c0_18, %c0_19, %c0_20] : memref<1x3x2048xf32, #tpu.memory_space<vmem>>, vector<1x3x1919xf32>
    %24 = vector.shape_cast %23 : vector<1x3x1919xf32> to vector<3x1919xf32>
    %25 = vector.shape_cast %22 : vector<3x1919xf32> to vector<1x3x1919xf32>
    tpu.vector_store %arg7[%c0_18, %c0_19, %c0_20], %25 {strides = array<i32>} : memref<1x3x2048xf32, #tpu.memory_space<vmem>>, vector<1x3x1919xf32>,
    %cst_21 = arith.constant dense<0xFF800000> : vector<1919xf32>
    %26 = vector.multi_reduction <maximumf>, %22, %cst_21 [0] : vector<3x1919xf32> to vector<1919xf32>
    %27 = vector.shape_cast %26 : vector<1919xf32> to vector<1x1919xf32>
    %28 = vector.broadcast %27 : vector<1x1919xf32> to vector<3x1919xf32>
    %29 = arith.subf %22, %28 : vector<3x1919xf32>
    %30 = math.exp %29 : vector<3x1919xf32>
    %cst_22 = arith.constant dense<0.000000e+00> : vector<1919xf32>
    %31 = vector.multi_reduction <add>, %30, %cst_22 [0] : vector<3x1919xf32> to vector<1919xf32>
    %32 = vector.shape_cast %31 : vector<1919xf32> to vector<1x1919xf32>
    %33 = vector.broadcast %32 : vector<1x1919xf32> to vector<3x1919xf32>
    %34 = arith.divf %30, %33 : vector<3x1919xf32>
    %c0_23 = arith.constant 0 : index
    %c0_24 = arith.constant 0 : index
    %c0_25 = arith.constant 0 : index
    %35 = vector.load %arg8[%c0_23, %c0_24, %c0_25] : memref<1x3x2048xf32, #tpu.memory_space<vmem>>, vector<1x3x1919xf32>
    %36 = vector.shape_cast %35 : vector<1x3x1919xf32> to vector<3x1919xf32>
    %37 = vector.shape_cast %34 : vector<3x1919xf32> to vector<1x3x1919xf32>
    tpu.vector_store %arg8[%c0_23, %c0_24, %c0_25], %37 {strides = array<i32>} : memref<1x3x2048xf32, #tpu.memory_space<vmem>>, vector<1x3x1919xf32>,
    return
  }
  func.func @transform_0(%arg0: i32, %arg1: i32) -> (i32, i32, i32) {
    %c0_i32 = arith.constant 0 : i32
    %c0_i32_0 = arith.constant 0 : i32
    return %arg0, %c0_i32, %arg1 : i32, i32, i32
  }
  func.func @transform_1(%arg0: i32, %arg1: i32) -> (i32, i32) {
    %c0_i32 = arith.constant 0 : i32
    %c0_i32_0 = arith.constant 0 : i32
    %c0_i32_1 = arith.constant 0 : i32
    return %c0_i32, %c0_i32_0 : i32, i32
  }
  func.func @transform_2(%arg0: i32, %arg1: i32) -> (i32, i32) {
    %c0_i32 = arith.constant 0 : i32
    %c0_i32_0 = arith.constant 0 : i32
    %c0_i32_1 = arith.constant 0 : i32
    return %c0_i32, %c0_i32_0 : i32, i32
  }
  func.func @transform_3(%arg0: i32, %arg1: i32) -> (i32, i32) {
    %c0_i32 = arith.constant 0 : i32
    %c0_i32_0 = arith.constant 0 : i32
    %c0_i32_1 = arith.constant 0 : i32
    return %c0_i32, %c0_i32_0 : i32, i32
  }
  func.func @transform_4(%arg0: i32, %arg1: i32) -> (i32, i32) {
    %c0_i32 = arith.constant 0 : i32
    %c0_i32_0 = arith.constant 0 : i32
    %c0_i32_1 = arith.constant 0 : i32
    return %c0_i32, %c0_i32_0 : i32, i32
  }
  func.func @transform_5(%arg0: i32, %arg1: i32) -> (i32, i32, i32) {
    %c0_i32 = arith.constant 0 : i32
    %c0_i32_0 = arith.constant 0 : i32
    return %arg0, %c0_i32, %arg1 : i32, i32, i32
  }
  func.func @transform_6(%arg0: i32, %arg1: i32) -> (i32, i32, i32) {
    %c0_i32 = arith.constant 0 : i32
    %c0_i32_0 = arith.constant 0 : i32
    return %arg0, %c0_i32, %arg1 : i32, i32, i32
  }
}

</mosaic_0001>

<llo_original>
// kernel: tpu_custom_call.1
$region0: #{tpu_custom_call.1}
  #allocation0 [shape = 'u32[]', space=smem, size = 0x4, offset = 0x4, fixed_abs, tag = 'smem constant byte address 0x4 - core index']
  #allocation1 [shape = 'u32[144,128]{1,0:T(1,128)}', space=vmem, size = 0x12000, scoped, tag = 'internal scratch']
  %s0 = inlined_call_operand.hbm [shape: f32[2,32,2048], index: 0, kind: input, shape index: {}]
  %s1 = inlined_call_operand.vmem [shape: f32[64,32], index: 1, kind: input, shape index: {}]
  %s2 = inlined_call_operand.vmem [shape: f32[64,1], index: 2, kind: input, shape index: {}]
  %s3 = inlined_call_operand.vmem [shape: f32[3,64], index: 3, kind: input, shape index: {}]
  %s4 = inlined_call_operand.vmem [shape: f32[3,1], index: 4, kind: input, shape index: {}]
  %s5 = inlined_call_operand.vmem [shape: f32[2,3,2048], index: 5, kind: output, shape index: {0}]
  %s6 = inlined_call_operand.vmem [shape: f32[2,3,2048], index: 6, kind: output, shape index: {1}]
  %7 = xla_tuple %s5, %s6
  %s8 = sld [smem:[#allocation0]]
  $region65: #{tpu_custom_call.1} parent=0
    _
  %s10 = ssub.s32 1, %s8
  %s11 = scalar_select 0, %s10, %s8
  $region1: #{tpu_custom_call.1} parent=0
    #allocation2 [shape = 'u8[524288]{0}', space=vmem, size = 0x80000, scoped, tag = 'input window, operand 0']
    #allocation3 [shape = 's32[2]{0}', space=sflag, size = 0x8, scoped, tag = 'scoped memory for tpu_custom_call.1']
    %12 = vsyncpa [#allocation3], 0
    %s13 = scalar_lea.sflag [#allocation3], 1
    %14 = vsyncpa %s13, 0
    loop: start=0, step=1, limit=4
    $region2: #{tpu_custom_call.1} parent=1 // loop_pre_header
      _
    $region3: #{tpu_custom_call.1} parent=1 // loop_header
      %s16 = sphi 0, %s20
      %p17 = scmp.ge.s32.totalorder %s16, 4
      %s23 = sphi 0, %s35
      %s24 = sphi 0, %s31
      %s25 = sphi 0, %s23
      %s26 = sphi 0, %s24
      %s27 = sphi 0, %s25
      %s28 = sphi 0, %s26
      %s40 = sphi 0, %s42
      %s43 = sphi 0, %s40
      %s44 = sphi 0, %s43
      %s60 = sphi 0, %s44
      %s64 = sphi 0, %s64
      %s66 = sphi 0, %s64
      %s67 = sphi 0, %s66
      %s81 = sphi 0, %s67
      %s85 = sphi 0, %s85
      %s87 = sphi 0, %s85
      %s88 = sphi 0, %s87
      %s102 = sphi 0, %s88
      %s106 = sphi 0, %s106
      %s108 = sphi 0, %s106
      %s109 = sphi 0, %s108
      %s123 = sphi 0, %s109
      %s127 = sphi 0, %s127
      %s129 = sphi 0, %s127
      %s130 = sphi 0, %s129
      %s144 = sphi 0, %s130
      %s152 = sphi 0, %s154
      %s155 = sphi 0, %s152
      %s156 = sphi 0, %s155
      %s172 = sphi 0, %s156
      %s180 = sphi 0, %s182
      %s183 = sphi 0, %s180
      %s184 = sphi 0, %s183
      %s200 = sphi 0, %s184
    $region4: #{tpu_custom_call.1} parent=1 // loop_header_branch
      %19 = sbr.rel (%p17) target = $region8
    $region5: #{tpu_custom_call.1} parent=1 // loop_body
      %s21 = ssub.s32 %s16, 1
      %s22 = ssub.s32 %s16, 2
      %s29 = sadd.s32 1, %s24
      %p30 = scmp.ge.s32.totalorder %s29, 1
      %s31 = scalar_select %p30, 0, %s29
      %s32 = sadd.s32 1, %s23
      %s33 = scalar_select %p30, %s32, %s23
      %p34 = scmp.ge.s32.totalorder %s33, 2
      %s35 = scalar_select %p34, 0, %s33
      %s36 = ssub.s32 %s23, %s35
      %s37 = ssub.s32 %s24, %s31
      %s38 = sor.u32 %s36, %s37
      %p39 = scmp.eq.s32.totalorder %s38, 0
      %s41 = sadd.s32 %s40, 1
      %s42 = scalar_select %p39, %s40, %s41
      %p45 = pneg %p39
      %p46 = scmp.eq.s32.totalorder %s16, 1
      %p47 = por %p45, %p46
      %p48 = scmp.ne.s32.totalorder %s40, %s43
      %p49 = scmp.eq.s32.totalorder %s16, 0
      %p50 = por %p48, %p49
      %p51 = scmp.ne.s32.totalorder %s40, %s43
      %p52 = scmp.eq.s32.totalorder %s21, 1
      %p53 = por %p51, %p52
      %p54 = scmp.ne.s32.totalorder %s43, %s44
      %p55 = scmp.eq.s32.totalorder %s21, 0
      %p56 = por %p54, %p55
      %p57 = scmp.ne.s32.totalorder %s43, %s44
      %p58 = scmp.eq.s32.totalorder %s22, 1
      %p59 = por %p57, %p58
      %p61 = scmp.ne.s32.totalorder %s44, %s60
      %p62 = scmp.eq.s32.totalorder %s22, 0
      %p63 = por %p61, %p62
      %s65 = sadd.s32 %s64, 1
      %p68 = scmp.eq.s32.totalorder %s16, 1
      %p69 = scmp.ne.s32.totalorder %s64, %s66
      %p70 = scmp.eq.s32.totalorder %s16, 0
      %p71 = por %p69, %p70
      %p72 = scmp.ne.s32.totalorder %s64, %s66
      %p73 = scmp.eq.s32.totalorder %s21, 1
      %p74 = por %p72, %p73
      %p75 = scmp.ne.s32.totalorder %s66, %s67
      %p76 = scmp.eq.s32.totalorder %s21, 0
      %p77 = por %p75, %p76
      %p78 = scmp.ne.s32.totalorder %s66, %s67
      %p79 = scmp.eq.s32.totalorder %s22, 1
      %p80 = por %p78, %p79
      %p82 = scmp.ne.s32.totalorder %s67, %s81
      %p83 = scmp.eq.s32.totalorder %s22, 0
      %p84 = por %p82, %p83
      %s86 = sadd.s32 %s85, 1
      %p89 = scmp.eq.s32.totalorder %s16, 1
      %p90 = scmp.ne.s32.totalorder %s85, %s87
      %p91 = scmp.eq.s32.totalorder %s16, 0
      %p92 = por %p90, %p91
      %p93 = scmp.ne.s32.totalorder %s85, %s87
      %p94 = scmp.eq.s32.totalorder %s21, 1
      %p95 = por %p93, %p94
      %p96 = scmp.ne.s32.totalorder %s87, %s88
      %p97 = scmp.eq.s32.totalorder %s21, 0
      %p98 = por %p96, %p97
      %p99 = scmp.ne.s32.totalorder %s87, %s88
      %p100 = scmp.eq.s32.totalorder %s22, 1
      %p101 = por %p99, %p100
      %p103 = scmp.ne.s32.totalorder %s88, %s102
      %p104 = scmp.eq.s32.totalorder %s22, 0
      %p105 = por %p103, %p104
      %s107 = sadd.s32 %s106, 1
      %p110 = scmp.eq.s32.totalorder %s16, 1
      %p111 = scmp.ne.s32.totalorder %s106, %s108
      %p112 = scmp.eq.s32.totalorder %s16, 0
      %p113 = por %p111, %p112
      %p114 = scmp.ne.s32.totalorder %s106, %s108
      %p115 = scmp.eq.s32.totalorder %s21, 1
      %p116 = por %p114, %p115
      %p117 = scmp.ne.s32.totalorder %s108, %s109
      %p118 = scmp.eq.s32.totalorder %s21, 0
      %p119 = por %p117, %p118
      %p120 = scmp.ne.s32.totalorder %s108, %s109
      %p121 = scmp.eq.s32.totalorder %s22, 1
      %p122 = por %p120, %p121
      %p124 = scmp.ne.s32.totalorder %s109, %s123
      %p125 = scmp.eq.s32.totalorder %s22, 0
      %p126 = por %p124, %p125
      %s128 = sadd.s32 %s127, 1
      %p131 = scmp.eq.s32.totalorder %s16, 1
      %p132 = scmp.ne.s32.totalorder %s127, %s129
      %p133 = scmp.eq.s32.totalorder %s16, 0
      %p134 = por %p132, %p133
      %p135 = scmp.ne.s32.totalorder %s127, %s129
      %p136 = scmp.eq.s32.totalorder %s21, 1
      %p137 = por %p135, %p136
      %p138 = scmp.ne.s32.totalorder %s129, %s130
      %p139 = scmp.eq.s32.totalorder %s21, 0
      %p140 = por %p138, %p139
      %p141 = scmp.ne.s32.totalorder %s129, %s130
      %p142 = scmp.eq.s32.totalorder %s22, 1
      %p143 = por %p141, %p142
      %p145 = scmp.ne.s32.totalorder %s130, %s144
      %p146 = scmp.eq.s32.totalorder %s22, 0
      %p147 = por %p145, %p146
      %s148 = ssub.s32 %s23, %s35
      %s149 = ssub.s32 %s24, %s31
      %s150 = sor.u32 %s148, %s149
      %p151 = scmp.eq.s32.totalorder %s150, 0
      %s153 = sadd.s32 %s152, 1
      %s154 = scalar_select %p151, %s152, %s153
      %p157 = pneg %p151
      %p158 = scmp.eq.s32.totalorder %s16, 1
      %p159 = por %p157, %p158
      %p160 = scmp.ne.s32.totalorder %s152, %s155
      %p161 = scmp.eq.s32.totalorder %s16, 0
      %p162 = por %p160, %p161
      %p163 = scmp.ne.s32.totalorder %s152, %s155
      %p164 = scmp.eq.s32.totalorder %s21, 1
      %p165 = por %p163, %p164
      %p166 = scmp.ne.s32.totalorder %s155, %s156
      %p167 = scmp.eq.s32.totalorder %s21, 0
      %p168 = por %p166, %p167
      %p169 = scmp.ne.s32.totalorder %s155, %s156
      %p170 = scmp.eq.s32.totalorder %s22, 1
      %p171 = por %p169, %p170
      %p173 = scmp.ne.s32.totalorder %s156, %s172
      %p174 = scmp.eq.s32.totalorder %s22, 0
      %p175 = por %p173, %p174
      %s176 = ssub.s32 %s23, %s35
      %s177 = ssub.s32 %s24, %s31
      %s178 = sor.u32 %s176, %s177
      %p179 = scmp.eq.s32.totalorder %s178, 0
      %s181 = sadd.s32 %s180, 1
      %s182 = scalar_select %p179, %s180, %s181
      %p185 = pneg %p179
      %p186 = scmp.eq.s32.totalorder %s16, 1
      %p187 = por %p185, %p186
      %p188 = scmp.ne.s32.totalorder %s180, %s183
      %p189 = scmp.eq.s32.totalorder %s16, 0
      %p190 = por %p188, %p189
      %p191 = scmp.ne.s32.totalorder %s180, %s183
      %p192 = scmp.eq.s32.totalorder %s21, 1
      %p193 = por %p191, %p192
      %p194 = scmp.ne.s32.totalorder %s183, %s184
      %p195 = scmp.eq.s32.totalorder %s21, 0
      %p196 = por %p194, %p195
      %p197 = scmp.ne.s32.totalorder %s183, %s184
      %p198 = scmp.eq.s32.totalorder %s22, 1
      %p199 = por %p197, %p198
      %p201 = scmp.ne.s32.totalorder %s184, %s200
      %p202 = scmp.eq.s32.totalorder %s22, 0
      %p203 = por %p201, %p202
      %p204 = scmp.le.s32.totalorder 1, %s16
      %p205 = scmp.lt.s32.totalorder %s16, 3
      %p206 = pnand %p204, %p205
      %p207 = pneg %p206
      // Predicated region
      $region9: #{tpu_custom_call.1} parent=5 // pred_check
        _
      $region10: #{tpu_custom_call.1} parent=5 // pred_check_branch
        %209 = sbr.rel (%p206) target = $region12
      $region11: #{tpu_custom_call.1} parent=5 // pred_region
        %s210 = ssub.s32 %s16, 1
        // Predicated region
        $region13: #{tpu_custom_call.1} parent=11 // pred_check
          %p211 = pneg %p77
        $region14: #{tpu_custom_call.1} parent=11 // pred_check_branch
          %213 = sbr.rel (%p211) target = $region16
        $region15: #{tpu_custom_call.1} parent=11 // pred_region
          _
        $region16: #{tpu_custom_call.1} parent=11 // pred_fallthru
          _
        // Predicated region
        $region17: #{tpu_custom_call.1} parent=11 // pred_check
          %p214 = pneg %p98
        $region18: #{tpu_custom_call.1} parent=11 // pred_check_branch
          %216 = sbr.rel (%p214) target = $region20
        $region19: #{tpu_custom_call.1} parent=11 // pred_region
          _
        $region20: #{tpu_custom_call.1} parent=11 // pred_fallthru
          _
        // Predicated region
        $region21: #{tpu_custom_call.1} parent=11 // pred_check
          %p217 = pneg %p119
        $region22: #{tpu_custom_call.1} parent=11 // pred_check_branch
          %219 = sbr.rel (%p217) target = $region24
        $region23: #{tpu_custom_call.1} parent=11 // pred_region
          _
        $region24: #{tpu_custom_call.1} parent=11 // pred_fallthru
          _
        // Predicated region
        $region25: #{tpu_custom_call.1} parent=11 // pred_check
          %p220 = pneg %p140
        $region26: #{tpu_custom_call.1} parent=11 // pred_check_branch
          %222 = sbr.rel (%p220) target = $region28
        $region27: #{tpu_custom_call.1} parent=11 // pred_region
          _
        $region28: #{tpu_custom_call.1} parent=11 // pred_fallthru
          _
      $region12: #{tpu_custom_call.1} parent=5 // pred_fallthru
        _
      %p223 = scmp.lt.s32.totalorder %s16, 2
      // Predicated region
      $region29: #{tpu_custom_call.1} parent=5 // pred_check
        %p224 = pneg %p223
      $region30: #{tpu_custom_call.1} parent=5 // pred_check_branch
        %226 = sbr.rel (%p224) target = $region32
      $region31: #{tpu_custom_call.1} parent=5 // pred_region
        // Predicated region
        $region33: #{tpu_custom_call.1} parent=31 // pred_check
          %p227 = pneg %p50
        $region34: #{tpu_custom_call.1} parent=31 // pred_check_branch
          %229 = sbr.rel (%p227) target = $region36
        $region35: #{tpu_custom_call.1} parent=31 // pred_region
          %s230 = sand.u32 %s40, 1
          %s231 = scalar_lea.sflag [#allocation3], %s230
          %s232 = sand.u32 %s40, 1
          %s233 = smul.addr %s232, 512
          %s234 = scalar_lea.vmem [#allocation2], %s233
          %s235 = smul.u32 16, %s24
          %s237 = ssub.s32 8192, 8192
          %238 = vsyncadd %s231, %s237
          %s239 = smul.addr %s23, 64
          %s240 = sadd.s32 %s235, %s239
          %s241 = smul.addr %s240, 128
          %s242 = scalar_lea.hbm %s0, %s241
          %s243 = sshll.u32 %s234, 4
          %s244 = int_to_ptr.vmem [resolvable:$true] %s243
          %249 = dma.hbm_to_vmem [thread:$0]  %s242, 8192, %s244, %s231, 2048, 2048, 128
        $region36: #{tpu_custom_call.1} parent=31 // pred_fallthru
          _
      $region32: #{tpu_custom_call.1} parent=5 // pred_fallthru
        _
      %p250 = scmp.le.s32.totalorder 1, %s16
      %p251 = scmp.lt.s32.totalorder %s16, 3
      %p252 = pnand %p250, %p251
      %p253 = pneg %p252
      // Predicated region
      $region37: #{tpu_custom_call.1} parent=5 // pred_check
        _
      $region38: #{tpu_custom_call.1} parent=5 // pred_check_branch
        %255 = sbr.rel (%p252) target = $region40
      $region39: #{tpu_custom_call.1} parent=5 // pred_region
        %s256 = ssub.s32 %s16, 1
        %s257 = sand.u32 %s43, 1
        %s258 = scalar_lea.sflag [#allocation3], %s257
        %s259 = sand.u32 %s43, 1
        %s260 = smul.addr %s259, 512
        %s261 = scalar_lea.vmem [#allocation2], %s260
        // Predicated region
        $region41: #{tpu_custom_call.1} parent=39 // pred_check
          %p262 = pneg %p56
        $region42: #{tpu_custom_call.1} parent=39 // pred_check_branch
          %264 = sbr.rel (%p262) target = $region44
        $region43: #{tpu_custom_call.1} parent=39 // pred_region
          %265 = dma.done %s258, 8192
        $region44: #{tpu_custom_call.1} parent=39 // pred_fallthru
          _
        %s266 = sand.u32 %s43, 1
        %s267 = scalar_lea.sflag [#allocation3], %s266
        %s268 = sand.u32 %s43, 1
        %s269 = smul.addr %s268, 512
        %s270 = scalar_lea.vmem [#allocation2], %s269
        %p271 = pneg %p56
        %p272 = pneg %p53
        %p273 = pneg %p77
        %p274 = pneg %p74
        %p275 = pneg %p98
        %p276 = pneg %p95
        %p277 = pneg %p119
        %p278 = pneg %p116
        %p279 = pneg %p140
        %p280 = pneg %p137
        %p281 = pneg %p168
        %p282 = pneg %p165
        %s283 = smul.u32 16, %s26
        %p284 = scmp.lt.s32.totalorder %s25, 1
        %s285 = scalar_select %p284, %s25, 1
        %p286 = scmp.lt.s32.totalorder %s283, 15
        %s287 = scalar_select %p286, %s283, 15
        %s288 = smul.addr %s285, 16
        %s289 = sadd.s32 %s287, %s288
        %s290 = smul.addr %s289, 4
        %s291 = scalar_lea.vmem %s5, %s290
        %p292 = pneg %p196
        %p293 = pneg %p193
        %s294 = smul.u32 16, %s26
        %p295 = scmp.lt.s32.totalorder %s25, 1
        %s296 = scalar_select %p295, %s25, 1
        %p297 = scmp.lt.s32.totalorder %s294, 15
        %s298 = scalar_select %p297, %s294, 15
        %s299 = smul.addr %s296, 16
        %s300 = sadd.s32 %s298, %s299
        %s301 = smul.addr %s300, 4
        %s302 = scalar_lea.vmem %s6, %s301
        %s303 = smul.u32 16, %s26
        %s304 = smul.u32 16, %s26
        %p305 = scmp.lt.s32.totalorder %s25, 1
        %s306 = scalar_select %p305, %s25, 1
        %p307 = scmp.lt.s32.totalorder %s304, 15
        %s308 = scalar_select %p307, %s304, 15
        %s309 = smul.addr %s306, 16
        %s310 = sadd.s32 %s308, %s309
        %s311 = smul.addr %s310, 4
        %s312 = scalar_lea.vmem %s5, %s311
        %s313 = smul.u32 16, %s26
        %s314 = smul.u32 16, %s26
        %p315 = scmp.lt.s32.totalorder %s25, 1
        %s316 = scalar_select %p315, %s25, 1
        %p317 = scmp.lt.s32.totalorder %s314, 15
        %s318 = scalar_select %p317, %s314, 15
        %s319 = smul.addr %s316, 16
        %s320 = sadd.s32 %s318, %s319
        %s321 = smul.addr %s320, 4
        %s322 = scalar_lea.vmem %s6, %s321
        %s323 = smul.u32 16, %s26
        %v324 = vld [vmem:[%s261] sm:$0xff]
        %v325 = vld [vmem:[%s261 + $0x8] sm:$0xff]
        %v326 = vld [vmem:[%s261 + $0x10] sm:$0xff]
        %v327 = vld [vmem:[%s261 + $0x18] sm:$0xff]
        %v328 = vld [vmem:[%s261 + $0x20] sm:$0xff]
        %v329 = vld [vmem:[%s261 + $0x28] sm:$0xff]
        %v330 = vld [vmem:[%s261 + $0x30] sm:$0xff]
        %v331 = vld [vmem:[%s261 + $0x38] sm:$0xff]
        %v332 = vld [vmem:[%s261 + $0x40] sm:$0xff]
        %v333 = vld [vmem:[%s261 + $0x48] sm:$0xff]
        %v334 = vld [vmem:[%s261 + $0x50] sm:$0xff]
        %v335 = vld [vmem:[%s261 + $0x58] sm:$0xff]
        %v336 = vld [vmem:[%s261 + $0x60] sm:$0xff]
        %v337 = vld [vmem:[%s261 + $0x68] sm:$0xff]
        %v338 = vld [vmem:[%s261 + $0x70] sm:$0xff]
        %v339 = vld [vmem:[%s261 + $0x80] sm:$0xff]
        %v340 = vld [vmem:[%s261 + $0x88] sm:$0xff]
        %v341 = vld [vmem:[%s261 + $0x90] sm:$0xff]
        %v342 = vld [vmem:[%s261 + $0x98] sm:$0xff]
        %v343 = vld [vmem:[%s261 + $0xa0] sm:$0xff]
        %v344 = vld [vmem:[%s261 + $0xa8] sm:$0xff]
        %v345 = vld [vmem:[%s261 + $0xb0] sm:$0xff]
        %v346 = vld [vmem:[%s261 + $0xb8] sm:$0xff]
        %v347 = vld [vmem:[%s261 + $0xc0] sm:$0xff]
        %v348 = vld [vmem:[%s261 + $0xc8] sm:$0xff]
        %v349 = vld [vmem:[%s261 + $0xd0] sm:$0xff]
        %v350 = vld [vmem:[%s261 + $0xd8] sm:$0xff]
        %v351 = vld [vmem:[%s261 + $0xe0] sm:$0xff]
        %v352 = vld [vmem:[%s261 + $0xe8] sm:$0xff]
        %v353 = vld [vmem:[%s261 + $0xf0] sm:$0xff]
        %v354 = vld [vmem:[%s261 + $0x100] sm:$0xff]
        %v355 = vld [vmem:[%s261 + $0x108] sm:$0xff]
        %v356 = vld [vmem:[%s261 + $0x110] sm:$0xff]
        %v357 = vld [vmem:[%s261 + $0x118] sm:$0xff]
        %v358 = vld [vmem:[%s261 + $0x120] sm:$0xff]
        %v359 = vld [vmem:[%s261 + $0x128] sm:$0xff]
        %v360 = vld [vmem:[%s261 + $0x130] sm:$0xff]
        %v361 = vld [vmem:[%s261 + $0x138] sm:$0xff]
        %v362 = vld [vmem:[%s261 + $0x140] sm:$0xff]
        %v363 = vld [vmem:[%s261 + $0x148] sm:$0xff]
        %v364 = vld [vmem:[%s261 + $0x150] sm:$0xff]
        %v365 = vld [vmem:[%s261 + $0x158] sm:$0xff]
        %v366 = vld [vmem:[%s261 + $0x160] sm:$0xff]
        %v367 = vld [vmem:[%s261 + $0x168] sm:$0xff]
        %v368 = vld [vmem:[%s261 + $0x170] sm:$0xff]
        %v369 = vld [vmem:[%s261 + $0x180] sm:$0xff]
        %v370 = vld [vmem:[%s261 + $0x188] sm:$0xff]
        %v371 = vld [vmem:[%s261 + $0x190] sm:$0xff]
        %v372 = vld [vmem:[%s261 + $0x198] sm:$0xff]
        %v373 = vld [vmem:[%s261 + $0x1a0] sm:$0xff]
        %v374 = vld [vmem:[%s261 + $0x1a8] sm:$0xff]
        %v375 = vld [vmem:[%s261 + $0x1b0] sm:$0xff]
        %v376 = vld [vmem:[%s261 + $0x1b8] sm:$0xff]
        %v377 = vld [vmem:[%s261 + $0x1c0] sm:$0xff]
        %v378 = vld [vmem:[%s261 + $0x1c8] sm:$0xff]
        %v379 = vld [vmem:[%s261 + $0x1d0] sm:$0xff]
        %v380 = vld [vmem:[%s261 + $0x1d8] sm:$0xff]
        %v381 = vld [vmem:[%s261 + $0x1e0] sm:$0xff]
        %v382 = vld [vmem:[%s261 + $0x1e8] sm:$0xff]
        %v383 = vld [vmem:[%s261 + $0x1f0] sm:$0xff]
        %444 = vrot.lane.b32.xlu0 %v324, 127
        %v445 = vpop.permute.xlu0 %444
        %446 = vrot.lane.b32.xlu0 %v325, 127
        %v447 = vpop.permute.xlu0 %446
        %448 = vrot.lane.b32.xlu0 %v326, 127
        %v449 = vpop.permute.xlu0 %448
        %450 = vrot.lane.b32.xlu0 %v327, 127
        %v451 = vpop.permute.xlu0 %450
        %452 = vrot.lane.b32.xlu0 %v328, 127
        %v453 = vpop.permute.xlu0 %452
        %454 = vrot.lane.b32.xlu0 %v329, 127
        %v455 = vpop.permute.xlu0 %454
        %456 = vrot.lane.b32.xlu0 %v330, 127
        %v457 = vpop.permute.xlu0 %456
        %458 = vrot.lane.b32.xlu0 %v331, 127
        %v459 = vpop.permute.xlu0 %458
        %460 = vrot.lane.b32.xlu0 %v332, 127
        %v461 = vpop.permute.xlu0 %460
        %462 = vrot.lane.b32.xlu0 %v333, 127
        %v463 = vpop.permute.xlu0 %462
        %464 = vrot.lane.b32.xlu0 %v334, 127
        %v465 = vpop.permute.xlu0 %464
        %466 = vrot.lane.b32.xlu0 %v335, 127
        %v467 = vpop.permute.xlu0 %466
        %468 = vrot.lane.b32.xlu0 %v336, 127
        %v469 = vpop.permute.xlu0 %468
        %470 = vrot.lane.b32.xlu0 %v337, 127
        %v471 = vpop.permute.xlu0 %470
        %472 = vrot.lane.b32.xlu0 %v338, 127
        %v473 = vpop.permute.xlu0 %472
        %474 = vrot.lane.b32.xlu0 %v339, 127
        %v475 = vpop.permute.xlu0 %474
        %476 = vrot.lane.b32.xlu0 %v340, 127
        %v477 = vpop.permute.xlu0 %476
        %478 = vrot.lane.b32.xlu0 %v341, 127
        %v479 = vpop.permute.xlu0 %478
        %480 = vrot.lane.b32.xlu0 %v342, 127
        %v481 = vpop.permute.xlu0 %480
        %482 = vrot.lane.b32.xlu0 %v343, 127
        %v483 = vpop.permute.xlu0 %482
        %484 = vrot.lane.b32.xlu0 %v344, 127
        %v485 = vpop.permute.xlu0 %484
        %486 = vrot.lane.b32.xlu0 %v345, 127
        %v487 = vpop.permute.xlu0 %486
        %488 = vrot.lane.b32.xlu0 %v346, 127
        %v489 = vpop.permute.xlu0 %488
        %490 = vrot.lane.b32.xlu0 %v347, 127
        %v491 = vpop.permute.xlu0 %490
        %492 = vrot.lane.b32.xlu0 %v348, 127
        %v493 = vpop.permute.xlu0 %492
        %494 = vrot.lane.b32.xlu0 %v349, 127
        %v495 = vpop.permute.xlu0 %494
        %496 = vrot.lane.b32.xlu0 %v350, 127
        %v497 = vpop.permute.xlu0 %496
        %498 = vrot.lane.b32.xlu0 %v351, 127
        %v499 = vpop.permute.xlu0 %498
        %500 = vrot.lane.b32.xlu0 %v352, 127
        %v501 = vpop.permute.xlu0 %500
        %502 = vrot.lane.b32.xlu0 %v353, 127
        %v503 = vpop.permute.xlu0 %502
        %504 = vrot.lane.b32.xlu0 %v354, 127
        %v505 = vpop.permute.xlu0 %504
        %506 = vrot.lane.b32.xlu0 %v355, 127
        %v507 = vpop.permute.xlu0 %506
        %508 = vrot.lane.b32.xlu0 %v356, 127
        %v509 = vpop.permute.xlu0 %508
        %510 = vrot.lane.b32.xlu0 %v357, 127
        %v511 = vpop.permute.xlu0 %510
        %512 = vrot.lane.b32.xlu0 %v358, 127
        %v513 = vpop.permute.xlu0 %512
        %514 = vrot.lane.b32.xlu0 %v359, 127
        %v515 = vpop.permute.xlu0 %514
        %516 = vrot.lane.b32.xlu0 %v360, 127
        %v517 = vpop.permute.xlu0 %516
        %518 = vrot.lane.b32.xlu0 %v361, 127
        %v519 = vpop.permute.xlu0 %518
        %520 = vrot.lane.b32.xlu0 %v362, 127
        %v521 = vpop.permute.xlu0 %520
        %522 = vrot.lane.b32.xlu0 %v363, 127
        %v523 = vpop.permute.xlu0 %522
        %524 = vrot.lane.b32.xlu0 %v364, 127
        %v525 = vpop.permute.xlu0 %524
        %526 = vrot.lane.b32.xlu0 %v365, 127
        %v527 = vpop.permute.xlu0 %526
        %528 = vrot.lane.b32.xlu0 %v366, 127
        %v529 = vpop.permute.xlu0 %528
        %530 = vrot.lane.b32.xlu0 %v367, 127
        %v531 = vpop.permute.xlu0 %530
        %532 = vrot.lane.b32.xlu0 %v368, 127
        %v533 = vpop.permute.xlu0 %532
        %534 = vrot.lane.b32.xlu0 %v369, 127
        %v535 = vpop.permute.xlu0 %534
        %536 = vrot.lane.b32.xlu0 %v370, 127
        %v537 = vpop.permute.xlu0 %536
        %538 = vrot.lane.b32.xlu0 %v371, 127
        %v539 = vpop.permute.xlu0 %538
        %540 = vrot.lane.b32.xlu0 %v372, 127
        %v541 = vpop.permute.xlu0 %540
        %542 = vrot.lane.b32.xlu0 %v373, 127
        %v543 = vpop.permute.xlu0 %542
        %544 = vrot.lane.b32.xlu0 %v374, 127
        %v545 = vpop.permute.xlu0 %544
        %546 = vrot.lane.b32.xlu0 %v375, 127
        %v547 = vpop.permute.xlu0 %546
        %548 = vrot.lane.b32.xlu0 %v376, 127
        %v549 = vpop.permute.xlu0 %548
        %550 = vrot.lane.b32.xlu0 %v377, 127
        %v551 = vpop.permute.xlu0 %550
        %552 = vrot.lane.b32.xlu0 %v378, 127
        %v553 = vpop.permute.xlu0 %552
        %554 = vrot.lane.b32.xlu0 %v379, 127
        %v555 = vpop.permute.xlu0 %554
        %556 = vrot.lane.b32.xlu0 %v380, 127
        %v557 = vpop.permute.xlu0 %556
        %558 = vrot.lane.b32.xlu0 %v381, 127
        %v559 = vpop.permute.xlu0 %558
        %560 = vrot.lane.b32.xlu0 %v382, 127
        %v561 = vpop.permute.xlu0 %560
        %562 = vrot.lane.b32.xlu0 %v383, 127
        %v563 = vpop.permute.xlu0 %562
        %vm564 = vcmask 1039360
        %v565 = vsel %vm564, %v445, %v447
        %v566 = vsel %vm564, %v447, %v449
        %v567 = vsel %vm564, %v449, %v451
        %v568 = vsel %vm564, %v451, %v453
        %v569 = vsel %vm564, %v453, %v455
        %v570 = vsel %vm564, %v455, %v457
        %v571 = vsel %vm564, %v457, %v459
        %v572 = vsel %vm564, %v459, %v461
        %v573 = vsel %vm564, %v461, %v463
        %v574 = vsel %vm564, %v463, %v465
        %v575 = vsel %vm564, %v465, %v467
        %v576 = vsel %vm564, %v467, %v469
        %v577 = vsel %vm564, %v469, %v471
        %v578 = vsel %vm564, %v471, %v473
        %v579 = vsel %vm564, %v475, %v477
        %v580 = vsel %vm564, %v477, %v479
        %v581 = vsel %vm564, %v479, %v481
        %v582 = vsel %vm564, %v481, %v483
        %v583 = vsel %vm564, %v483, %v485
        %v584 = vsel %vm564, %v485, %v487
        %v585 = vsel %vm564, %v487, %v489
        %v586 = vsel %vm564, %v489, %v491
        %v587 = vsel %vm564, %v491, %v493
        %v588 = vsel %vm564, %v493, %v495
        %v589 = vsel %vm564, %v495, %v497
        %v590 = vsel %vm564, %v497, %v499
        %v591 = vsel %vm564, %v499, %v501
        %v592 = vsel %vm564, %v501, %v503
        %v593 = vsel %vm564, %v505, %v507
        %v594 = vsel %vm564, %v507, %v509
        %v595 = vsel %vm564, %v509, %v511
        %v596 = vsel %vm564, %v511, %v513
        %v597 = vsel %vm564, %v513, %v515
        %v598 = vsel %vm564, %v515, %v517
        %v599 = vsel %vm564, %v517, %v519
        %v600 = vsel %vm564, %v519, %v521
        %v601 = vsel %vm564, %v521, %v523
        %v602 = vsel %vm564, %v523, %v525
        %v603 = vsel %vm564, %v525, %v527
        %v604 = vsel %vm564, %v527, %v529
        %v605 = vsel %vm564, %v529, %v531
        %v606 = vsel %vm564, %v531, %v533
        %v607 = vsel %vm564, %v535, %v537
        %v608 = vsel %vm564, %v537, %v539
        %v609 = vsel %vm564, %v539, %v541
        %v610 = vsel %vm564, %v541, %v543
        %v611 = vsel %vm564, %v543, %v545
        %v612 = vsel %vm564, %v545, %v547
        %v613 = vsel %vm564, %v547, %v549
        %v614 = vsel %vm564, %v549, %v551
        %v615 = vsel %vm564, %v551, %v553
        %v616 = vsel %vm564, %v553, %v555
        %v617 = vsel %vm564, %v555, %v557
        %v618 = vsel %vm564, %v557, %v559
        %v619 = vsel %vm564, %v559, %v561
        %v620 = vsel %vm564, %v561, %v563
        %v681 = vmax.f32 %v324, %v565
        %v682 = vmax.f32 %v325, %v566
        %v683 = vmax.f32 %v326, %v567
        %v684 = vmax.f32 %v327, %v568
        %v685 = vmax.f32 %v328, %v569
        %v686 = vmax.f32 %v329, %v570
        %v687 = vmax.f32 %v330, %v571
        %v688 = vmax.f32 %v331, %v572
        %v689 = vmax.f32 %v332, %v573
        %v690 = vmax.f32 %v333, %v574
        %v691 = vmax.f32 %v334, %v575
        %v692 = vmax.f32 %v335, %v576
        %v693 = vmax.f32 %v336, %v577
        %v694 = vmax.f32 %v337, %v578
        %v695 = vmax.f32 %v338, %v473
        %v696 = vmax.f32 %v339, %v579
        %v697 = vmax.f32 %v340, %v580
        %v698 = vmax.f32 %v341, %v581
        %v699 = vmax.f32 %v342, %v582
        %v700 = vmax.f32 %v343, %v583
        %v701 = vmax.f32 %v344, %v584
        %v702 = vmax.f32 %v345, %v585
        %v703 = vmax.f32 %v346, %v586
        %v704 = vmax.f32 %v347, %v587
        %v705 = vmax.f32 %v348, %v588
        %v706 = vmax.f32 %v349, %v589
        %v707 = vmax.f32 %v350, %v590
        %v708 = vmax.f32 %v351, %v591
        %v709 = vmax.f32 %v352, %v592
        %v710 = vmax.f32 %v353, %v503
        %v711 = vmax.f32 %v354, %v593
        %v712 = vmax.f32 %v355, %v594
        %v713 = vmax.f32 %v356, %v595
        %v714 = vmax.f32 %v357, %v596
        %v715 = vmax.f32 %v358, %v597
        %v716 = vmax.f32 %v359, %v598
        %v717 = vmax.f32 %v360, %v599
        %v718 = vmax.f32 %v361, %v600
        %v719 = vmax.f32 %v362, %v601
        %v720 = vmax.f32 %v363, %v602
        %v721 = vmax.f32 %v364, %v603
        %v722 = vmax.f32 %v365, %v604
        %v723 = vmax.f32 %v366, %v605
        %v724 = vmax.f32 %v367, %v606
        %v725 = vmax.f32 %v368, %v533
        %v726 = vmax.f32 %v369, %v607
        %v727 = vmax.f32 %v370, %v608
        %v728 = vmax.f32 %v371, %v609
        %v729 = vmax.f32 %v372, %v610
        %v730 = vmax.f32 %v373, %v611
        %v731 = vmax.f32 %v374, %v612
        %v732 = vmax.f32 %v375, %v613
        %v733 = vmax.f32 %v376, %v614
        %v734 = vmax.f32 %v377, %v615
        %v735 = vmax.f32 %v378, %v616
        %v736 = vmax.f32 %v379, %v617
        %v737 = vmax.f32 %v380, %v618
        %v738 = vmax.f32 %v381, %v619
        %v739 = vmax.f32 %v382, %v620
        %v740 = vmax.f32 %v383, %v563
        %v741 = vld [vmem:[%s261 + $0x8] sm:$0xff]
        %v742 = vld [vmem:[%s261 + $0x10] sm:$0xff]
        %v743 = vld [vmem:[%s261 + $0x18] sm:$0xff]
        %v744 = vld [vmem:[%s261 + $0x20] sm:$0xff]
        %v745 = vld [vmem:[%s261 + $0x28] sm:$0xff]
        %v746 = vld [vmem:[%s261 + $0x30] sm:$0xff]
        %v747 = vld [vmem:[%s261 + $0x38] sm:$0xff]
        %v748 = vld [vmem:[%s261 + $0x40] sm:$0xff]
        %v749 = vld [vmem:[%s261 + $0x48] sm:$0xff]
        %v750 = vld [vmem:[%s261 + $0x50] sm:$0xff]
        %v751 = vld [vmem:[%s261 + $0x58] sm:$0xff]
        %v752 = vld [vmem:[%s261 + $0x60] sm:$0xff]
        %v753 = vld [vmem:[%s261 + $0x68] sm:$0xff]
        %v754 = vld [vmem:[%s261 + $0x70] sm:$0xff]
        %v755 = vld [vmem:[%s261 + $0x78] sm:$0xff]
        %v756 = vld [vmem:[%s261 + $0x88] sm:$0xff]
        %v757 = vld [vmem:[%s261 + $0x90] sm:$0xff]
        %v758 = vld [vmem:[%s261 + $0x98] sm:$0xff]
        %v759 = vld [vmem:[%s261 + $0xa0] sm:$0xff]
        %v760 = vld [vmem:[%s261 + $0xa8] sm:$0xff]
        %v761 = vld [vmem:[%s261 + $0xb0] sm:$0xff]
        %v762 = vld [vmem:[%s261 + $0xb8] sm:$0xff]
        %v763 = vld [vmem:[%s261 + $0xc0] sm:$0xff]
        %v764 = vld [vmem:[%s261 + $0xc8] sm:$0xff]
        %v765 = vld [vmem:[%s261 + $0xd0] sm:$0xff]
        %v766 = vld [vmem:[%s261 + $0xd8] sm:$0xff]
        %v767 = vld [vmem:[%s261 + $0xe0] sm:$0xff]
        %v768 = vld [vmem:[%s261 + $0xe8] sm:$0xff]
        %v769 = vld [vmem:[%s261 + $0xf0] sm:$0xff]
        %v770 = vld [vmem:[%s261 + $0xf8] sm:$0xff]
        %v771 = vld [vmem:[%s261 + $0x108] sm:$0xff]
        %v772 = vld [vmem:[%s261 + $0x110] sm:$0xff]
        %v773 = vld [vmem:[%s261 + $0x118] sm:$0xff]
        %v774 = vld [vmem:[%s261 + $0x120] sm:$0xff]
        %v775 = vld [vmem:[%s261 + $0x128] sm:$0xff]
        %v776 = vld [vmem:[%s261 + $0x130] sm:$0xff]
        %v777 = vld [vmem:[%s261 + $0x138] sm:$0xff]
        %v778 = vld [vmem:[%s261 + $0x140] sm:$0xff]
        %v779 = vld [vmem:[%s261 + $0x148] sm:$0xff]
        %v780 = vld [vmem:[%s261 + $0x150] sm:$0xff]
        %v781 = vld [vmem:[%s261 + $0x158] sm:$0xff]
        %v782 = vld [vmem:[%s261 + $0x160] sm:$0xff]
        %v783 = vld [vmem:[%s261 + $0x168] sm:$0xff]
        %v784 = vld [vmem:[%s261 + $0x170] sm:$0xff]
        %v785 = vld [vmem:[%s261 + $0x178] sm:$0xff]
        %v786 = vld [vmem:[%s261 + $0x188] sm:$0xff]
        %v787 = vld [vmem:[%s261 + $0x190] sm:$0xff]
        %v788 = vld [vmem:[%s261 + $0x198] sm:$0xff]
        %v789 = vld [vmem:[%s261 + $0x1a0] sm:$0xff]
        %v790 = vld [vmem:[%s261 + $0x1a8] sm:$0xff]
        %v791 = vld [vmem:[%s261 + $0x1b0] sm:$0xff]
        %v792 = vld [vmem:[%s261 + $0x1b8] sm:$0xff]
        %v793 = vld [vmem:[%s261 + $0x1c0] sm:$0xff]
        %v794 = vld [vmem:[%s261 + $0x1c8] sm:$0xff]
        %v795 = vld [vmem:[%s261 + $0x1d0] sm:$0xff]
        %v796 = vld [vmem:[%s261 + $0x1d8] sm:$0xff]
        %v797 = vld [vmem:[%s261 + $0x1e0] sm:$0xff]
        %v798 = vld [vmem:[%s261 + $0x1e8] sm:$0xff]
        %v799 = vld [vmem:[%s261 + $0x1f0] sm:$0xff]
        %v800 = vld [vmem:[%s261 + $0x1f8] sm:$0xff]
        %v801 = vmax.f32 %v681, %v741
        %v802 = vmax.f32 %v682, %v742
        %v803 = vmax.f32 %v683, %v743
        %v804 = vmax.f32 %v684, %v744
        %v805 = vmax.f32 %v685, %v745
        %v806 = vmax.f32 %v686, %v746
        %v807 = vmax.f32 %v687, %v747
        %v808 = vmax.f32 %v688, %v748
        %v809 = vmax.f32 %v689, %v749
        %v810 = vmax.f32 %v690, %v750
        %v811 = vmax.f32 %v691, %v751
        %v812 = vmax.f32 %v692, %v752
        %v813 = vmax.f32 %v693, %v753
        %v814 = vmax.f32 %v694, %v754
        %v815 = vmax.f32 %v695, %v755
        %v816 = vmax.f32 %v696, %v756
        %v817 = vmax.f32 %v697, %v757
        %v818 = vmax.f32 %v698, %v758
        %v819 = vmax.f32 %v699, %v759
        %v820 = vmax.f32 %v700, %v760
        %v821 = vmax.f32 %v701, %v761
        %v822 = vmax.f32 %v702, %v762
        %v823 = vmax.f32 %v703, %v763
        %v824 = vmax.f32 %v704, %v764
        %v825 = vmax.f32 %v705, %v765
        %v826 = vmax.f32 %v706, %v766
        %v827 = vmax.f32 %v707, %v767
        %v828 = vmax.f32 %v708, %v768
        %v829 = vmax.f32 %v709, %v769
        %v830 = vmax.f32 %v710, %v770
        %v831 = vmax.f32 %v711, %v771
        %v832 = vmax.f32 %v712, %v772
        %v833 = vmax.f32 %v713, %v773
        %v834 = vmax.f32 %v714, %v774
        %v835 = vmax.f32 %v715, %v775
        %v836 = vmax.f32 %v716, %v776
        %v837 = vmax.f32 %v717, %v777
        %v838 = vmax.f32 %v718, %v778
        %v839 = vmax.f32 %v719, %v779
        %v840 = vmax.f32 %v720, %v780
        %v841 = vmax.f32 %v721, %v781
        %v842 = vmax.f32 %v722, %v782
        %v843 = vmax.f32 %v723, %v783
        %v844 = vmax.f32 %v724, %v784
        %v845 = vmax.f32 %v725, %v785
        %v846 = vmax.f32 %v726, %v786
        %v847 = vmax.f32 %v727, %v787
        %v848 = vmax.f32 %v728, %v788
        %v849 = vmax.f32 %v729, %v789
        %v850 = vmax.f32 %v730, %v790
        %v851 = vmax.f32 %v731, %v791
        %v852 = vmax.f32 %v732, %v792
        %v853 = vmax.f32 %v733, %v793
        %v854 = vmax.f32 %v734, %v794
        %v855 = vmax.f32 %v735, %v795
        %v856 = vmax.f32 %v736, %v796
        %v857 = vmax.f32 %v737, %v797
        %v858 = vmax.f32 %v738, %v798
        %v859 = vmax.f32 %v739, %v799
        %v860 = vmax.f32 %v740, %v800
        %921 = vrot.lane.b32.xlu0 %v741, 127
        %v922 = vpop.permute.xlu0 %921
        %923 = vrot.lane.b32.xlu0 %v742, 127
        %v924 = vpop.permute.xlu0 %923
        %925 = vrot.lane.b32.xlu0 %v743, 127
        %v926 = vpop.permute.xlu0 %925
        %927 = vrot.lane.b32.xlu0 %v744, 127
        %v928 = vpop.permute.xlu0 %927
        %929 = vrot.lane.b32.xlu0 %v745, 127
        %v930 = vpop.permute.xlu0 %929
        %931 = vrot.lane.b32.xlu0 %v746, 127
        %v932 = vpop.permute.xlu0 %931
        %933 = vrot.lane.b32.xlu0 %v747, 127
        %v934 = vpop.permute.xlu0 %933
        %935 = vrot.lane.b32.xlu0 %v748, 127
        %v936 = vpop.permute.xlu0 %935
        %937 = vrot.lane.b32.xlu0 %v749, 127
        %v938 = vpop.permute.xlu0 %937
        %939 = vrot.lane.b32.xlu0 %v750, 127
        %v940 = vpop.permute.xlu0 %939
        %941 = vrot.lane.b32.xlu0 %v751, 127
        %v942 = vpop.permute.xlu0 %941
        %943 = vrot.lane.b32.xlu0 %v752, 127
        %v944 = vpop.permute.xlu0 %943
        %945 = vrot.lane.b32.xlu0 %v753, 127
        %v946 = vpop.permute.xlu0 %945
        %947 = vrot.lane.b32.xlu0 %v754, 127
        %v948 = vpop.permute.xlu0 %947
        %949 = vrot.lane.b32.xlu0 %v755, 127
        %v950 = vpop.permute.xlu0 %949
        %951 = vrot.lane.b32.xlu0 %v756, 127
        %v952 = vpop.permute.xlu0 %951
        %953 = vrot.lane.b32.xlu0 %v757, 127
        %v954 = vpop.permute.xlu0 %953
        %955 = vrot.lane.b32.xlu0 %v758, 127
        %v956 = vpop.permute.xlu0 %955
        %957 = vrot.lane.b32.xlu0 %v759, 127
        %v958 = vpop.permute.xlu0 %957
        %959 = vrot.lane.b32.xlu0 %v760, 127
        %v960 = vpop.permute.xlu0 %959
        %961 = vrot.lane.b32.xlu0 %v761, 127
        %v962 = vpop.permute.xlu0 %961
        %963 = vrot.lane.b32.xlu0 %v762, 127
        %v964 = vpop.permute.xlu0 %963
        %965 = vrot.lane.b32.xlu0 %v763, 127
        %v966 = vpop.permute.xlu0 %965
        %967 = vrot.lane.b32.xlu0 %v764, 127
        %v968 = vpop.permute.xlu0 %967
        %969 = vrot.lane.b32.xlu0 %v765, 127
        %v970 = vpop.permute.xlu0 %969
        %971 = vrot.lane.b32.xlu0 %v766, 127
        %v972 = vpop.permute.xlu0 %971
        %973 = vrot.lane.b32.xlu0 %v767, 127
        %v974 = vpop.permute.xlu0 %973
        %975 = vrot.lane.b32.xlu0 %v768, 127
        %v976 = vpop.permute.xlu0 %975
        %977 = vrot.lane.b32.xlu0 %v769, 127
        %v978 = vpop.permute.xlu0 %977
        %979 = vrot.lane.b32.xlu0 %v770, 127
        %v980 = vpop.permute.xlu0 %979
        %981 = vrot.lane.b32.xlu0 %v771, 127
        %v982 = vpop.permute.xlu0 %981
        %983 = vrot.lane.b32.xlu0 %v772, 127
        %v984 = vpop.permute.xlu0 %983
        %985 = vrot.lane.b32.xlu0 %v773, 127
        %v986 = vpop.permute.xlu0 %985
        %987 = vrot.lane.b32.xlu0 %v774, 127
        %v988 = vpop.permute.xlu0 %987
        %989 = vrot.lane.b32.xlu0 %v775, 127
        %v990 = vpop.permute.xlu0 %989
        %991 = vrot.lane.b32.xlu0 %v776, 127
        %v992 = vpop.permute.xlu0 %991
        %993 = vrot.lane.b32.xlu0 %v777, 127
        %v994 = vpop.permute.xlu0 %993
        %995 = vrot.lane.b32.xlu0 %v778, 127
        %v996 = vpop.permute.xlu0 %995
        %997 = vrot.lane.b32.xlu0 %v779, 127
        %v998 = vpop.permute.xlu0 %997
        %999 = vrot.lane.b32.xlu0 %v780, 127
        %v1000 = vpop.permute.xlu0 %999
        %1001 = vrot.lane.b32.xlu0 %v781, 127
        %v1002 = vpop.permute.xlu0 %1001
        %1003 = vrot.lane.b32.xlu0 %v782, 127
        %v1004 = vpop.permute.xlu0 %1003
        %1005 = vrot.lane.b32.xlu0 %v783, 127
        %v1006 = vpop.permute.xlu0 %1005
        %1007 = vrot.lane.b32.xlu0 %v784, 127
        %v1008 = vpop.permute.xlu0 %1007
        %1009 = vrot.lane.b32.xlu0 %v785, 127
        %v1010 = vpop.permute.xlu0 %1009
        %1011 = vrot.lane.b32.xlu0 %v786, 127
        %v1012 = vpop.permute.xlu0 %1011
        %1013 = vrot.lane.b32.xlu0 %v787, 127
        %v1014 = vpop.permute.xlu0 %1013
        %1015 = vrot.lane.b32.xlu0 %v788, 127
        %v1016 = vpop.permute.xlu0 %1015
        %1017 = vrot.lane.b32.xlu0 %v789, 127
        %v1018 = vpop.permute.xlu0 %1017
        %1019 = vrot.lane.b32.xlu0 %v790, 127
        %v1020 = vpop.permute.xlu0 %1019
        %1021 = vrot.lane.b32.xlu0 %v791, 127
        %v1022 = vpop.permute.xlu0 %1021
        %1023 = vrot.lane.b32.xlu0 %v792, 127
        %v1024 = vpop.permute.xlu0 %1023
        %1025 = vrot.lane.b32.xlu0 %v793, 127
        %v1026 = vpop.permute.xlu0 %1025
        %1027 = vrot.lane.b32.xlu0 %v794, 127
        %v1028 = vpop.permute.xlu0 %1027
        %1029 = vrot.lane.b32.xlu0 %v795, 127
        %v1030 = vpop.permute.xlu0 %1029
        %1031 = vrot.lane.b32.xlu0 %v796, 127
        %v1032 = vpop.permute.xlu0 %1031
        %1033 = vrot.lane.b32.xlu0 %v797, 127
        %v1034 = vpop.permute.xlu0 %1033
        %1035 = vrot.lane.b32.xlu0 %v798, 127
        %v1036 = vpop.permute.xlu0 %1035
        %1037 = vrot.lane.b32.xlu0 %v799, 127
        %v1038 = vpop.permute.xlu0 %1037
        %1039 = vrot.lane.b32.xlu0 %v800, 127
        %v1040 = vpop.permute.xlu0 %1039
        %v1041 = vsel %vm564, %v922, %v924
        %v1042 = vsel %vm564, %v924, %v926
        %v1043 = vsel %vm564, %v926, %v928
        %v1044 = vsel %vm564, %v928, %v930
        %v1045 = vsel %vm564, %v930, %v932
        %v1046 = vsel %vm564, %v932, %v934
        %v1047 = vsel %vm564, %v934, %v936
        %v1048 = vsel %vm564, %v936, %v938
        %v1049 = vsel %vm564, %v938, %v940
        %v1050 = vsel %vm564, %v940, %v942
        %v1051 = vsel %vm564, %v942, %v944
        %v1052 = vsel %vm564, %v944, %v946
        %v1053 = vsel %vm564, %v946, %v948
        %v1054 = vsel %vm564, %v948, %v950
        %v1055 = vsel %vm564, %v952, %v954
        %v1056 = vsel %vm564, %v954, %v956
        %v1057 = vsel %vm564, %v956, %v958
        %v1058 = vsel %vm564, %v958, %v960
        %v1059 = vsel %vm564, %v960, %v962
        %v1060 = vsel %vm564, %v962, %v964
        %v1061 = vsel %vm564, %v964, %v966
        %v1062 = vsel %vm564, %v966, %v968
        %v1063 = vsel %vm564, %v968, %v970
        %v1064 = vsel %vm564, %v970, %v972
        %v1065 = vsel %vm564, %v972, %v974
        %v1066 = vsel %vm564, %v974, %v976
        %v1067 = vsel %vm564, %v976, %v978
        %v1068 = vsel %vm564, %v978, %v980
        %v1069 = vsel %vm564, %v982, %v984
        %v1070 = vsel %vm564, %v984, %v986
        %v1071 = vsel %vm564, %v986, %v988
        %v1072 = vsel %vm564, %v988, %v990
        %v1073 = vsel %vm564, %v990, %v992
        %v1074 = vsel %vm564, %v992, %v994
        %v1075 = vsel %vm564, %v994, %v996
        %v1076 = vsel %vm564, %v996, %v998
        %v1077 = vsel %vm564, %v998, %v1000
        %v1078 = vsel %vm564, %v1000, %v1002
        %v1079 = vsel %vm564, %v1002, %v1004
        %v1080 = vsel %vm564, %v1004, %v1006
        %v1081 = vsel %vm564, %v1006, %v1008
        %v1082 = vsel %vm564, %v1008, %v1010
        %v1083 = vsel %vm564, %v1012, %v1014
        %v1084 = vsel %vm564, %v1014, %v1016
        %v1085 = vsel %vm564, %v1016, %v1018
        %v1086 = vsel %vm564, %v1018, %v1020
        %v1087 = vsel %vm564, %v1020, %v1022
        %v1088 = vsel %vm564, %v1022, %v1024
        %v1089 = vsel %vm564, %v1024, %v1026
        %v1090 = vsel %vm564, %v1026, %v1028
        %v1091 = vsel %vm564, %v1028, %v1030
        %v1092 = vsel %vm564, %v1030, %v1032
        %v1093 = vsel %vm564, %v1032, %v1034
        %v1094 = vsel %vm564, %v1034, %v1036
        %v1095 = vsel %vm564, %v1036, %v1038
        %v1096 = vsel %vm564, %v1038, %v1040
        %v1157 = vmax.f32 %v801, %v1041
        %v1158 = vmax.f32 %v802, %v1042
        %v1159 = vmax.f32 %v803, %v1043
        %v1160 = vmax.f32 %v804, %v1044
        %v1161 = vmax.f32 %v805, %v1045
        %v1162 = vmax.f32 %v806, %v1046
        %v1163 = vmax.f32 %v807, %v1047
        %v1164 = vmax.f32 %v808, %v1048
        %v1165 = vmax.f32 %v809, %v1049
        %v1166 = vmax.f32 %v810, %v1050
        %v1167 = vmax.f32 %v811, %v1051
        %v1168 = vmax.f32 %v812, %v1052
        %v1169 = vmax.f32 %v813, %v1053
        %v1170 = vmax.f32 %v814, %v1054
        %v1171 = vmax.f32 %v815, %v950
        %v1172 = vmax.f32 %v816, %v1055
        %v1173 = vmax.f32 %v817, %v1056
        %v1174 = vmax.f32 %v818, %v1057
        %v1175 = vmax.f32 %v819, %v1058
        %v1176 = vmax.f32 %v820, %v1059
        %v1177 = vmax.f32 %v821, %v1060
        %v1178 = vmax.f32 %v822, %v1061
        %v1179 = vmax.f32 %v823, %v1062
        %v1180 = vmax.f32 %v824, %v1063
        %v1181 = vmax.f32 %v825, %v1064
        %v1182 = vmax.f32 %v826, %v1065
        %v1183 = vmax.f32 %v827, %v1066
        %v1184 = vmax.f32 %v828, %v1067
        %v1185 = vmax.f32 %v829, %v1068
        %v1186 = vmax.f32 %v830, %v980
        %v1187 = vmax.f32 %v831, %v1069
        %v1188 = vmax.f32 %v832, %v1070
        %v1189 = vmax.f32 %v833, %v1071
        %v1190 = vmax.f32 %v834, %v1072
        %v1191 = vmax.f32 %v835, %v1073
        %v1192 = vmax.f32 %v836, %v1074
        %v1193 = vmax.f32 %v837, %v1075
        %v1194 = vmax.f32 %v838, %v1076
        %v1195 = vmax.f32 %v839, %v1077
        %v1196 = vmax.f32 %v840, %v1078
        %v1197 = vmax.f32 %v841, %v1079
        %v1198 = vmax.f32 %v842, %v1080
        %v1199 = vmax.f32 %v843, %v1081
        %v1200 = vmax.f32 %v844, %v1082
        %v1201 = vmax.f32 %v845, %v1010
        %v1202 = vmax.f32 %v846, %v1083
        %v1203 = vmax.f32 %v847, %v1084
        %v1204 = vmax.f32 %v848, %v1085
        %v1205 = vmax.f32 %v849, %v1086
        %v1206 = vmax.f32 %v850, %v1087
        %v1207 = vmax.f32 %v851, %v1088
        %v1208 = vmax.f32 %v852, %v1089
        %v1209 = vmax.f32 %v853, %v1090
        %v1210 = vmax.f32 %v854, %v1091
        %v1211 = vmax.f32 %v855, %v1092
        %v1212 = vmax.f32 %v856, %v1093
        %v1213 = vmax.f32 %v857, %v1094
        %v1214 = vmax.f32 %v858, %v1095
        %v1215 = vmax.f32 %v859, %v1096
        %v1216 = vmax.f32 %v860, %v1040
        %v1217 = vld [vmem:[%s1] sm:$0xff]
        %v1218 = vld [vmem:[%s1 + $0x8] sm:$0xff]
        %v1219 = vld [vmem:[%s1 + $0x10] sm:$0xff]
        %v1220 = vld [vmem:[%s1 + $0x18] sm:$0xff]
        %v1221 = vld [vmem:[%s1 + $0x20] sm:$0xff]
        %v1222 = vld [vmem:[%s1 + $0x28] sm:$0xff]
        %v1223 = vld [vmem:[%s1 + $0x30] sm:$0xff]
        %v1224 = vld [vmem:[%s1 + $0x38] sm:$0xff]
        %v1225 = vld [vmem:[%s2] sm:$0xff]
        %v1226 = vld [vmem:[%s2 + $0x8] sm:$0xff]
        %v1227 = vld [vmem:[%s2 + $0x10] sm:$0xff]
        %v1228 = vld [vmem:[%s2 + $0x18] sm:$0xff]
        %v1229 = vld [vmem:[%s2 + $0x20] sm:$0xff]
        %v1230 = vld [vmem:[%s2 + $0x28] sm:$0xff]
        %v1231 = vld [vmem:[%s2 + $0x30] sm:$0xff]
        %v1232 = vld [vmem:[%s2 + $0x38] sm:$0xff]
        %1234 = vset.pattern.permute.xlu0 0
        %1235 = vperm.xlu0 %1234, %v1225
        %v1236 = vpop.permute.xlu0 %1235
        %1239 = vset.pattern.permute.xlu0 0
        %1240 = vperm.xlu0 %1239, %v1226
        %v1241 = vpop.permute.xlu0 %1240
        %1244 = vset.pattern.permute.xlu0 0
        %1245 = vperm.xlu0 %1244, %v1227
        %v1246 = vpop.permute.xlu0 %1245
        %1249 = vset.pattern.permute.xlu0 0
        %1250 = vperm.xlu0 %1249, %v1228
        %v1251 = vpop.permute.xlu0 %1250
        %1254 = vset.pattern.permute.xlu0 0
        %1255 = vperm.xlu0 %1254, %v1229
        %v1256 = vpop.permute.xlu0 %1255
        %1259 = vset.pattern.permute.xlu0 0
        %1260 = vperm.xlu0 %1259, %v1230
        %v1261 = vpop.permute.xlu0 %1260
        %1264 = vset.pattern.permute.xlu0 0
        %1265 = vperm.xlu0 %1264, %v1231
        %v1266 = vpop.permute.xlu0 %1265
        %1269 = vset.pattern.permute.xlu0 0
        %1270 = vperm.xlu0 %1269, %v1232
        %v1271 = vpop.permute.xlu0 %1270
        %vm1273 = vcmask 261120
        %v1275 = vsel %vm1273, %v1217, 0
        %v1278 = vsel %vm1273, %v1218, 0
        %v1281 = vsel %vm1273, %v1219, 0
        %v1284 = vsel %vm1273, %v1220, 0
        %v1287 = vsel %vm1273, %v1221, 0
        %v1290 = vsel %vm1273, %v1222, 0
        %v1293 = vsel %vm1273, %v1223, 0
        %v1296 = vsel %vm1273, %v1224, 0
        %1298 = vmatprep.subr.mxu0 %v1158
        %1299 = vmatpush1.msra.mxu0 %v1157
        %1300 = vmatprep.subr.mxu0 %v1173
        %1301 = vmatpush1.msra.mxu0 %v1172
        %1302 = vmatprep.subr.mxu0 %v1188
        %1303 = vmatpush1.msra.mxu0 %v1187
        %1304 = vmatprep.subr.mxu0 %v1203
        %1305 = vmatpush1.msra.mxu0 %v1202
        %1306 = vmatprep.subr.mxu0 0.0
        %1307 = vmatpush1.msra.mxu0 0.0
        %1308 = vmatprep.subr.mxu0 0.0
        %1309 = vmatpush1.msra.mxu0 0.0
        %1310 = vmatprep.subr.mxu0 0.0
        %1311 = vmatpush1.msra.mxu0 0.0
        %1312 = vmatprep.subr.mxu0 0.0
        %1313 = vmatpush1.msra.mxu0 0.0
        %1314 = vmatprep.subr.mxu0 0.0
        %1315 = vmatpush1.msra.mxu0 0.0
        %1316 = vmatprep.subr.mxu0 0.0
        %1317 = vmatpush1.msra.mxu0 0.0
        %1318 = vmatprep.subr.mxu0 0.0
        %1319 = vmatpush1.msra.mxu0 0.0
        %1320 = vmatprep.subr.mxu0 0.0
        %1321 = vmatpush1.msra.mxu0 0.0
        %1322 = vmatprep.subr.mxu0 0.0
        %1323 = vmatpush1.msra.mxu0 0.0
        %1324 = vmatprep.subr.mxu0 0.0
        %1325 = vmatpush1.msra.mxu0 0.0
        %1326 = vmatprep.subr.mxu0 0.0
        %1327 = vmatpush1.msra.mxu0 0.0
        %1328 = vmatprep.subr.mxu0 0.0
        %1329 = vmatpush1.msra.mxu0 0.0
        %1330 = vmatprep.subr.mxu0 0.0
        %1331 = vmatpush1.msra.mxu0 0.0
        %1332 = vmatprep.subr.mxu0 0.0
        %1333 = vmatpush1.msra.mxu0 0.0
        %1334 = vmatprep.subr.mxu0 0.0
        %1335 = vmatpush1.msra.mxu0 0.0
        %1336 = vmatprep.subr.mxu0 0.0
        %1337 = vmatpush1.msra.mxu0 0.0
        %1338 = vmatprep.subr.mxu0 0.0
        %1339 = vmatpush1.msra.mxu0 0.0
        %1340 = vmatprep.subr.mxu0 0.0
        %1341 = vmatpush1.msra.mxu0 0.0
        %1342 = vmatprep.subr.mxu0 0.0
        %1343 = vmatpush1.msra.mxu0 0.0
        %1344 = vmatprep.subr.mxu0 0.0
        %1345 = vmatpush1.msra.mxu0 0.0
        %1346 = vmatprep.subr.mxu0 0.0
        %1347 = vmatpush1.msra.mxu0 0.0
        %1348 = vmatprep.subr.mxu0 0.0
        %1349 = vmatpush1.msra.mxu0 0.0
        %1350 = vmatprep.subr.mxu0 0.0
        %1351 = vmatpush1.msra.mxu0 0.0
        %1352 = vmatprep.subr.mxu0 0.0
        %1353 = vmatpush1.msra.mxu0 0.0
        %1354 = vmatprep.subr.mxu0 0.0
        %1355 = vmatpush1.msra.mxu0 0.0
        %1356 = vmatprep.subr.mxu0 0.0
        %1357 = vmatpush1.msra.mxu0 0.0
        %1358 = vmatprep.subr.mxu0 0.0
        %1359 = vmatpush1.msra.mxu0 0.0
        %1360 = vmatprep.subr.mxu0 0.0
        %1361 = vmatpush1.msra.mxu0 0.0
        %1362 = vmatprep.mubr.f32.mxu0 0.0
        %1363 = vmatmul.mubr.f32.gmra.mrb[0].mxu0 %v1275
        %v1364 = vpop.f32.mrb[0].mxu0
        %v1365 = vadd.f32 %v1236, %v1364
        %v1366 = vpop.f32.mrb[0].mxu0
        %v1367 = vadd.f32 %v1236, %v1366
        %1368 = vmatprep.mubr.f32.mxu0 0.0
        %1369 = vmatmul.mubr.f32.gmra.mrb[0].mxu0 %v1278
        %v1370 = vpop.f32.mrb[0].mxu0
        %v1371 = vadd.f32 %v1241, %v1370
        %v1372 = vpop.f32.mrb[0].mxu0
        %v1373 = vadd.f32 %v1241, %v1372
        %1374 = vmatprep.mubr.f32.mxu0 0.0
        %1375 = vmatmul.mubr.f32.gmra.mrb[0].mxu0 %v1281
        %v1376 = vpop.f32.mrb[0].mxu0
        %v1377 = vadd.f32 %v1246, %v1376
        %v1378 = vpop.f32.mrb[0].mxu0
        %v1379 = vadd.f32 %v1246, %v1378
        %1380 = vmatprep.mubr.f32.mxu0 0.0
        %1381 = vmatmul.mubr.f32.gmra.mrb[0].mxu0 %v1284
        %v1382 = vpop.f32.mrb[0].mxu0
        %v1383 = vadd.f32 %v1251, %v1382
        %v1384 = vpop.f32.mrb[0].mxu0
        %v1385 = vadd.f32 %v1251, %v1384
        %1386 = vmatprep.mubr.f32.mxu0 0.0
        %1387 = vmatmul.mubr.f32.gmra.mrb[0].mxu0 %v1287
        %v1388 = vpop.f32.mrb[0].mxu0
        %v1389 = vadd.f32 %v1256, %v1388
        %v1390 = vpop.f32.mrb[0].mxu0
        %v1391 = vadd.f32 %v1256, %v1390
        %1392 = vmatprep.mubr.f32.mxu0 0.0
        %1393 = vmatmul.mubr.f32.gmra.mrb[0].mxu0 %v1290
        %v1394 = vpop.f32.mrb[0].mxu0
        %v1395 = vadd.f32 %v1261, %v1394
        %v1396 = vpop.f32.mrb[0].mxu0
        %v1397 = vadd.f32 %v1261, %v1396
        %1398 = vmatprep.mubr.f32.mxu0 0.0
        %1399 = vmatmul.mubr.f32.gmra.mrb[0].mxu0 %v1293
        %v1400 = vpop.f32.mrb[0].mxu0
        %v1401 = vadd.f32 %v1266, %v1400
        %v1402 = vpop.f32.mrb[0].mxu0
        %v1403 = vadd.f32 %v1266, %v1402
        %1404 = vmatprep.mubr.f32.mxu0 0.0
        %1405 = vmatmul.mubr.f32.gmra.mrb[0].mxu0 %v1296
        %v1406 = vpop.f32.mrb[0].mxu0
        %v1407 = vadd.f32 %v1271, %v1406
        %v1408 = vpop.f32.mrb[0].mxu0
        %v1409 = vadd.f32 %v1271, %v1408
        %1410 = vdwg.mxu0
        %1411 = vmatprep.subr.mxu0 %v1160
        %1412 = vmatpush1.msra.mxu0 %v1159
        %1413 = vmatprep.subr.mxu0 %v1175
        %1414 = vmatpush1.msra.mxu0 %v1174
        %1415 = vmatprep.subr.mxu0 %v1190
        %1416 = vmatpush1.msra.mxu0 %v1189
        %1417 = vmatprep.subr.mxu0 %v1205
        %1418 = vmatpush1.msra.mxu0 %v1204
        %1419 = vmatprep.subr.mxu0 0.0
        %1420 = vmatpush1.msra.mxu0 0.0
        %1421 = vmatprep.subr.mxu0 0.0
        %1422 = vmatpush1.msra.mxu0 0.0
        %1423 = vmatprep.subr.mxu0 0.0
        %1424 = vmatpush1.msra.mxu0 0.0
        %1425 = vmatprep.subr.mxu0 0.0
        %1426 = vmatpush1.msra.mxu0 0.0
        %1427 = vmatprep.subr.mxu0 0.0
        %1428 = vmatpush1.msra.mxu0 0.0
        %1429 = vmatprep.subr.mxu0 0.0
        %1430 = vmatpush1.msra.mxu0 0.0
        %1431 = vmatprep.subr.mxu0 0.0
        %1432 = vmatpush1.msra.mxu0 0.0
        %1433 = vmatprep.subr.mxu0 0.0
        %1434 = vmatpush1.msra.mxu0 0.0
        %1435 = vmatprep.subr.mxu0 0.0
        %1436 = vmatpush1.msra.mxu0 0.0
        %1437 = vmatprep.subr.mxu0 0.0
        %1438 = vmatpush1.msra.mxu0 0.0
        %1439 = vmatprep.subr.mxu0 0.0
        %1440 = vmatpush1.msra.mxu0 0.0
        %1441 = vmatprep.subr.mxu0 0.0
        %1442 = vmatpush1.msra.mxu0 0.0
        %1443 = vmatprep.subr.mxu0 0.0
        %1444 = vmatpush1.msra.mxu0 0.0
        %1445 = vmatprep.subr.mxu0 0.0
        %1446 = vmatpush1.msra.mxu0 0.0
        %1447 = vmatprep.subr.mxu0 0.0
        %1448 = vmatpush1.msra.mxu0 0.0
        %1449 = vmatprep.subr.mxu0 0.0
        %1450 = vmatpush1.msra.mxu0 0.0
        %1451 = vmatprep.subr.mxu0 0.0
        %1452 = vmatpush1.msra.mxu0 0.0
        %1453 = vmatprep.subr.mxu0 0.0
        %1454 = vmatpush1.msra.mxu0 0.0
        %1455 = vmatprep.subr.mxu0 0.0
        %1456 = vmatpush1.msra.mxu0 0.0
        %1457 = vmatprep.subr.mxu0 0.0
        %1458 = vmatpush1.msra.mxu0 0.0
        %1459 = vmatprep.subr.mxu0 0.0
        %1460 = vmatpush1.msra.mxu0 0.0
        %1461 = vmatprep.subr.mxu0 0.0
        %1462 = vmatpush1.msra.mxu0 0.0
        %1463 = vmatprep.subr.mxu0 0.0
        %1464 = vmatpush1.msra.mxu0 0.0
        %1465 = vmatprep.subr.mxu0 0.0
        %1466 = vmatpush1.msra.mxu0 0.0
        %1467 = vmatprep.subr.mxu0 0.0
        %1468 = vmatpush1.msra.mxu0 0.0
        %1469 = vmatprep.subr.mxu0 0.0
        %1470 = vmatpush1.msra.mxu0 0.0
        %1471 = vmatprep.subr.mxu0 0.0
        %1472 = vmatpush1.msra.mxu0 0.0
        %1473 = vmatprep.subr.mxu0 0.0
        %1474 = vmatpush1.msra.mxu0 0.0
        %1475 = vmatprep.mubr.f32.mxu0 0.0
        %1476 = vmatmul.mubr.f32.gmra.mrb[0].mxu0 %v1275
        %v1477 = vpop.f32.mrb[0].mxu0
        %v1478 = vadd.f32 %v1236, %v1477
        %v1479 = vpop.f32.mrb[0].mxu0
        %v1480 = vadd.f32 %v1236, %v1479
        %1481 = vmatprep.mubr.f32.mxu0 0.0
        %1482 = vmatmul.mubr.f32.gmra.mrb[0].mxu0 %v1278
        %v1483 = vpop.f32.mrb[0].mxu0
        %v1484 = vadd.f32 %v1241, %v1483
        %v1485 = vpop.f32.mrb[0].mxu0
        %v1486 = vadd.f32 %v1241, %v1485
        %1487 = vmatprep.mubr.f32.mxu0 0.0
        %1488 = vmatmul.mubr.f32.gmra.mrb[0].mxu0 %v1281
        %v1489 = vpop.f32.mrb[0].mxu0
        %v1490 = vadd.f32 %v1246, %v1489
        %v1491 = vpop.f32.mrb[0].mxu0
        %v1492 = vadd.f32 %v1246, %v1491
        %1493 = vmatprep.mubr.f32.mxu0 0.0
        %1494 = vmatmul.mubr.f32.gmra.mrb[0].mxu0 %v1284
        %v1495 = vpop.f32.mrb[0].mxu0
        %v1496 = vadd.f32 %v1251, %v1495
        %v1497 = vpop.f32.mrb[0].mxu0
        %v1498 = vadd.f32 %v1251, %v1497
        %1499 = vmatprep.mubr.f32.mxu0 0.0
        %1500 = vmatmul.mubr.f32.gmra.mrb[0].mxu0 %v1287
        %v1501 = vpop.f32.mrb[0].mxu0
        %v1502 = vadd.f32 %v1256, %v1501
        %v1503 = vpop.f32.mrb[0].mxu0
        %v1504 = vadd.f32 %v1256, %v1503
        %1505 = vmatprep.mubr.f32.mxu0 0.0
        %1506 = vmatmul.mubr.f32.gmra.mrb[0].mxu0 %v1290
        %v1507 = vpop.f32.mrb[0].mxu0
        %v1508 = vadd.f32 %v1261, %v1507
        %v1509 = vpop.f32.mrb[0].mxu0
        %v1510 = vadd.f32 %v1261, %v1509
        %1511 = vmatprep.mubr.f32.mxu0 0.0
        %1512 = vmatmul.mubr.f32.gmra.mrb[0].mxu0 %v1293
        %v1513 = vpop.f32.mrb[0].mxu0
        %v1514 = vadd.f32 %v1266, %v1513
        %v1515 = vpop.f32.mrb[0].mxu0
        %v1516 = vadd.f32 %v1266, %v1515
        %1517 = vmatprep.mubr.f32.mxu0 0.0
        %1518 = vmatmul.mubr.f32.gmra.mrb[0].mxu0 %v1296
        %v1519 = vpop.f32.mrb[0].mxu0
        %v1520 = vadd.f32 %v1271, %v1519
        %v1521 = vpop.f32.mrb[0].mxu0
        %v1522 = vadd.f32 %v1271, %v1521
        %1523 = vdwg.mxu0
        %1524 = vmatprep.subr.mxu0 %v1162
        %1525 = vmatpush1.msra.mxu0 %v1161
        %1526 = vmatprep.subr.mxu0 %v1177
        %1527 = vmatpush1.msra.mxu0 %v1176
        %1528 = vmatprep.subr.mxu0 %v1192
        %1529 = vmatpush1.msra.mxu0 %v1191
        %1530 = vmatprep.subr.mxu0 %v1207
        %1531 = vmatpush1.msra.mxu0 %v1206
        %1532 = vmatprep.subr.mxu0 0.0
        %1533 = vmatpush1.msra.mxu0 0.0
        %1534 = vmatprep.subr.mxu0 0.0
        %1535 = vmatpush1.msra.mxu0 0.0
        %1536 = vmatprep.subr.mxu0 0.0
        %1537 = vmatpush1.msra.mxu0 0.0
        %1538 = vmatprep.subr.mxu0 0.0
        %1539 = vmatpush1.msra.mxu0 0.0
        %1540 = vmatprep.subr.mxu0 0.0
        %1541 = vmatpush1.msra.mxu0 0.0
        %1542 = vmatprep.subr.mxu0 0.0
        %1543 = vmatpush1.msra.mxu0 0.0
        %1544 = vmatprep.subr.mxu0 0.0
        %1545 = vmatpush1.msra.mxu0 0.0
        %1546 = vmatprep.subr.mxu0 0.0
        %1547 = vmatpush1.msra.mxu0 0.0
        %1548 = vmatprep.subr.mxu0 0.0
        %1549 = vmatpush1.msra.mxu0 0.0
        %1550 = vmatprep.subr.mxu0 0.0
        %1551 = vmatpush1.msra.mxu0 0.0
        %1552 = vmatprep.subr.mxu0 0.0
        %1553 = vmatpush1.msra.mxu0 0.0
        %1554 = vmatprep.subr.mxu0 0.0
        %1555 = vmatpush1.msra.mxu0 0.0
        %1556 = vmatprep.subr.mxu0 0.0
        %1557 = vmatpush1.msra.mxu0 0.0
        %1558 = vmatprep.subr.mxu0 0.0
        %1559 = vmatpush1.msra.mxu0 0.0
        %1560 = vmatprep.subr.mxu0 0.0
        %1561 = vmatpush1.msra.mxu0 0.0
        %1562 = vmatprep.subr.mxu0 0.0
        %1563 = vmatpush1.msra.mxu0 0.0
        %1564 = vmatprep.subr.mxu0 0.0
        %1565 = vmatpush1.msra.mxu0 0.0
        %1566 = vmatprep.subr.mxu0 0.0
        %1567 = vmatpush1.msra.mxu0 0.0
        %1568 = vmatprep.subr.mxu0 0.0
        %1569 = vmatpush1.msra.mxu0 0.0
        %1570 = vmatprep.subr.mxu0 0.0
        %1571 = vmatpush1.msra.mxu0 0.0
        %1572 = vmatprep.subr.mxu0 0.0
        %1573 = vmatpush1.msra.mxu0 0.0
        %1574 = vmatprep.subr.mxu0 0.0
        %1575 = vmatpush1.msra.mxu0 0.0
        %1576 = vmatprep.subr.mxu0 0.0
        %1577 = vmatpush1.msra.mxu0 0.0
        %1578 = vmatprep.subr.mxu0 0.0
        %1579 = vmatpush1.msra.mxu0 0.0
        %1580 = vmatprep.subr.mxu0 0.0
        %1581 = vmatpush1.msra.mxu0 0.0
        %1582 = vmatprep.subr.mxu0 0.0
        %1583 = vmatpush1.msra.mxu0 0.0
        %1584 = vmatprep.subr.mxu0 0.0
        %1585 = vmatpush1.msra.mxu0 0.0
        %1586 = vmatprep.subr.mxu0 0.0
        %1587 = vmatpush1.msra.mxu0 0.0
        %1588 = vmatprep.mubr.f32.mxu0 0.0
        %1589 = vmatmul.mubr.f32.gmra.mrb[0].mxu0 %v1275
        %v1590 = vpop.f32.mrb[0].mxu0
        %v1591 = vadd.f32 %v1236, %v1590
        %v1592 = vpop.f32.mrb[0].mxu0
        %v1593 = vadd.f32 %v1236, %v1592
        %1594 = vmatprep.mubr.f32.mxu0 0.0
        %1595 = vmatmul.mubr.f32.gmra.mrb[0].mxu0 %v1278
        %v1596 = vpop.f32.mrb[0].mxu0
        %v1597 = vadd.f32 %v1241, %v1596
        %v1598 = vpop.f32.mrb[0].mxu0
        %v1599 = vadd.f32 %v1241, %v1598
        %1600 = vmatprep.mubr.f32.mxu0 0.0
        %1601 = vmatmul.mubr.f32.gmra.mrb[0].mxu0 %v1281
        %v1602 = vpop.f32.mrb[0].mxu0
        %v1603 = vadd.f32 %v1246, %v1602
        %v1604 = vpop.f32.mrb[0].mxu0
        %v1605 = vadd.f32 %v1246, %v1604
        %1606 = vmatprep.mubr.f32.mxu0 0.0
        %1607 = vmatmul.mubr.f32.gmra.mrb[0].mxu0 %v1284
        %v1608 = vpop.f32.mrb[0].mxu0
        %v1609 = vadd.f32 %v1251, %v1608
        %v1610 = vpop.f32.mrb[0].mxu0
        %v1611 = vadd.f32 %v1251, %v1610
        %1612 = vmatprep.mubr.f32.mxu0 0.0
        %1613 = vmatmul.mubr.f32.gmra.mrb[0].mxu0 %v1287
        %v1614 = vpop.f32.mrb[0].mxu0
        %v1615 = vadd.f32 %v1256, %v1614
        %v1616 = vpop.f32.mrb[0].mxu0
        %v1617 = vadd.f32 %v1256, %v1616
        %1618 = vmatprep.mubr.f32.mxu0 0.0
        %1619 = vmatmul.mubr.f32.gmra.mrb[0].mxu0 %v1290
        %v1620 = vpop.f32.mrb[0].mxu0
        %v1621 = vadd.f32 %v1261, %v1620
        %v1622 = vpop.f32.mrb[0].mxu0
        %v1623 = vadd.f32 %v1261, %v1622
        %1624 = vmatprep.mubr.f32.mxu0 0.0
        %1625 = vmatmul.mubr.f32.gmra.mrb[0].mxu0 %v1293
        %v1626 = vpop.f32.mrb[0].mxu0
        %v1627 = vadd.f32 %v1266, %v1626
        %v1628 = vpop.f32.mrb[0].mxu0
        %v1629 = vadd.f32 %v1266, %v1628
        %1630 = vmatprep.mubr.f32.mxu0 0.0
        %1631 = vmatmul.mubr.f32.gmra.mrb[0].mxu0 %v1296
        %v1632 = vpop.f32.mrb[0].mxu0
        %v1633 = vadd.f32 %v1271, %v1632
        %v1634 = vpop.f32.mrb[0].mxu0
        %v1635 = vadd.f32 %v1271, %v1634
        %1636 = vdwg.mxu0
        %1637 = vmatprep.subr.mxu0 %v1164
        %1638 = vmatpush1.msra.mxu0 %v1163
        %1639 = vmatprep.subr.mxu0 %v1179
        %1640 = vmatpush1.msra.mxu0 %v1178
        %1641 = vmatprep.subr.mxu0 %v1194
        %1642 = vmatpush1.msra.mxu0 %v1193
        %1643 = vmatprep.subr.mxu0 %v1209
        %1644 = vmatpush1.msra.mxu0 %v1208
        %1645 = vmatprep.subr.mxu0 0.0
        %1646 = vmatpush1.msra.mxu0 0.0
        %1647 = vmatprep.subr.mxu0 0.0
        %1648 = vmatpush1.msra.mxu0 0.0
        %1649 = vmatprep.subr.mxu0 0.0
        %1650 = vmatpush1.msra.mxu0 0.0
        %1651 = vmatprep.subr.mxu0 0.0
        %1652 = vmatpush1.msra.mxu0 0.0
        %1653 = vmatprep.subr.mxu0 0.0
        %1654 = vmatpush1.msra.mxu0 0.0
        %1655 = vmatprep.subr.mxu0 0.0
        %1656 = vmatpush1.msra.mxu0 0.0
        %1657 = vmatprep.subr.mxu0 0.0
        %1658 = vmatpush1.msra.mxu0 0.0
        %1659 = vmatprep.subr.mxu0 0.0
        %1660 = vmatpush1.msra.mxu0 0.0
        %1661 = vmatprep.subr.mxu0 0.0
        %1662 = vmatpush1.msra.mxu0 0.0
        %1663 = vmatprep.subr.mxu0 0.0
        %1664 = vmatpush1.msra.mxu0 0.0
        %1665 = vmatprep.subr.mxu0 0.0
        %1666 = vmatpush1.msra.mxu0 0.0
        %1667 = vmatprep.subr.mxu0 0.0
        %1668 = vmatpush1.msra.mxu0 0.0
        %1669 = vmatprep.subr.mxu0 0.0
        %1670 = vmatpush1.msra.mxu0 0.0
        %1671 = vmatprep.subr.mxu0 0.0
        %1672 = vmatpush1.msra.mxu0 0.0
        %1673 = vmatprep.subr.mxu0 0.0
        %1674 = vmatpush1.msra.mxu0 0.0
        %1675 = vmatprep.subr.mxu0 0.0
        %1676 = vmatpush1.msra.mxu0 0.0
        %1677 = vmatprep.subr.mxu0 0.0
        %1678 = vmatpush1.msra.mxu0 0.0
        %1679 = vmatprep.subr.mxu0 0.0
        %1680 = vmatpush1.msra.mxu0 0.0
        %1681 = vmatprep.subr.mxu0 0.0
        %1682 = vmatpush1.msra.mxu0 0.0
        %1683 = vmatprep.subr.mxu0 0.0
        %1684 = vmatpush1.msra.mxu0 0.0
        %1685 = vmatprep.subr.mxu0 0.0
        %1686 = vmatpush1.msra.mxu0 0.0
        %1687 = vmatprep.subr.mxu0 0.0
        %1688 = vmatpush1.msra.mxu0 0.0
        %1689 = vmatprep.subr.mxu0 0.0
        %1690 = vmatpush1.msra.mxu0 0.0
        %1691 = vmatprep.subr.mxu0 0.0
        %1692 = vmatpush1.msra.mxu0 0.0
        %1693 = vmatprep.subr.mxu0 0.0
        %1694 = vmatpush1.msra.mxu0 0.0
        %1695 = vmatprep.subr.mxu0 0.0
        %1696 = vmatpush1.msra.mxu0 0.0
        %1697 = vmatprep.subr.mxu0 0.0
        %1698 = vmatpush1.msra.mxu0 0.0
        %1699 = vmatprep.subr.mxu0 0.0
        %1700 = vmatpush1.msra.mxu0 0.0
        %1701 = vmatprep.mubr.f32.mxu0 0.0
        %1702 = vmatmul.mubr.f32.gmra.mrb[0].mxu0 %v1275
        %v1703 = vpop.f32.mrb[0].mxu0
        %v1704 = vadd.f32 %v1236, %v1703
        %v1705 = vpop.f32.mrb[0].mxu0
        %v1706 = vadd.f32 %v1236, %v1705
        %1707 = vmatprep.mubr.f32.mxu0 0.0
        %1708 = vmatmul.mubr.f32.gmra.mrb[0].mxu0 %v1278
        %v1709 = vpop.f32.mrb[0].mxu0
        %v1710 = vadd.f32 %v1241, %v1709
        %v1711 = vpop.f32.mrb[0].mxu0
        %v1712 = vadd.f32 %v1241, %v1711
        %1713 = vmatprep.mubr.f32.mxu0 0.0
        %1714 = vmatmul.mubr.f32.gmra.mrb[0].mxu0 %v1281
        %v1715 = vpop.f32.mrb[0].mxu0
        %v1716 = vadd.f32 %v1246, %v1715
        %v1717 = vpop.f32.mrb[0].mxu0
        %v1718 = vadd.f32 %v1246, %v1717
        %1719 = vmatprep.mubr.f32.mxu0 0.0
        %1720 = vmatmul.mubr.f32.gmra.mrb[0].mxu0 %v1284
        %v1721 = vpop.f32.mrb[0].mxu0
        %v1722 = vadd.f32 %v1251, %v1721
        %v1723 = vpop.f32.mrb[0].mxu0
        %v1724 = vadd.f32 %v1251, %v1723
        %1725 = vmatprep.mubr.f32.mxu0 0.0
        %1726 = vmatmul.mubr.f32.gmra.mrb[0].mxu0 %v1287
        %v1727 = vpop.f32.mrb[0].mxu0
        %v1728 = vadd.f32 %v1256, %v1727
        %v1729 = vpop.f32.mrb[0].mxu0
        %v1730 = vadd.f32 %v1256, %v1729
        %1731 = vmatprep.mubr.f32.mxu0 0.0
        %1732 = vmatmul.mubr.f32.gmra.mrb[0].mxu0 %v1290
        %v1733 = vpop.f32.mrb[0].mxu0
        %v1734 = vadd.f32 %v1261, %v1733
        %v1735 = vpop.f32.mrb[0].mxu0
        %v1736 = vadd.f32 %v1261, %v1735
        %1737 = vmatprep.mubr.f32.mxu0 0.0
        %1738 = vmatmul.mubr.f32.gmra.mrb[0].mxu0 %v1293
        %v1739 = vpop.f32.mrb[0].mxu0
        %v1740 = vadd.f32 %v1266, %v1739
        %v1741 = vpop.f32.mrb[0].mxu0
        %v1742 = vadd.f32 %v1266, %v1741
        %1743 = vmatprep.mubr.f32.mxu0 0.0
        %1744 = vmatmul.mubr.f32.gmra.mrb[0].mxu0 %v1296
        %v1745 = vpop.f32.mrb[0].mxu0
        %v1746 = vadd.f32 %v1271, %v1745
        %v1747 = vpop.f32.mrb[0].mxu0
        %v1748 = vadd.f32 %v1271, %v1747
        %1749 = vdwg.mxu0
        %1750 = vmatprep.subr.mxu0 %v1166
        %1751 = vmatpush1.msra.mxu0 %v1165
        %1752 = vmatprep.subr.mxu0 %v1181
        %1753 = vmatpush1.msra.mxu0 %v1180
        %1754 = vmatprep.subr.mxu0 %v1196
        %1755 = vmatpush1.msra.mxu0 %v1195
        %1756 = vmatprep.subr.mxu0 %v1211
        %1757 = vmatpush1.msra.mxu0 %v1210
        %1758 = vmatprep.subr.mxu0 0.0
        %1759 = vmatpush1.msra.mxu0 0.0
        %1760 = vmatprep.subr.mxu0 0.0
        %1761 = vmatpush1.msra.mxu0 0.0
        %1762 = vmatprep.subr.mxu0 0.0
        %1763 = vmatpush1.msra.mxu0 0.0
        %1764 = vmatprep.subr.mxu0 0.0
        %1765 = vmatpush1.msra.mxu0 0.0
        %1766 = vmatprep.subr.mxu0 0.0
        %1767 = vmatpush1.msra.mxu0 0.0
        %1768 = vmatprep.subr.mxu0 0.0
        %1769 = vmatpush1.msra.mxu0 0.0
        %1770 = vmatprep.subr.mxu0 0.0
        %1771 = vmatpush1.msra.mxu0 0.0
        %1772 = vmatprep.subr.mxu0 0.0
        %1773 = vmatpush1.msra.mxu0 0.0
        %1774 = vmatprep.subr.mxu0 0.0
        %1775 = vmatpush1.msra.mxu0 0.0
        %1776 = vmatprep.subr.mxu0 0.0
        %1777 = vmatpush1.msra.mxu0 0.0
        %1778 = vmatprep.subr.mxu0 0.0
        %1779 = vmatpush1.msra.mxu0 0.0
        %1780 = vmatprep.subr.mxu0 0.0
        %1781 = vmatpush1.msra.mxu0 0.0
        %1782 = vmatprep.subr.mxu0 0.0
        %1783 = vmatpush1.msra.mxu0 0.0
        %1784 = vmatprep.subr.mxu0 0.0
        %1785 = vmatpush1.msra.mxu0 0.0
        %1786 = vmatprep.subr.mxu0 0.0
        %1787 = vmatpush1.msra.mxu0 0.0
        %1788 = vmatprep.subr.mxu0 0.0
        %1789 = vmatpush1.msra.mxu0 0.0
        %1790 = vmatprep.subr.mxu0 0.0
        %1791 = vmatpush1.msra.mxu0 0.0
        %1792 = vmatprep.subr.mxu0 0.0
        %1793 = vmatpush1.msra.mxu0 0.0
        %1794 = vmatprep.subr.mxu0 0.0
        %1795 = vmatpush1.msra.mxu0 0.0
        %1796 = vmatprep.subr.mxu0 0.0
        %1797 = vmatpush1.msra.mxu0 0.0
        %1798 = vmatprep.subr.mxu0 0.0
        %1799 = vmatpush1.msra.mxu0 0.0
        %1800 = vmatprep.subr.mxu0 0.0
        %1801 = vmatpush1.msra.mxu0 0.0
        %1802 = vmatprep.subr.mxu0 0.0
        %1803 = vmatpush1.msra.mxu0 0.0
        %1804 = vmatprep.subr.mxu0 0.0
        %1805 = vmatpush1.msra.mxu0 0.0
        %1806 = vmatprep.subr.mxu0 0.0
        %1807 = vmatpush1.msra.mxu0 0.0
        %1808 = vmatprep.subr.mxu0 0.0
        %1809 = vmatpush1.msra.mxu0 0.0
        %1810 = vmatprep.subr.mxu0 0.0
        %1811 = vmatpush1.msra.mxu0 0.0
        %1812 = vmatprep.subr.mxu0 0.0
        %1813 = vmatpush1.msra.mxu0 0.0
        %1814 = vmatprep.mubr.f32.mxu0 0.0
        %1815 = vmatmul.mubr.f32.gmra.mrb[0].mxu0 %v1275
        %v1816 = vpop.f32.mrb[0].mxu0
        %v1817 = vadd.f32 %v1236, %v1816
        %v1818 = vpop.f32.mrb[0].mxu0
        %v1819 = vadd.f32 %v1236, %v1818
        %1820 = vmatprep.mubr.f32.mxu0 0.0
        %1821 = vmatmul.mubr.f32.gmra.mrb[0].mxu0 %v1278
        %v1822 = vpop.f32.mrb[0].mxu0
        %v1823 = vadd.f32 %v1241, %v1822
        %v1824 = vpop.f32.mrb[0].mxu0
        %v1825 = vadd.f32 %v1241, %v1824
        %1826 = vmatprep.mubr.f32.mxu0 0.0
        %1827 = vmatmul.mubr.f32.gmra.mrb[0].mxu0 %v1281
        %v1828 = vpop.f32.mrb[0].mxu0
        %v1829 = vadd.f32 %v1246, %v1828
        %v1830 = vpop.f32.mrb[0].mxu0
        %v1831 = vadd.f32 %v1246, %v1830
        %1832 = vmatprep.mubr.f32.mxu0 0.0
        %1833 = vmatmul.mubr.f32.gmra.mrb[0].mxu0 %v1284
        %v1834 = vpop.f32.mrb[0].mxu0
        %v1835 = vadd.f32 %v1251, %v1834
        %v1836 = vpop.f32.mrb[0].mxu0
        %v1837 = vadd.f32 %v1251, %v1836
        %1838 = vmatprep.mubr.f32.mxu0 0.0
        %1839 = vmatmul.mubr.f32.gmra.mrb[0].mxu0 %v1287
        %v1840 = vpop.f32.mrb[0].mxu0
        %v1841 = vadd.f32 %v1256, %v1840
        %v1842 = vpop.f32.mrb[0].mxu0
        %v1843 = vadd.f32 %v1256, %v1842
        %1844 = vmatprep.mubr.f32.mxu0 0.0
        %1845 = vmatmul.mubr.f32.gmra.mrb[0].mxu0 %v1290
        %v1846 = vpop.f32.mrb[0].mxu0
        %v1847 = vadd.f32 %v1261, %v1846
        %v1848 = vpop.f32.mrb[0].mxu0
        %v1849 = vadd.f32 %v1261, %v1848
        %1850 = vmatprep.mubr.f32.mxu0 0.0
        %1851 = vmatmul.mubr.f32.gmra.mrb[0].mxu0 %v1293
        %v1852 = vpop.f32.mrb[0].mxu0
        %v1853 = vadd.f32 %v1266, %v1852
        %v1854 = vpop.f32.mrb[0].mxu0
        %v1855 = vadd.f32 %v1266, %v1854
        %1856 = vmatprep.mubr.f32.mxu0 0.0
        %1857 = vmatmul.mubr.f32.gmra.mrb[0].mxu0 %v1296
        %v1858 = vpop.f32.mrb[0].mxu0
        %v1859 = vadd.f32 %v1271, %v1858
        %v1860 = vpop.f32.mrb[0].mxu0
        %v1861 = vadd.f32 %v1271, %v1860
        %1862 = vdwg.mxu0
        %1863 = vmatprep.subr.mxu0 %v1168
        %1864 = vmatpush1.msra.mxu0 %v1167
        %1865 = vmatprep.subr.mxu0 %v1183
        %1866 = vmatpush1.msra.mxu0 %v1182
        %1867 = vmatprep.subr.mxu0 %v1198
        %1868 = vmatpush1.msra.mxu0 %v1197
        %1869 = vmatprep.subr.mxu0 %v1213
        %1870 = vmatpush1.msra.mxu0 %v1212
        %1871 = vmatprep.subr.mxu0 0.0
        %1872 = vmatpush1.msra.mxu0 0.0
        %1873 = vmatprep.subr.mxu0 0.0
        %1874 = vmatpush1.msra.mxu0 0.0
        %1875 = vmatprep.subr.mxu0 0.0
        %1876 = vmatpush1.msra.mxu0 0.0
        %1877 = vmatprep.subr.mxu0 0.0
        %1878 = vmatpush1.msra.mxu0 0.0
        %1879 = vmatprep.subr.mxu0 0.0
        %1880 = vmatpush1.msra.mxu0 0.0
        %1881 = vmatprep.subr.mxu0 0.0
        %1882 = vmatpush1.msra.mxu0 0.0
        %1883 = vmatprep.subr.mxu0 0.0
        %1884 = vmatpush1.msra.mxu0 0.0
        %1885 = vmatprep.subr.mxu0 0.0
        %1886 = vmatpush1.msra.mxu0 0.0
        %1887 = vmatprep.subr.mxu0 0.0
        %1888 = vmatpush1.msra.mxu0 0.0
        %1889 = vmatprep.subr.mxu0 0.0
        %1890 = vmatpush1.msra.mxu0 0.0
        %1891 = vmatprep.subr.mxu0 0.0
        %1892 = vmatpush1.msra.mxu0 0.0
        %1893 = vmatprep.subr.mxu0 0.0
        %1894 = vmatpush1.msra.mxu0 0.0
        %1895 = vmatprep.subr.mxu0 0.0
        %1896 = vmatpush1.msra.mxu0 0.0
        %1897 = vmatprep.subr.mxu0 0.0
        %1898 = vmatpush1.msra.mxu0 0.0
        %1899 = vmatprep.subr.mxu0 0.0
        %1900 = vmatpush1.msra.mxu0 0.0
        %1901 = vmatprep.subr.mxu0 0.0
        %1902 = vmatpush1.msra.mxu0 0.0
        %1903 = vmatprep.subr.mxu0 0.0
        %1904 = vmatpush1.msra.mxu0 0.0
        %1905 = vmatprep.subr.mxu0 0.0
        %1906 = vmatpush1.msra.mxu0 0.0
        %1907 = vmatprep.subr.mxu0 0.0
        %1908 = vmatpush1.msra.mxu0 0.0
        %1909 = vmatprep.subr.mxu0 0.0
        %1910 = vmatpush1.msra.mxu0 0.0
        %1911 = vmatprep.subr.mxu0 0.0
        %1912 = vmatpush1.msra.mxu0 0.0
        %1913 = vmatprep.subr.mxu0 0.0
        %1914 = vmatpush1.msra.mxu0 0.0
        %1915 = vmatprep.subr.mxu0 0.0
        %1916 = vmatpush1.msra.mxu0 0.0
        %1917 = vmatprep.subr.mxu0 0.0
        %1918 = vmatpush1.msra.mxu0 0.0
        %1919 = vmatprep.subr.mxu0 0.0
        %1920 = vmatpush1.msra.mxu0 0.0
        %1921 = vmatprep.subr.mxu0 0.0
        %1922 = vmatpush1.msra.mxu0 0.0
        %1923 = vmatprep.subr.mxu0 0.0
        %1924 = vmatpush1.msra.mxu0 0.0
        %1925 = vmatprep.subr.mxu0 0.0
        %1926 = vmatpush1.msra.mxu0 0.0
        %1927 = vmatprep.mubr.f32.mxu0 0.0
        %1928 = vmatmul.mubr.f32.gmra.mrb[0].mxu0 %v1275
        %v1929 = vpop.f32.mrb[0].mxu0
        %v1930 = vadd.f32 %v1236, %v1929
        %v1931 = vpop.f32.mrb[0].mxu0
        %v1932 = vadd.f32 %v1236, %v1931
        %1933 = vmatprep.mubr.f32.mxu0 0.0
        %1934 = vmatmul.mubr.f32.gmra.mrb[0].mxu0 %v1278
        %v1935 = vpop.f32.mrb[0].mxu0
        %v1936 = vadd.f32 %v1241, %v1935
        %v1937 = vpop.f32.mrb[0].mxu0
        %v1938 = vadd.f32 %v1241, %v1937
        %1939 = vmatprep.mubr.f32.mxu0 0.0
        %1940 = vmatmul.mubr.f32.gmra.mrb[0].mxu0 %v1281
        %v1941 = vpop.f32.mrb[0].mxu0
        %v1942 = vadd.f32 %v1246, %v1941
        %v1943 = vpop.f32.mrb[0].mxu0
        %v1944 = vadd.f32 %v1246, %v1943
        %1945 = vmatprep.mubr.f32.mxu0 0.0
        %1946 = vmatmul.mubr.f32.gmra.mrb[0].mxu0 %v1284
        %v1947 = vpop.f32.mrb[0].mxu0
        %v1948 = vadd.f32 %v1251, %v1947
        %v1949 = vpop.f32.mrb[0].mxu0
        %v1950 = vadd.f32 %v1251, %v1949
        %1951 = vmatprep.mubr.f32.mxu0 0.0
        %1952 = vmatmul.mubr.f32.gmra.mrb[0].mxu0 %v1287
        %v1953 = vpop.f32.mrb[0].mxu0
        %v1954 = vadd.f32 %v1256, %v1953
        %v1955 = vpop.f32.mrb[0].mxu0
        %v1956 = vadd.f32 %v1256, %v1955
        %1957 = vmatprep.mubr.f32.mxu0 0.0
        %1958 = vmatmul.mubr.f32.gmra.mrb[0].mxu0 %v1290
        %v1959 = vpop.f32.mrb[0].mxu0
        %v1960 = vadd.f32 %v1261, %v1959
        %v1961 = vpop.f32.mrb[0].mxu0
        %v1962 = vadd.f32 %v1261, %v1961
        %1963 = vmatprep.mubr.f32.mxu0 0.0
        %1964 = vmatmul.mubr.f32.gmra.mrb[0].mxu0 %v1293
        %v1965 = vpop.f32.mrb[0].mxu0
        %v1966 = vadd.f32 %v1266, %v1965
        %v1967 = vpop.f32.mrb[0].mxu0
        %v1968 = vadd.f32 %v1266, %v1967
        %1969 = vmatprep.mubr.f32.mxu0 0.0
        %1970 = vmatmul.mubr.f32.gmra.mrb[0].mxu0 %v1296
        %v1971 = vpop.f32.mrb[0].mxu0
        %v1972 = vadd.f32 %v1271, %v1971
        %v1973 = vpop.f32.mrb[0].mxu0
        %v1974 = vadd.f32 %v1271, %v1973
        %1975 = vdwg.mxu0
        %1976 = vmatprep.subr.mxu0 %v1170
        %1977 = vmatpush1.msra.mxu0 %v1169
        %1978 = vmatprep.subr.mxu0 %v1185
        %1979 = vmatpush1.msra.mxu0 %v1184
        %1980 = vmatprep.subr.mxu0 %v1200
        %1981 = vmatpush1.msra.mxu0 %v1199
        %1982 = vmatprep.subr.mxu0 %v1215
        %1983 = vmatpush1.msra.mxu0 %v1214
        %1984 = vmatprep.subr.mxu0 0.0
        %1985 = vmatpush1.msra.mxu0 0.0
        %1986 = vmatprep.subr.mxu0 0.0
        %1987 = vmatpush1.msra.mxu0 0.0
        %1988 = vmatprep.subr.mxu0 0.0
        %1989 = vmatpush1.msra.mxu0 0.0
        %1990 = vmatprep.subr.mxu0 0.0
        %1991 = vmatpush1.msra.mxu0 0.0
        %1992 = vmatprep.subr.mxu0 0.0
        %1993 = vmatpush1.msra.mxu0 0.0
        %1994 = vmatprep.subr.mxu0 0.0
        %1995 = vmatpush1.msra.mxu0 0.0
        %1996 = vmatprep.subr.mxu0 0.0
        %1997 = vmatpush1.msra.mxu0 0.0
        %1998 = vmatprep.subr.mxu0 0.0
        %1999 = vmatpush1.msra.mxu0 0.0
        %2000 = vmatprep.subr.mxu0 0.0
        %2001 = vmatpush1.msra.mxu0 0.0
        %2002 = vmatprep.subr.mxu0 0.0
        %2003 = vmatpush1.msra.mxu0 0.0
        %2004 = vmatprep.subr.mxu0 0.0
        %2005 = vmatpush1.msra.mxu0 0.0
        %2006 = vmatprep.subr.mxu0 0.0
        %2007 = vmatpush1.msra.mxu0 0.0
        %2008 = vmatprep.subr.mxu0 0.0
        %2009 = vmatpush1.msra.mxu0 0.0
        %2010 = vmatprep.subr.mxu0 0.0
        %2011 = vmatpush1.msra.mxu0 0.0
        %2012 = vmatprep.subr.mxu0 0.0
        %2013 = vmatpush1.msra.mxu0 0.0
        %2014 = vmatprep.subr.mxu0 0.0
        %2015 = vmatpush1.msra.mxu0 0.0
        %2016 = vmatprep.subr.mxu0 0.0
        %2017 = vmatpush1.msra.mxu0 0.0
        %2018 = vmatprep.subr.mxu0 0.0
        %2019 = vmatpush1.msra.mxu0 0.0
        %2020 = vmatprep.subr.mxu0 0.0
        %2021 = vmatpush1.msra.mxu0 0.0
        %2022 = vmatprep.subr.mxu0 0.0
        %2023 = vmatpush1.msra.mxu0 0.0
        %2024 = vmatprep.subr.mxu0 0.0
        %2025 = vmatpush1.msra.mxu0 0.0
        %2026 = vmatprep.subr.mxu0 0.0
        %2027 = vmatpush1.msra.mxu0 0.0
        %2028 = vmatprep.subr.mxu0 0.0
        %2029 = vmatpush1.msra.mxu0 0.0
        %2030 = vmatprep.subr.mxu0 0.0
        %2031 = vmatpush1.msra.mxu0 0.0
        %2032 = vmatprep.subr.mxu0 0.0
        %2033 = vmatpush1.msra.mxu0 0.0
        %2034 = vmatprep.subr.mxu0 0.0
        %2035 = vmatpush1.msra.mxu0 0.0
        %2036 = vmatprep.subr.mxu0 0.0
        %2037 = vmatpush1.msra.mxu0 0.0
        %2038 = vmatprep.subr.mxu0 0.0
        %2039 = vmatpush1.msra.mxu0 0.0
        %2040 = vmatprep.mubr.f32.mxu0 0.0
        %2041 = vmatmul.mubr.f32.gmra.mrb[0].mxu0 %v1275
        %v2042 = vpop.f32.mrb[0].mxu0
        %v2043 = vadd.f32 %v1236, %v2042
        %v2044 = vpop.f32.mrb[0].mxu0
        %v2045 = vadd.f32 %v1236, %v2044
        %2046 = vmatprep.mubr.f32.mxu0 0.0
        %2047 = vmatmul.mubr.f32.gmra.mrb[0].mxu0 %v1278
        %v2048 = vpop.f32.mrb[0].mxu0
        %v2049 = vadd.f32 %v1241, %v2048
        %v2050 = vpop.f32.mrb[0].mxu0
        %v2051 = vadd.f32 %v1241, %v2050
        %2052 = vmatprep.mubr.f32.mxu0 0.0
        %2053 = vmatmul.mubr.f32.gmra.mrb[0].mxu0 %v1281
        %v2054 = vpop.f32.mrb[0].mxu0
        %v2055 = vadd.f32 %v1246, %v2054
        %v2056 = vpop.f32.mrb[0].mxu0
        %v2057 = vadd.f32 %v1246, %v2056
        %2058 = vmatprep.mubr.f32.mxu0 0.0
        %2059 = vmatmul.mubr.f32.gmra.mrb[0].mxu0 %v1284
        %v2060 = vpop.f32.mrb[0].mxu0
        %v2061 = vadd.f32 %v1251, %v2060
        %v2062 = vpop.f32.mrb[0].mxu0
        %v2063 = vadd.f32 %v1251, %v2062
        %2064 = vmatprep.mubr.f32.mxu0 0.0
        %2065 = vmatmul.mubr.f32.gmra.mrb[0].mxu0 %v1287
        %v2066 = vpop.f32.mrb[0].mxu0
        %v2067 = vadd.f32 %v1256, %v2066
        %v2068 = vpop.f32.mrb[0].mxu0
        %v2069 = vadd.f32 %v1256, %v2068
        %2070 = vmatprep.mubr.f32.mxu0 0.0
        %2071 = vmatmul.mubr.f32.gmra.mrb[0].mxu0 %v1290
        %v2072 = vpop.f32.mrb[0].mxu0
        %v2073 = vadd.f32 %v1261, %v2072
        %v2074 = vpop.f32.mrb[0].mxu0
        %v2075 = vadd.f32 %v1261, %v2074
        %2076 = vmatprep.mubr.f32.mxu0 0.0
        %2077 = vmatmul.mubr.f32.gmra.mrb[0].mxu0 %v1293
        %v2078 = vpop.f32.mrb[0].mxu0
        %v2079 = vadd.f32 %v1266, %v2078
        %v2080 = vpop.f32.mrb[0].mxu0
        %v2081 = vadd.f32 %v1266, %v2080
        %2082 = vmatprep.mubr.f32.mxu0 0.0
        %2083 = vmatmul.mubr.f32.gmra.mrb[0].mxu0 %v1296
        %v2084 = vpop.f32.mrb[0].mxu0
        %v2085 = vadd.f32 %v1271, %v2084
        %v2086 = vpop.f32.mrb[0].mxu0
        %v2087 = vadd.f32 %v1271, %v2086
        %2088 = vdwg.mxu0
        %2089 = vmatprep.subr.mxu0 0.0
        %2090 = vmatpush1.msra.mxu0 %v1171
        %2091 = vmatprep.subr.mxu0 0.0
        %2092 = vmatpush1.msra.mxu0 %v1186
        %2093 = vmatprep.subr.mxu0 0.0
        %2094 = vmatpush1.msra.mxu0 %v1201
        %2095 = vmatprep.subr.mxu0 0.0
        %2096 = vmatpush1.msra.mxu0 %v1216
        %2097 = vmatprep.subr.mxu0 0.0
        %2098 = vmatpush1.msra.mxu0 0.0
        %2099 = vmatprep.subr.mxu0 0.0
        %2100 = vmatpush1.msra.mxu0 0.0
        %2101 = vmatprep.subr.mxu0 0.0
        %2102 = vmatpush1.msra.mxu0 0.0
        %2103 = vmatprep.subr.mxu0 0.0
        %2104 = vmatpush1.msra.mxu0 0.0
        %2105 = vmatprep.subr.mxu0 0.0
        %2106 = vmatpush1.msra.mxu0 0.0
        %2107 = vmatprep.subr.mxu0 0.0
        %2108 = vmatpush1.msra.mxu0 0.0
        %2109 = vmatprep.subr.mxu0 0.0
        %2110 = vmatpush1.msra.mxu0 0.0
        %2111 = vmatprep.subr.mxu0 0.0
        %2112 = vmatpush1.msra.mxu0 0.0
        %2113 = vmatprep.subr.mxu0 0.0
        %2114 = vmatpush1.msra.mxu0 0.0
        %2115 = vmatprep.subr.mxu0 0.0
        %2116 = vmatpush1.msra.mxu0 0.0
        %2117 = vmatprep.subr.mxu0 0.0
        %2118 = vmatpush1.msra.mxu0 0.0
        %2119 = vmatprep.subr.mxu0 0.0
        %2120 = vmatpush1.msra.mxu0 0.0
        %2121 = vmatprep.subr.mxu0 0.0
        %2122 = vmatpush1.msra.mxu0 0.0
        %2123 = vmatprep.subr.mxu0 0.0
        %2124 = vmatpush1.msra.mxu0 0.0
        %2125 = vmatprep.subr.mxu0 0.0
        %2126 = vmatpush1.msra.mxu0 0.0
        %2127 = vmatprep.subr.mxu0 0.0
        %2128 = vmatpush1.msra.mxu0 0.0
        %2129 = vmatprep.subr.mxu0 0.0
        %2130 = vmatpush1.msra.mxu0 0.0
        %2131 = vmatprep.subr.mxu0 0.0
        %2132 = vmatpush1.msra.mxu0 0.0
        %2133 = vmatprep.subr.mxu0 0.0
        %2134 = vmatpush1.msra.mxu0 0.0
        %2135 = vmatprep.subr.mxu0 0.0
        %2136 = vmatpush1.msra.mxu0 0.0
        %2137 = vmatprep.subr.mxu0 0.0
        %2138 = vmatpush1.msra.mxu0 0.0
        %2139 = vmatprep.subr.mxu0 0.0
        %2140 = vmatpush1.msra.mxu0 0.0
        %2141 = vmatprep.subr.mxu0 0.0
        %2142 = vmatpush1.msra.mxu0 0.0
        %2143 = vmatprep.subr.mxu0 0.0
        %2144 = vmatpush1.msra.mxu0 0.0
        %2145 = vmatprep.subr.mxu0 0.0
        %2146 = vmatpush1.msra.mxu0 0.0
        %2147 = vmatprep.subr.mxu0 0.0
        %2148 = vmatpush1.msra.mxu0 0.0
        %2149 = vmatprep.subr.mxu0 0.0
        %2150 = vmatpush1.msra.mxu0 0.0
        %2151 = vmatprep.subr.mxu0 0.0
        %2152 = vmatpush1.msra.mxu0 0.0
        %2153 = vmatprep.mubr.f32.mxu0 0.0
        %2154 = vmatmul.mubr.f32.gmra.mrb[0].mxu0 %v1275
        %v2155 = vpop.f32.mrb[0].mxu0
        %v2156 = vadd.f32 %v1236, %v2155
        %v2157 = vpop.f32.mrb[0].mxu0
        %2158 = vmatprep.mubr.f32.mxu0 0.0
        %2159 = vmatmul.mubr.f32.gmra.mrb[0].mxu0 %v1278
        %v2160 = vpop.f32.mrb[0].mxu0
        %v2161 = vadd.f32 %v1241, %v2160
        %v2162 = vpop.f32.mrb[0].mxu0
        %2163 = vmatprep.mubr.f32.mxu0 0.0
        %2164 = vmatmul.mubr.f32.gmra.mrb[0].mxu0 %v1281
        %v2165 = vpop.f32.mrb[0].mxu0
        %v2166 = vadd.f32 %v1246, %v2165
        %v2167 = vpop.f32.mrb[0].mxu0
        %2168 = vmatprep.mubr.f32.mxu0 0.0
        %2169 = vmatmul.mubr.f32.gmra.mrb[0].mxu0 %v1284
        %v2170 = vpop.f32.mrb[0].mxu0
        %v2171 = vadd.f32 %v1251, %v2170
        %v2172 = vpop.f32.mrb[0].mxu0
        %2173 = vmatprep.mubr.f32.mxu0 0.0
        %2174 = vmatmul.mubr.f32.gmra.mrb[0].mxu0 %v1287
        %v2175 = vpop.f32.mrb[0].mxu0
        %v2176 = vadd.f32 %v1256, %v2175
        %v2177 = vpop.f32.mrb[0].mxu0
        %2178 = vmatprep.mubr.f32.mxu0 0.0
        %2179 = vmatmul.mubr.f32.gmra.mrb[0].mxu0 %v1290
        %v2180 = vpop.f32.mrb[0].mxu0
        %v2181 = vadd.f32 %v1261, %v2180
        %v2182 = vpop.f32.mrb[0].mxu0
        %2183 = vmatprep.mubr.f32.mxu0 0.0
        %2184 = vmatmul.mubr.f32.gmra.mrb[0].mxu0 %v1293
        %v2185 = vpop.f32.mrb[0].mxu0
        %v2186 = vadd.f32 %v1266, %v2185
        %v2187 = vpop.f32.mrb[0].mxu0
        %2188 = vmatprep.mubr.f32.mxu0 0.0
        %2189 = vmatmul.mubr.f32.gmra.mrb[0].mxu0 %v1296
        %v2190 = vpop.f32.mrb[0].mxu0
        %v2191 = vadd.f32 %v1271, %v2190
        %v2192 = vpop.f32.mrb[0].mxu0
        %2193 = vdwg.mxu0
        %v2194 = vmax.f32 %v1365, 0.0
        %v2195 = vmax.f32 %v1367, 0.0
        %v2196 = vmax.f32 %v1478, 0.0
        %v2197 = vmax.f32 %v1480, 0.0
        %v2198 = vmax.f32 %v1591, 0.0
        %v2199 = vmax.f32 %v1593, 0.0
        %v2200 = vmax.f32 %v1704, 0.0
        %v2201 = vmax.f32 %v1706, 0.0
        %v2202 = vmax.f32 %v1817, 0.0
        %v2203 = vmax.f32 %v1819, 0.0
        %v2204 = vmax.f32 %v1930, 0.0
        %v2205 = vmax.f32 %v1932, 0.0
        %v2206 = vmax.f32 %v2043, 0.0
        %v2207 = vmax.f32 %v2045, 0.0
        %v2208 = vmax.f32 %v2156, 0.0
        %v2209 = vmax.f32 %v1371, 0.0
        %v2210 = vmax.f32 %v1373, 0.0
        %v2211 = vmax.f32 %v1484, 0.0
        %v2212 = vmax.f32 %v1486, 0.0
        %v2213 = vmax.f32 %v1597, 0.0
        %v2214 = vmax.f32 %v1599, 0.0
        %v2215 = vmax.f32 %v1710, 0.0
        %v2216 = vmax.f32 %v1712, 0.0
        %v2217 = vmax.f32 %v1823, 0.0
        %v2218 = vmax.f32 %v1825, 0.0
        %v2219 = vmax.f32 %v1936, 0.0
        %v2220 = vmax.f32 %v1938, 0.0
        %v2221 = vmax.f32 %v2049, 0.0
        %v2222 = vmax.f32 %v2051, 0.0
        %v2223 = vmax.f32 %v2161, 0.0
        %v2224 = vmax.f32 %v1377, 0.0
        %v2225 = vmax.f32 %v1379, 0.0
        %v2226 = vmax.f32 %v1490, 0.0
        %v2227 = vmax.f32 %v1492, 0.0
        %v2228 = vmax.f32 %v1603, 0.0
        %v2229 = vmax.f32 %v1605, 0.0
        %v2230 = vmax.f32 %v1716, 0.0
        %v2231 = vmax.f32 %v1718, 0.0
        %v2232 = vmax.f32 %v1829, 0.0
        %v2233 = vmax.f32 %v1831, 0.0
        %v2234 = vmax.f32 %v1942, 0.0
        %v2235 = vmax.f32 %v1944, 0.0
        %v2236 = vmax.f32 %v2055, 0.0
        %v2237 = vmax.f32 %v2057, 0.0
        %v2238 = vmax.f32 %v2166, 0.0
        %v2239 = vmax.f32 %v1383, 0.0
        %v2240 = vmax.f32 %v1385, 0.0
        %v2241 = vmax.f32 %v1496, 0.0
        %v2242 = vmax.f32 %v1498, 0.0
        %v2243 = vmax.f32 %v1609, 0.0
        %v2244 = vmax.f32 %v1611, 0.0
        %v2245 = vmax.f32 %v1722, 0.0
        %v2246 = vmax.f32 %v1724, 0.0
        %v2247 = vmax.f32 %v1835, 0.0
        %v2248 = vmax.f32 %v1837, 0.0
        %v2249 = vmax.f32 %v1948, 0.0
        %v2250 = vmax.f32 %v1950, 0.0
        %v2251 = vmax.f32 %v2061, 0.0
        %v2252 = vmax.f32 %v2063, 0.0
        %v2253 = vmax.f32 %v2171, 0.0
        %v2254 = vmax.f32 %v1389, 0.0
        %v2255 = vmax.f32 %v1391, 0.0
        %v2256 = vmax.f32 %v1502, 0.0
        %v2257 = vmax.f32 %v1504, 0.0
        %v2258 = vmax.f32 %v1615, 0.0
        %v2259 = vmax.f32 %v1617, 0.0
        %v2260 = vmax.f32 %v1728, 0.0
        %v2261 = vmax.f32 %v1730, 0.0
        %v2262 = vmax.f32 %v1841, 0.0
        %v2263 = vmax.f32 %v1843, 0.0
        %v2264 = vmax.f32 %v1954, 0.0
        %v2265 = vmax.f32 %v1956, 0.0
        %v2266 = vmax.f32 %v2067, 0.0
        %v2267 = vmax.f32 %v2069, 0.0
        %v2268 = vmax.f32 %v2176, 0.0
        %v2269 = vmax.f32 %v1395, 0.0
        %v2270 = vmax.f32 %v1397, 0.0
        %v2271 = vmax.f32 %v1508, 0.0
        %v2272 = vmax.f32 %v1510, 0.0
        %v2273 = vmax.f32 %v1621, 0.0
        %v2274 = vmax.f32 %v1623, 0.0
        %v2275 = vmax.f32 %v1734, 0.0
        %v2276 = vmax.f32 %v1736, 0.0
        %v2277 = vmax.f32 %v1847, 0.0
        %v2278 = vmax.f32 %v1849, 0.0
        %v2279 = vmax.f32 %v1960, 0.0
        %v2280 = vmax.f32 %v1962, 0.0
        %v2281 = vmax.f32 %v2073, 0.0
        %v2282 = vmax.f32 %v2075, 0.0
        %v2283 = vmax.f32 %v2181, 0.0
        %v2284 = vmax.f32 %v1401, 0.0
        %v2285 = vmax.f32 %v1403, 0.0
        %v2286 = vmax.f32 %v1514, 0.0
        %v2287 = vmax.f32 %v1516, 0.0
        %v2288 = vmax.f32 %v1627, 0.0
        %v2289 = vmax.f32 %v1629, 0.0
        %v2290 = vmax.f32 %v1740, 0.0
        %v2291 = vmax.f32 %v1742, 0.0
        %v2292 = vmax.f32 %v1853, 0.0
        %v2293 = vmax.f32 %v1855, 0.0
        %v2294 = vmax.f32 %v1966, 0.0
        %v2295 = vmax.f32 %v1968, 0.0
        %v2296 = vmax.f32 %v2079, 0.0
        %v2297 = vmax.f32 %v2081, 0.0
        %v2298 = vmax.f32 %v2186, 0.0
        %v2299 = vmax.f32 %v1407, 0.0
        %v2300 = vmax.f32 %v1409, 0.0
        %v2301 = vmax.f32 %v1520, 0.0
        %v2302 = vmax.f32 %v1522, 0.0
        %v2303 = vmax.f32 %v1633, 0.0
        %v2304 = vmax.f32 %v1635, 0.0
        %v2305 = vmax.f32 %v1746, 0.0
        %v2306 = vmax.f32 %v1748, 0.0
        %v2307 = vmax.f32 %v1859, 0.0
        %v2308 = vmax.f32 %v1861, 0.0
        %v2309 = vmax.f32 %v1972, 0.0
        %v2310 = vmax.f32 %v1974, 0.0
        %v2311 = vmax.f32 %v2085, 0.0
        %v2312 = vmax.f32 %v2087, 0.0
        %v2313 = vmax.f32 %v2191, 0.0
        %v2314 = vld [vmem:[%s3] sm:$0x7]
        %v2315 = vld [vmem:[%s4] sm:$0x7]
        %2317 = vset.pattern.permute.xlu0 0
        %2318 = vperm.xlu0 %2317, %v2315
        %v2319 = vpop.permute.xlu0 %2318
        %vm2321 = vcmask 523264
        %v2323 = vsel %vm2321, %v2314, 0
        %2325 = vmatprep.subr.mxu0 %v2195
        %2326 = vmatpush1.msra.mxu0 %v2194
        %2327 = vmatprep.subr.mxu0 %v2210
        %2328 = vmatpush1.msra.mxu0 %v2209
        %2329 = vmatprep.subr.mxu0 %v2225
        %2330 = vmatpush1.msra.mxu0 %v2224
        %2331 = vmatprep.subr.mxu0 %v2240
        %2332 = vmatpush1.msra.mxu0 %v2239
        %2333 = vmatprep.subr.mxu0 %v2255
        %2334 = vmatpush1.msra.mxu0 %v2254
        %2335 = vmatprep.subr.mxu0 %v2270
        %2336 = vmatpush1.msra.mxu0 %v2269
        %2337 = vmatprep.subr.mxu0 %v2285
        %2338 = vmatpush1.msra.mxu0 %v2284
        %2339 = vmatprep.subr.mxu0 %v2300
        %2340 = vmatpush1.msra.mxu0 %v2299
        %2341 = vmatprep.subr.mxu0 0.0
        %2342 = vmatpush1.msra.mxu0 0.0
        %2343 = vmatprep.subr.mxu0 0.0
        %2344 = vmatpush1.msra.mxu0 0.0
        %2345 = vmatprep.subr.mxu0 0.0
        %2346 = vmatpush1.msra.mxu0 0.0
        %2347 = vmatprep.subr.mxu0 0.0
        %2348 = vmatpush1.msra.mxu0 0.0
        %2349 = vmatprep.subr.mxu0 0.0
        %2350 = vmatpush1.msra.mxu0 0.0
        %2351 = vmatprep.subr.mxu0 0.0
        %2352 = vmatpush1.msra.mxu0 0.0
        %2353 = vmatprep.subr.mxu0 0.0
        %2354 = vmatpush1.msra.mxu0 0.0
        %2355 = vmatprep.subr.mxu0 0.0
        %2356 = vmatpush1.msra.mxu0 0.0
        %2357 = vmatprep.subr.mxu0 0.0
        %2358 = vmatpush1.msra.mxu0 0.0
        %2359 = vmatprep.subr.mxu0 0.0
        %2360 = vmatpush1.msra.mxu0 0.0
        %2361 = vmatprep.subr.mxu0 0.0
        %2362 = vmatpush1.msra.mxu0 0.0
        %2363 = vmatprep.subr.mxu0 0.0
        %2364 = vmatpush1.msra.mxu0 0.0
        %2365 = vmatprep.subr.mxu0 0.0
        %2366 = vmatpush1.msra.mxu0 0.0
        %2367 = vmatprep.subr.mxu0 0.0
        %2368 = vmatpush1.msra.mxu0 0.0
        %2369 = vmatprep.subr.mxu0 0.0
        %2370 = vmatpush1.msra.mxu0 0.0
        %2371 = vmatprep.subr.mxu0 0.0
        %2372 = vmatpush1.msra.mxu0 0.0
        %2373 = vmatprep.subr.mxu0 0.0
        %2374 = vmatpush1.msra.mxu0 0.0
        %2375 = vmatprep.subr.mxu0 0.0
        %2376 = vmatpush1.msra.mxu0 0.0
        %2377 = vmatprep.subr.mxu0 0.0
        %2378 = vmatpush1.msra.mxu0 0.0
        %2379 = vmatprep.subr.mxu0 0.0
        %2380 = vmatpush1.msra.mxu0 0.0
        %2381 = vmatprep.subr.mxu0 0.0
        %2382 = vmatpush1.msra.mxu0 0.0
        %2383 = vmatprep.subr.mxu0 0.0
        %2384 = vmatpush1.msra.mxu0 0.0
        %2385 = vmatprep.subr.mxu0 0.0
        %2386 = vmatpush1.msra.mxu0 0.0
        %2387 = vmatprep.subr.mxu0 0.0
        %2388 = vmatpush1.msra.mxu0 0.0
        %2389 = vmatprep.mubr.f32.mxu0 0.0
        %2390 = vmatmul.mubr.f32.gmra.mrb[0].mxu0 %v2323
        %v2391 = vpop.f32.mrb[0].mxu0
        %v2392 = vadd.f32 %v2319, %v2391
        %v2393 = vpop.f32.mrb[0].mxu0
        %v2394 = vadd.f32 %v2319, %v2393
        %2395 = vdwg.mxu0
        %2396 = vmatprep.subr.mxu0 %v2197
        %2397 = vmatpush1.msra.mxu0 %v2196
        %2398 = vmatprep.subr.mxu0 %v2212
        %2399 = vmatpush1.msra.mxu0 %v2211
        %2400 = vmatprep.subr.mxu0 %v2227
        %2401 = vmatpush1.msra.mxu0 %v2226
        %2402 = vmatprep.subr.mxu0 %v2242
        %2403 = vmatpush1.msra.mxu0 %v2241
        %2404 = vmatprep.subr.mxu0 %v2257
        %2405 = vmatpush1.msra.mxu0 %v2256
        %2406 = vmatprep.subr.mxu0 %v2272
        %2407 = vmatpush1.msra.mxu0 %v2271
        %2408 = vmatprep.subr.mxu0 %v2287
        %2409 = vmatpush1.msra.mxu0 %v2286
        %2410 = vmatprep.subr.mxu0 %v2302
        %2411 = vmatpush1.msra.mxu0 %v2301
        %2412 = vmatprep.subr.mxu0 0.0
        %2413 = vmatpush1.msra.mxu0 0.0
        %2414 = vmatprep.subr.mxu0 0.0
        %2415 = vmatpush1.msra.mxu0 0.0
        %2416 = vmatprep.subr.mxu0 0.0
        %2417 = vmatpush1.msra.mxu0 0.0
        %2418 = vmatprep.subr.mxu0 0.0
        %2419 = vmatpush1.msra.mxu0 0.0
        %2420 = vmatprep.subr.mxu0 0.0
        %2421 = vmatpush1.msra.mxu0 0.0
        %2422 = vmatprep.subr.mxu0 0.0
        %2423 = vmatpush1.msra.mxu0 0.0
        %2424 = vmatprep.subr.mxu0 0.0
        %2425 = vmatpush1.msra.mxu0 0.0
        %2426 = vmatprep.subr.mxu0 0.0
        %2427 = vmatpush1.msra.mxu0 0.0
        %2428 = vmatprep.subr.mxu0 0.0
        %2429 = vmatpush1.msra.mxu0 0.0
        %2430 = vmatprep.subr.mxu0 0.0
        %2431 = vmatpush1.msra.mxu0 0.0
        %2432 = vmatprep.subr.mxu0 0.0
        %2433 = vmatpush1.msra.mxu0 0.0
        %2434 = vmatprep.subr.mxu0 0.0
        %2435 = vmatpush1.msra.mxu0 0.0
        %2436 = vmatprep.subr.mxu0 0.0
        %2437 = vmatpush1.msra.mxu0 0.0
        %2438 = vmatprep.subr.mxu0 0.0
        %2439 = vmatpush1.msra.mxu0 0.0
        %2440 = vmatprep.subr.mxu0 0.0
        %2441 = vmatpush1.msra.mxu0 0.0
        %2442 = vmatprep.subr.mxu0 0.0
        %2443 = vmatpush1.msra.mxu0 0.0
        %2444 = vmatprep.subr.mxu0 0.0
        %2445 = vmatpush1.msra.mxu0 0.0
        %2446 = vmatprep.subr.mxu0 0.0
        %2447 = vmatpush1.msra.mxu0 0.0
        %2448 = vmatprep.subr.mxu0 0.0
        %2449 = vmatpush1.msra.mxu0 0.0
        %2450 = vmatprep.subr.mxu0 0.0
        %2451 = vmatpush1.msra.mxu0 0.0
        %2452 = vmatprep.subr.mxu0 0.0
        %2453 = vmatpush1.msra.mxu0 0.0
        %2454 = vmatprep.subr.mxu0 0.0
        %2455 = vmatpush1.msra.mxu0 0.0
        %2456 = vmatprep.subr.mxu0 0.0
        %2457 = vmatpush1.msra.mxu0 0.0
        %2458 = vmatprep.subr.mxu0 0.0
        %2459 = vmatpush1.msra.mxu0 0.0
        %2460 = vmatprep.mubr.f32.mxu0 0.0
        %2461 = vmatmul.mubr.f32.gmra.mrb[0].mxu0 %v2323
        %v2462 = vpop.f32.mrb[0].mxu0
        %v2463 = vadd.f32 %v2319, %v2462
        %v2464 = vpop.f32.mrb[0].mxu0
        %v2465 = vadd.f32 %v2319, %v2464
        %2466 = vdwg.mxu0
        %2467 = vmatprep.subr.mxu0 %v2199
        %2468 = vmatpush1.msra.mxu0 %v2198
        %2469 = vmatprep.subr.mxu0 %v2214
        %2470 = vmatpush1.msra.mxu0 %v2213
        %2471 = vmatprep.subr.mxu0 %v2229
        %2472 = vmatpush1.msra.mxu0 %v2228
        %2473 = vmatprep.subr.mxu0 %v2244
        %2474 = vmatpush1.msra.mxu0 %v2243
        %2475 = vmatprep.subr.mxu0 %v2259
        %2476 = vmatpush1.msra.mxu0 %v2258
        %2477 = vmatprep.subr.mxu0 %v2274
        %2478 = vmatpush1.msra.mxu0 %v2273
        %2479 = vmatprep.subr.mxu0 %v2289
        %2480 = vmatpush1.msra.mxu0 %v2288
        %2481 = vmatprep.subr.mxu0 %v2304
        %2482 = vmatpush1.msra.mxu0 %v2303
        %2483 = vmatprep.subr.mxu0 0.0
        %2484 = vmatpush1.msra.mxu0 0.0
        %2485 = vmatprep.subr.mxu0 0.0
        %2486 = vmatpush1.msra.mxu0 0.0
        %2487 = vmatprep.subr.mxu0 0.0
        %2488 = vmatpush1.msra.mxu0 0.0
        %2489 = vmatprep.subr.mxu0 0.0
        %2490 = vmatpush1.msra.mxu0 0.0
        %2491 = vmatprep.subr.mxu0 0.0
        %2492 = vmatpush1.msra.mxu0 0.0
        %2493 = vmatprep.subr.mxu0 0.0
        %2494 = vmatpush1.msra.mxu0 0.0
        %2495 = vmatprep.subr.mxu0 0.0
        %2496 = vmatpush1.msra.mxu0 0.0
        %2497 = vmatprep.subr.mxu0 0.0
        %2498 = vmatpush1.msra.mxu0 0.0
        %2499 = vmatprep.subr.mxu0 0.0
        %2500 = vmatpush1.msra.mxu0 0.0
        %2501 = vmatprep.subr.mxu0 0.0
        %2502 = vmatpush1.msra.mxu0 0.0
        %2503 = vmatprep.subr.mxu0 0.0
        %2504 = vmatpush1.msra.mxu0 0.0
        %2505 = vmatprep.subr.mxu0 0.0
        %2506 = vmatpush1.msra.mxu0 0.0
        %2507 = vmatprep.subr.mxu0 0.0
        %2508 = vmatpush1.msra.mxu0 0.0
        %2509 = vmatprep.subr.mxu0 0.0
        %2510 = vmatpush1.msra.mxu0 0.0
        %2511 = vmatprep.subr.mxu0 0.0
        %2512 = vmatpush1.msra.mxu0 0.0
        %2513 = vmatprep.subr.mxu0 0.0
        %2514 = vmatpush1.msra.mxu0 0.0
        %2515 = vmatprep.subr.mxu0 0.0
        %2516 = vmatpush1.msra.mxu0 0.0
        %2517 = vmatprep.subr.mxu0 0.0
        %2518 = vmatpush1.msra.mxu0 0.0
        %2519 = vmatprep.subr.mxu0 0.0
        %2520 = vmatpush1.msra.mxu0 0.0
        %2521 = vmatprep.subr.mxu0 0.0
        %2522 = vmatpush1.msra.mxu0 0.0
        %2523 = vmatprep.subr.mxu0 0.0
        %2524 = vmatpush1.msra.mxu0 0.0
        %2525 = vmatprep.subr.mxu0 0.0
        %2526 = vmatpush1.msra.mxu0 0.0
        %2527 = vmatprep.subr.mxu0 0.0
        %2528 = vmatpush1.msra.mxu0 0.0
        %2529 = vmatprep.subr.mxu0 0.0
        %2530 = vmatpush1.msra.mxu0 0.0
        %2531 = vmatprep.mubr.f32.mxu0 0.0
        %2532 = vmatmul.mubr.f32.gmra.mrb[0].mxu0 %v2323
        %v2533 = vpop.f32.mrb[0].mxu0
        %v2534 = vadd.f32 %v2319, %v2533
        %v2535 = vpop.f32.mrb[0].mxu0
        %v2536 = vadd.f32 %v2319, %v2535
        %2537 = vdwg.mxu0
        %2538 = vmatprep.subr.mxu0 %v2201
        %2539 = vmatpush1.msra.mxu0 %v2200
        %2540 = vmatprep.subr.mxu0 %v2216
        %2541 = vmatpush1.msra.mxu0 %v2215
        %2542 = vmatprep.subr.mxu0 %v2231
        %2543 = vmatpush1.msra.mxu0 %v2230
        %2544 = vmatprep.subr.mxu0 %v2246
        %2545 = vmatpush1.msra.mxu0 %v2245
        %2546 = vmatprep.subr.mxu0 %v2261
        %2547 = vmatpush1.msra.mxu0 %v2260
        %2548 = vmatprep.subr.mxu0 %v2276
        %2549 = vmatpush1.msra.mxu0 %v2275
        %2550 = vmatprep.subr.mxu0 %v2291
        %2551 = vmatpush1.msra.mxu0 %v2290
        %2552 = vmatprep.subr.mxu0 %v2306
        %2553 = vmatpush1.msra.mxu0 %v2305
        %2554 = vmatprep.subr.mxu0 0.0
        %2555 = vmatpush1.msra.mxu0 0.0
        %2556 = vmatprep.subr.mxu0 0.0
        %2557 = vmatpush1.msra.mxu0 0.0
        %2558 = vmatprep.subr.mxu0 0.0
        %2559 = vmatpush1.msra.mxu0 0.0
        %2560 = vmatprep.subr.mxu0 0.0
        %2561 = vmatpush1.msra.mxu0 0.0
        %2562 = vmatprep.subr.mxu0 0.0
        %2563 = vmatpush1.msra.mxu0 0.0
        %2564 = vmatprep.subr.mxu0 0.0
        %2565 = vmatpush1.msra.mxu0 0.0
        %2566 = vmatprep.subr.mxu0 0.0
        %2567 = vmatpush1.msra.mxu0 0.0
        %2568 = vmatprep.subr.mxu0 0.0
        %2569 = vmatpush1.msra.mxu0 0.0
        %2570 = vmatprep.subr.mxu0 0.0
        %2571 = vmatpush1.msra.mxu0 0.0
        %2572 = vmatprep.subr.mxu0 0.0
        %2573 = vmatpush1.msra.mxu0 0.0
        %2574 = vmatprep.subr.mxu0 0.0
        %2575 = vmatpush1.msra.mxu0 0.0
        %2576 = vmatprep.subr.mxu0 0.0
        %2577 = vmatpush1.msra.mxu0 0.0
        %2578 = vmatprep.subr.mxu0 0.0
        %2579 = vmatpush1.msra.mxu0 0.0
        %2580 = vmatprep.subr.mxu0 0.0
        %2581 = vmatpush1.msra.mxu0 0.0
        %2582 = vmatprep.subr.mxu0 0.0
        %2583 = vmatpush1.msra.mxu0 0.0
        %2584 = vmatprep.subr.mxu0 0.0
        %2585 = vmatpush1.msra.mxu0 0.0
        %2586 = vmatprep.subr.mxu0 0.0
        %2587 = vmatpush1.msra.mxu0 0.0
        %2588 = vmatprep.subr.mxu0 0.0
        %2589 = vmatpush1.msra.mxu0 0.0
        %2590 = vmatprep.subr.mxu0 0.0
        %2591 = vmatpush1.msra.mxu0 0.0
        %2592 = vmatprep.subr.mxu0 0.0
        %2593 = vmatpush1.msra.mxu0 0.0
        %2594 = vmatprep.subr.mxu0 0.0
        %2595 = vmatpush1.msra.mxu0 0.0
        %2596 = vmatprep.subr.mxu0 0.0
        %2597 = vmatpush1.msra.mxu0 0.0
        %2598 = vmatprep.subr.mxu0 0.0
        %2599 = vmatpush1.msra.mxu0 0.0
        %2600 = vmatprep.subr.mxu0 0.0
        %2601 = vmatpush1.msra.mxu0 0.0
        %2602 = vmatprep.mubr.f32.mxu0 0.0
        %2603 = vmatmul.mubr.f32.gmra.mrb[0].mxu0 %v2323
        %v2604 = vpop.f32.mrb[0].mxu0
        %v2605 = vadd.f32 %v2319, %v2604
        %v2606 = vpop.f32.mrb[0].mxu0
        %v2607 = vadd.f32 %v2319, %v2606
        %2608 = vdwg.mxu0
        %2609 = vmatprep.subr.mxu0 %v2203
        %2610 = vmatpush1.msra.mxu0 %v2202
        %2611 = vmatprep.subr.mxu0 %v2218
        %2612 = vmatpush1.msra.mxu0 %v2217
        %2613 = vmatprep.subr.mxu0 %v2233
        %2614 = vmatpush1.msra.mxu0 %v2232
        %2615 = vmatprep.subr.mxu0 %v2248
        %2616 = vmatpush1.msra.mxu0 %v2247
        %2617 = vmatprep.subr.mxu0 %v2263
        %2618 = vmatpush1.msra.mxu0 %v2262
        %2619 = vmatprep.subr.mxu0 %v2278
        %2620 = vmatpush1.msra.mxu0 %v2277
        %2621 = vmatprep.subr.mxu0 %v2293
        %2622 = vmatpush1.msra.mxu0 %v2292
        %2623 = vmatprep.subr.mxu0 %v2308
        %2624 = vmatpush1.msra.mxu0 %v2307
        %2625 = vmatprep.subr.mxu0 0.0
        %2626 = vmatpush1.msra.mxu0 0.0
        %2627 = vmatprep.subr.mxu0 0.0
        %2628 = vmatpush1.msra.mxu0 0.0
        %2629 = vmatprep.subr.mxu0 0.0
        %2630 = vmatpush1.msra.mxu0 0.0
        %2631 = vmatprep.subr.mxu0 0.0
        %2632 = vmatpush1.msra.mxu0 0.0
        %2633 = vmatprep.subr.mxu0 0.0
        %2634 = vmatpush1.msra.mxu0 0.0
        %2635 = vmatprep.subr.mxu0 0.0
        %2636 = vmatpush1.msra.mxu0 0.0
        %2637 = vmatprep.subr.mxu0 0.0
        %2638 = vmatpush1.msra.mxu0 0.0
        %2639 = vmatprep.subr.mxu0 0.0
        %2640 = vmatpush1.msra.mxu0 0.0
        %2641 = vmatprep.subr.mxu0 0.0
        %2642 = vmatpush1.msra.mxu0 0.0
        %2643 = vmatprep.subr.mxu0 0.0
        %2644 = vmatpush1.msra.mxu0 0.0
        %2645 = vmatprep.subr.mxu0 0.0
        %2646 = vmatpush1.msra.mxu0 0.0
        %2647 = vmatprep.subr.mxu0 0.0
        %2648 = vmatpush1.msra.mxu0 0.0
        %2649 = vmatprep.subr.mxu0 0.0
        %2650 = vmatpush1.msra.mxu0 0.0
        %2651 = vmatprep.subr.mxu0 0.0
        %2652 = vmatpush1.msra.mxu0 0.0
        %2653 = vmatprep.subr.mxu0 0.0
        %2654 = vmatpush1.msra.mxu0 0.0
        %2655 = vmatprep.subr.mxu0 0.0
        %2656 = vmatpush1.msra.mxu0 0.0
        %2657 = vmatprep.subr.mxu0 0.0
        %2658 = vmatpush1.msra.mxu0 0.0
        %2659 = vmatprep.subr.mxu0 0.0
        %2660 = vmatpush1.msra.mxu0 0.0
        %2661 = vmatprep.subr.mxu0 0.0
        %2662 = vmatpush1.msra.mxu0 0.0
        %2663 = vmatprep.subr.mxu0 0.0
        %2664 = vmatpush1.msra.mxu0 0.0
        %2665 = vmatprep.subr.mxu0 0.0
        %2666 = vmatpush1.msra.mxu0 0.0
        %2667 = vmatprep.subr.mxu0 0.0
        %2668 = vmatpush1.msra.mxu0 0.0
        %2669 = vmatprep.subr.mxu0 0.0
        %2670 = vmatpush1.msra.mxu0 0.0
        %2671 = vmatprep.subr.mxu0 0.0
        %2672 = vmatpush1.msra.mxu0 0.0
        %2673 = vmatprep.mubr.f32.mxu0 0.0
        %2674 = vmatmul.mubr.f32.gmra.mrb[0].mxu0 %v2323
        %v2675 = vpop.f32.mrb[0].mxu0
        %v2676 = vadd.f32 %v2319, %v2675
        %v2677 = vpop.f32.mrb[0].mxu0
        %v2678 = vadd.f32 %v2319, %v2677
        %2679 = vdwg.mxu0
        %2680 = vmatprep.subr.mxu0 %v2205
        %2681 = vmatpush1.msra.mxu0 %v2204
        %2682 = vmatprep.subr.mxu0 %v2220
        %2683 = vmatpush1.msra.mxu0 %v2219
        %2684 = vmatprep.subr.mxu0 %v2235
        %2685 = vmatpush1.msra.mxu0 %v2234
        %2686 = vmatprep.subr.mxu0 %v2250
        %2687 = vmatpush1.msra.mxu0 %v2249
        %2688 = vmatprep.subr.mxu0 %v2265
        %2689 = vmatpush1.msra.mxu0 %v2264
        %2690 = vmatprep.subr.mxu0 %v2280
        %2691 = vmatpush1.msra.mxu0 %v2279
        %2692 = vmatprep.subr.mxu0 %v2295
        %2693 = vmatpush1.msra.mxu0 %v2294
        %2694 = vmatprep.subr.mxu0 %v2310
        %2695 = vmatpush1.msra.mxu0 %v2309
        %2696 = vmatprep.subr.mxu0 0.0
        %2697 = vmatpush1.msra.mxu0 0.0
        %2698 = vmatprep.subr.mxu0 0.0
        %2699 = vmatpush1.msra.mxu0 0.0
        %2700 = vmatprep.subr.mxu0 0.0
        %2701 = vmatpush1.msra.mxu0 0.0
        %2702 = vmatprep.subr.mxu0 0.0
        %2703 = vmatpush1.msra.mxu0 0.0
        %2704 = vmatprep.subr.mxu0 0.0
        %2705 = vmatpush1.msra.mxu0 0.0
        %2706 = vmatprep.subr.mxu0 0.0
        %2707 = vmatpush1.msra.mxu0 0.0
        %2708 = vmatprep.subr.mxu0 0.0
        %2709 = vmatpush1.msra.mxu0 0.0
        %2710 = vmatprep.subr.mxu0 0.0
        %2711 = vmatpush1.msra.mxu0 0.0
        %2712 = vmatprep.subr.mxu0 0.0
        %2713 = vmatpush1.msra.mxu0 0.0
        %2714 = vmatprep.subr.mxu0 0.0
        %2715 = vmatpush1.msra.mxu0 0.0
        %2716 = vmatprep.subr.mxu0 0.0
        %2717 = vmatpush1.msra.mxu0 0.0
        %2718 = vmatprep.subr.mxu0 0.0
        %2719 = vmatpush1.msra.mxu0 0.0
        %2720 = vmatprep.subr.mxu0 0.0
        %2721 = vmatpush1.msra.mxu0 0.0
        %2722 = vmatprep.subr.mxu0 0.0
        %2723 = vmatpush1.msra.mxu0 0.0
        %2724 = vmatprep.subr.mxu0 0.0
        %2725 = vmatpush1.msra.mxu0 0.0
        %2726 = vmatprep.subr.mxu0 0.0
        %2727 = vmatpush1.msra.mxu0 0.0
        %2728 = vmatprep.subr.mxu0 0.0
        %2729 = vmatpush1.msra.mxu0 0.0
        %2730 = vmatprep.subr.mxu0 0.0
        %2731 = vmatpush1.msra.mxu0 0.0
        %2732 = vmatprep.subr.mxu0 0.0
        %2733 = vmatpush1.msra.mxu0 0.0
        %2734 = vmatprep.subr.mxu0 0.0
        %2735 = vmatpush1.msra.mxu0 0.0
        %2736 = vmatprep.subr.mxu0 0.0
        %2737 = vmatpush1.msra.mxu0 0.0
        %2738 = vmatprep.subr.mxu0 0.0
        %2739 = vmatpush1.msra.mxu0 0.0
        %2740 = vmatprep.subr.mxu0 0.0
        %2741 = vmatpush1.msra.mxu0 0.0
        %2742 = vmatprep.subr.mxu0 0.0
        %2743 = vmatpush1.msra.mxu0 0.0
        %2744 = vmatprep.mubr.f32.mxu0 0.0
        %2745 = vmatmul.mubr.f32.gmra.mrb[0].mxu0 %v2323
        %v2746 = vpop.f32.mrb[0].mxu0
        %v2747 = vadd.f32 %v2319, %v2746
        %v2748 = vpop.f32.mrb[0].mxu0
        %v2749 = vadd.f32 %v2319, %v2748
        %2750 = vdwg.mxu0
        %2751 = vmatprep.subr.mxu0 %v2207
        %2752 = vmatpush1.msra.mxu0 %v2206
        %2753 = vmatprep.subr.mxu0 %v2222
        %2754 = vmatpush1.msra.mxu0 %v2221
        %2755 = vmatprep.subr.mxu0 %v2237
        %2756 = vmatpush1.msra.mxu0 %v2236
        %2757 = vmatprep.subr.mxu0 %v2252
        %2758 = vmatpush1.msra.mxu0 %v2251
        %2759 = vmatprep.subr.mxu0 %v2267
        %2760 = vmatpush1.msra.mxu0 %v2266
        %2761 = vmatprep.subr.mxu0 %v2282
        %2762 = vmatpush1.msra.mxu0 %v2281
        %2763 = vmatprep.subr.mxu0 %v2297
        %2764 = vmatpush1.msra.mxu0 %v2296
        %2765 = vmatprep.subr.mxu0 %v2312
        %2766 = vmatpush1.msra.mxu0 %v2311
        %2767 = vmatprep.subr.mxu0 0.0
        %2768 = vmatpush1.msra.mxu0 0.0
        %2769 = vmatprep.subr.mxu0 0.0
        %2770 = vmatpush1.msra.mxu0 0.0
        %2771 = vmatprep.subr.mxu0 0.0
        %2772 = vmatpush1.msra.mxu0 0.0
        %2773 = vmatprep.subr.mxu0 0.0
        %2774 = vmatpush1.msra.mxu0 0.0
        %2775 = vmatprep.subr.mxu0 0.0
        %2776 = vmatpush1.msra.mxu0 0.0
        %2777 = vmatprep.subr.mxu0 0.0
        %2778 = vmatpush1.msra.mxu0 0.0
        %2779 = vmatprep.subr.mxu0 0.0
        %2780 = vmatpush1.msra.mxu0 0.0
        %2781 = vmatprep.subr.mxu0 0.0
        %2782 = vmatpush1.msra.mxu0 0.0
        %2783 = vmatprep.subr.mxu0 0.0
        %2784 = vmatpush1.msra.mxu0 0.0
        %2785 = vmatprep.subr.mxu0 0.0
        %2786 = vmatpush1.msra.mxu0 0.0
        %2787 = vmatprep.subr.mxu0 0.0
        %2788 = vmatpush1.msra.mxu0 0.0
        %2789 = vmatprep.subr.mxu0 0.0
        %2790 = vmatpush1.msra.mxu0 0.0
        %2791 = vmatprep.subr.mxu0 0.0
        %2792 = vmatpush1.msra.mxu0 0.0
        %2793 = vmatprep.subr.mxu0 0.0
        %2794 = vmatpush1.msra.mxu0 0.0
        %2795 = vmatprep.subr.mxu0 0.0
        %2796 = vmatpush1.msra.mxu0 0.0
        %2797 = vmatprep.subr.mxu0 0.0
        %2798 = vmatpush1.msra.mxu0 0.0
        %2799 = vmatprep.subr.mxu0 0.0
        %2800 = vmatpush1.msra.mxu0 0.0
        %2801 = vmatprep.subr.mxu0 0.0
        %2802 = vmatpush1.msra.mxu0 0.0
        %2803 = vmatprep.subr.mxu0 0.0
        %2804 = vmatpush1.msra.mxu0 0.0
        %2805 = vmatprep.subr.mxu0 0.0
        %2806 = vmatpush1.msra.mxu0 0.0
        %2807 = vmatprep.subr.mxu0 0.0
        %2808 = vmatpush1.msra.mxu0 0.0
        %2809 = vmatprep.subr.mxu0 0.0
        %2810 = vmatpush1.msra.mxu0 0.0
        %2811 = vmatprep.subr.mxu0 0.0
        %2812 = vmatpush1.msra.mxu0 0.0
        %2813 = vmatprep.subr.mxu0 0.0
        %2814 = vmatpush1.msra.mxu0 0.0
        %2815 = vmatprep.mubr.f32.mxu0 0.0
        %2816 = vmatmul.mubr.f32.gmra.mrb[0].mxu0 %v2323
        %v2817 = vpop.f32.mrb[0].mxu0
        %v2818 = vadd.f32 %v2319, %v2817
        %v2819 = vpop.f32.mrb[0].mxu0
        %v2820 = vadd.f32 %v2319, %v2819
        %2821 = vdwg.mxu0
        %2822 = vmatprep.subr.mxu0 0.0
        %2823 = vmatpush1.msra.mxu0 %v2208
        %2824 = vmatprep.subr.mxu0 0.0
        %2825 = vmatpush1.msra.mxu0 %v2223
        %2826 = vmatprep.subr.mxu0 0.0
        %2827 = vmatpush1.msra.mxu0 %v2238
        %2828 = vmatprep.subr.mxu0 0.0
        %2829 = vmatpush1.msra.mxu0 %v2253
        %2830 = vmatprep.subr.mxu0 0.0
        %2831 = vmatpush1.msra.mxu0 %v2268
        %2832 = vmatprep.subr.mxu0 0.0
        %2833 = vmatpush1.msra.mxu0 %v2283
        %2834 = vmatprep.subr.mxu0 0.0
        %2835 = vmatpush1.msra.mxu0 %v2298
        %2836 = vmatprep.subr.mxu0 0.0
        %2837 = vmatpush1.msra.mxu0 %v2313
        %2838 = vmatprep.subr.mxu0 0.0
        %2839 = vmatpush1.msra.mxu0 0.0
        %2840 = vmatprep.subr.mxu0 0.0
        %2841 = vmatpush1.msra.mxu0 0.0
        %2842 = vmatprep.subr.mxu0 0.0
        %2843 = vmatpush1.msra.mxu0 0.0
        %2844 = vmatprep.subr.mxu0 0.0
        %2845 = vmatpush1.msra.mxu0 0.0
        %2846 = vmatprep.subr.mxu0 0.0
        %2847 = vmatpush1.msra.mxu0 0.0
        %2848 = vmatprep.subr.mxu0 0.0
        %2849 = vmatpush1.msra.mxu0 0.0
        %2850 = vmatprep.subr.mxu0 0.0
        %2851 = vmatpush1.msra.mxu0 0.0
        %2852 = vmatprep.subr.mxu0 0.0
        %2853 = vmatpush1.msra.mxu0 0.0
        %2854 = vmatprep.subr.mxu0 0.0
        %2855 = vmatpush1.msra.mxu0 0.0
        %2856 = vmatprep.subr.mxu0 0.0
        %2857 = vmatpush1.msra.mxu0 0.0
        %2858 = vmatprep.subr.mxu0 0.0
        %2859 = vmatpush1.msra.mxu0 0.0
        %2860 = vmatprep.subr.mxu0 0.0
        %2861 = vmatpush1.msra.mxu0 0.0
        %2862 = vmatprep.subr.mxu0 0.0
        %2863 = vmatpush1.msra.mxu0 0.0
        %2864 = vmatprep.subr.mxu0 0.0
        %2865 = vmatpush1.msra.mxu0 0.0
        %2866 = vmatprep.subr.mxu0 0.0
        %2867 = vmatpush1.msra.mxu0 0.0
        %2868 = vmatprep.subr.mxu0 0.0
        %2869 = vmatpush1.msra.mxu0 0.0
        %2870 = vmatprep.subr.mxu0 0.0
        %2871 = vmatpush1.msra.mxu0 0.0
        %2872 = vmatprep.subr.mxu0 0.0
        %2873 = vmatpush1.msra.mxu0 0.0
        %2874 = vmatprep.subr.mxu0 0.0
        %2875 = vmatpush1.msra.mxu0 0.0
        %2876 = vmatprep.subr.mxu0 0.0
        %2877 = vmatpush1.msra.mxu0 0.0
        %2878 = vmatprep.subr.mxu0 0.0
        %2879 = vmatpush1.msra.mxu0 0.0
        %2880 = vmatprep.subr.mxu0 0.0
        %2881 = vmatpush1.msra.mxu0 0.0
        %2882 = vmatprep.subr.mxu0 0.0
        %2883 = vmatpush1.msra.mxu0 0.0
        %2884 = vmatprep.subr.mxu0 0.0
        %2885 = vmatpush1.msra.mxu0 0.0
        %2886 = vmatprep.mubr.f32.mxu0 0.0
        %2887 = vmatmul.mubr.f32.gmra.mrb[0].mxu0 %v2323
        %v2888 = vpop.f32.mrb[0].mxu0
        %v2889 = vadd.f32 %v2319, %v2888
        %v2890 = vpop.f32.mrb[0].mxu0
        %2891 = vdwg.mxu0
        %v2906 = vcombine.low %v2392, %v2394
        %v2907 = vcombine.low %v2463, %v2465
        %v2908 = vcombine.low %v2534, %v2536
        %v2909 = vcombine.low %v2605, %v2607
        %v2910 = vcombine.low %v2676, %v2678
        %v2911 = vcombine.low %v2747, %v2749
        %v2912 = vcombine.low %v2818, %v2820
        %2920 = vst [vmem:[%s312] sm:$0x77] %v2906
        %2921 = vst [vmem:[%s312 + $0x8] sm:$0x77] %v2907
        %2922 = vst [vmem:[%s312 + $0x10] sm:$0x77] %v2908
        %2923 = vst [vmem:[%s312 + $0x18] sm:$0x77] %v2909
        %2924 = vst [vmem:[%s312 + $0x20] sm:$0x77] %v2910
        %2925 = vst [vmem:[%s312 + $0x28] sm:$0x77] %v2911
        %2926 = vst [vmem:[%s312 + $0x30] sm:$0x77] %v2912
        %vm2927 = vcmask 1034240
        %2928 = vst.msk [vmem:[%s312 + $0x38] sm:$0x7] %vm2927, %v2889
        %vm2929 = vcmask 1042432
        %v2930 = vsel %vm2929, %v2392, -inf
        %v2931 = vrot.slane %v2930, 4
        %v2932 = vmax.f32 %v2930, %v2931
        %v2933 = vrot.slane %v2932, 2
        %v2934 = vmax.f32 %v2932, %v2933
        %v2935 = vrot.slane %v2934, 1
        %v2936 = vmax.f32 %v2934, %v2935
        %v2937 = vsel %vm2929, %v2394, -inf
        %v2938 = vrot.slane %v2937, 4
        %v2939 = vmax.f32 %v2937, %v2938
        %v2940 = vrot.slane %v2939, 2
        %v2941 = vmax.f32 %v2939, %v2940
        %v2942 = vrot.slane %v2941, 1
        %v2943 = vmax.f32 %v2941, %v2942
        %v2944 = vsel %vm2929, %v2463, -inf
        %v2945 = vrot.slane %v2944, 4
        %v2946 = vmax.f32 %v2944, %v2945
        %v2947 = vrot.slane %v2946, 2
        %v2948 = vmax.f32 %v2946, %v2947
        %v2949 = vrot.slane %v2948, 1
        %v2950 = vmax.f32 %v2948, %v2949
        %v2951 = vsel %vm2929, %v2465, -inf
        %v2952 = vrot.slane %v2951, 4
        %v2953 = vmax.f32 %v2951, %v2952
        %v2954 = vrot.slane %v2953, 2
        %v2955 = vmax.f32 %v2953, %v2954
        %v2956 = vrot.slane %v2955, 1
        %v2957 = vmax.f32 %v2955, %v2956
        %v2958 = vsel %vm2929, %v2534, -inf
        %v2959 = vrot.slane %v2958, 4
        %v2960 = vmax.f32 %v2958, %v2959
        %v2961 = vrot.slane %v2960, 2
        %v2962 = vmax.f32 %v2960, %v2961
        %v2963 = vrot.slane %v2962, 1
        %v2964 = vmax.f32 %v2962, %v2963
        %v2965 = vsel %vm2929, %v2536, -inf
        %v2966 = vrot.slane %v2965, 4
        %v2967 = vmax.f32 %v2965, %v2966
        %v2968 = vrot.slane %v2967, 2
        %v2969 = vmax.f32 %v2967, %v2968
        %v2970 = vrot.slane %v2969, 1
        %v2971 = vmax.f32 %v2969, %v2970
        %v2972 = vsel %vm2929, %v2605, -inf
        %v2973 = vrot.slane %v2972, 4
        %v2974 = vmax.f32 %v2972, %v2973
        %v2975 = vrot.slane %v2974, 2
        %v2976 = vmax.f32 %v2974, %v2975
        %v2977 = vrot.slane %v2976, 1
        %v2978 = vmax.f32 %v2976, %v2977
        %v2979 = vsel %vm2929, %v2607, -inf
        %v2980 = vrot.slane %v2979, 4
        %v2981 = vmax.f32 %v2979, %v2980
        %v2982 = vrot.slane %v2981, 2
        %v2983 = vmax.f32 %v2981, %v2982
        %v2984 = vrot.slane %v2983, 1
        %v2985 = vmax.f32 %v2983, %v2984
        %v2986 = vsel %vm2929, %v2676, -inf
        %v2987 = vrot.slane %v2986, 4
        %v2988 = vmax.f32 %v2986, %v2987
        %v2989 = vrot.slane %v2988, 2
        %v2990 = vmax.f32 %v2988, %v2989
        %v2991 = vrot.slane %v2990, 1
        %v2992 = vmax.f32 %v2990, %v2991
        %v2993 = vsel %vm2929, %v2678, -inf
        %v2994 = vrot.slane %v2993, 4
        %v2995 = vmax.f32 %v2993, %v2994
        %v2996 = vrot.slane %v2995, 2
        %v2997 = vmax.f32 %v2995, %v2996
        %v2998 = vrot.slane %v2997, 1
        %v2999 = vmax.f32 %v2997, %v2998
        %v3000 = vsel %vm2929, %v2747, -inf
        %v3001 = vrot.slane %v3000, 4
        %v3002 = vmax.f32 %v3000, %v3001
        %v3003 = vrot.slane %v3002, 2
        %v3004 = vmax.f32 %v3002, %v3003
        %v3005 = vrot.slane %v3004, 1
        %v3006 = vmax.f32 %v3004, %v3005
        %v3007 = vsel %vm2929, %v2749, -inf
        %v3008 = vrot.slane %v3007, 4
        %v3009 = vmax.f32 %v3007, %v3008
        %v3010 = vrot.slane %v3009, 2
        %v3011 = vmax.f32 %v3009, %v3010
        %v3012 = vrot.slane %v3011, 1
        %v3013 = vmax.f32 %v3011, %v3012
        %v3014 = vsel %vm2929, %v2818, -inf
        %v3015 = vrot.slane %v3014, 4
        %v3016 = vmax.f32 %v3014, %v3015
        %v3017 = vrot.slane %v3016, 2
        %v3018 = vmax.f32 %v3016, %v3017
        %v3019 = vrot.slane %v3018, 1
        %v3020 = vmax.f32 %v3018, %v3019
        %v3021 = vsel %vm2929, %v2820, -inf
        %v3022 = vrot.slane %v3021, 4
        %v3023 = vmax.f32 %v3021, %v3022
        %v3024 = vrot.slane %v3023, 2
        %v3025 = vmax.f32 %v3023, %v3024
        %v3026 = vrot.slane %v3025, 1
        %v3027 = vmax.f32 %v3025, %v3026
        %v3028 = vsel %vm2927, %v2889, -inf
        %v3029 = vrot.slane %v3028, 4
        %v3030 = vmax.f32 %v3028, %v3029
        %v3031 = vrot.slane %v3030, 2
        %v3032 = vmax.f32 %v3030, %v3031
        %v3033 = vrot.slane %v3032, 1
        %v3034 = vmax.f32 %v3032, %v3033
        %v3035 = vsub.f32 %v2392, %v2936
        %v3036 = vsub.f32 %v2394, %v2943
        %v3037 = vsub.f32 %v2463, %v2950
        %v3038 = vsub.f32 %v2465, %v2957
        %v3039 = vsub.f32 %v2534, %v2964
        %v3040 = vsub.f32 %v2536, %v2971
        %v3041 = vsub.f32 %v2605, %v2978
        %v3042 = vsub.f32 %v2607, %v2985
        %v3043 = vsub.f32 %v2676, %v2992
        %v3044 = vsub.f32 %v2678, %v2999
        %v3045 = vsub.f32 %v2747, %v3006
        %v3046 = vsub.f32 %v2749, %v3013
        %v3047 = vsub.f32 %v2818, %v3020
        %v3048 = vsub.f32 %v2820, %v3027
        %v3049 = vsub.f32 %v2889, %v3034
        %v3050 = vmul.f32 %v3035, 1.442695
        %v3051 = vpow.pop %v3050
        %v3052 = vmul.f32 %v3036, 1.442695
        %v3053 = vpow.pop %v3052
        %v3054 = vmul.f32 %v3037, 1.442695
        %v3055 = vpow.pop %v3054
        %v3056 = vmul.f32 %v3038, 1.442695
        %v3057 = vpow.pop %v3056
        %v3058 = vmul.f32 %v3039, 1.442695
        %v3059 = vpow.pop %v3058
        %v3060 = vmul.f32 %v3040, 1.442695
        %v3061 = vpow.pop %v3060
        %v3062 = vmul.f32 %v3041, 1.442695
        %v3063 = vpow.pop %v3062
        %v3064 = vmul.f32 %v3042, 1.442695
        %v3065 = vpow.pop %v3064
        %v3066 = vmul.f32 %v3043, 1.442695
        %v3067 = vpow.pop %v3066
        %v3068 = vmul.f32 %v3044, 1.442695
        %v3069 = vpow.pop %v3068
        %v3070 = vmul.f32 %v3045, 1.442695
        %v3071 = vpow.pop %v3070
        %v3072 = vmul.f32 %v3046, 1.442695
        %v3073 = vpow.pop %v3072
        %v3074 = vmul.f32 %v3047, 1.442695
        %v3075 = vpow.pop %v3074
        %v3076 = vmul.f32 %v3048, 1.442695
        %v3077 = vpow.pop %v3076
        %v3078 = vmul.f32 %v3049, 1.442695
        %v3079 = vpow.pop %v3078
        %v3080 = vsel %vm2929, %v3051, 0.0
        %v3081 = vrot.slane %v3080, 4
        %v3082 = vadd.f32 %v3080, %v3081
        %v3083 = vrot.slane %v3082, 2
        %v3084 = vadd.f32 %v3082, %v3083
        %v3085 = vrot.slane %v3084, 1
        %v3086 = vadd.f32 %v3084, %v3085
        %v3087 = vsel %vm2929, %v3053, 0.0
        %v3088 = vrot.slane %v3087, 4
        %v3089 = vadd.f32 %v3087, %v3088
        %v3090 = vrot.slane %v3089, 2
        %v3091 = vadd.f32 %v3089, %v3090
        %v3092 = vrot.slane %v3091, 1
        %v3093 = vadd.f32 %v3091, %v3092
        %v3094 = vsel %vm2929, %v3055, 0.0
        %v3095 = vrot.slane %v3094, 4
        %v3096 = vadd.f32 %v3094, %v3095
        %v3097 = vrot.slane %v3096, 2
        %v3098 = vadd.f32 %v3096, %v3097
        %v3099 = vrot.slane %v3098, 1
        %v3100 = vadd.f32 %v3098, %v3099
        %v3101 = vsel %vm2929, %v3057, 0.0
        %v3102 = vrot.slane %v3101, 4
        %v3103 = vadd.f32 %v3101, %v3102
        %v3104 = vrot.slane %v3103, 2
        %v3105 = vadd.f32 %v3103, %v3104
        %v3106 = vrot.slane %v3105, 1
        %v3107 = vadd.f32 %v3105, %v3106
        %v3108 = vsel %vm2929, %v3059, 0.0
        %v3109 = vrot.slane %v3108, 4
        %v3110 = vadd.f32 %v3108, %v3109
        %v3111 = vrot.slane %v3110, 2
        %v3112 = vadd.f32 %v3110, %v3111
        %v3113 = vrot.slane %v3112, 1
        %v3114 = vadd.f32 %v3112, %v3113
        %v3115 = vsel %vm2929, %v3061, 0.0
        %v3116 = vrot.slane %v3115, 4
        %v3117 = vadd.f32 %v3115, %v3116
        %v3118 = vrot.slane %v3117, 2
        %v3119 = vadd.f32 %v3117, %v3118
        %v3120 = vrot.slane %v3119, 1
        %v3121 = vadd.f32 %v3119, %v3120
        %v3122 = vsel %vm2929, %v3063, 0.0
        %v3123 = vrot.slane %v3122, 4
        %v3124 = vadd.f32 %v3122, %v3123
        %v3125 = vrot.slane %v3124, 2
        %v3126 = vadd.f32 %v3124, %v3125
        %v3127 = vrot.slane %v3126, 1
        %v3128 = vadd.f32 %v3126, %v3127
        %v3129 = vsel %vm2929, %v3065, 0.0
        %v3130 = vrot.slane %v3129, 4
        %v3131 = vadd.f32 %v3129, %v3130
        %v3132 = vrot.slane %v3131, 2
        %v3133 = vadd.f32 %v3131, %v3132
        %v3134 = vrot.slane %v3133, 1
        %v3135 = vadd.f32 %v3133, %v3134
        %v3136 = vsel %vm2929, %v3067, 0.0
        %v3137 = vrot.slane %v3136, 4
        %v3138 = vadd.f32 %v3136, %v3137
        %v3139 = vrot.slane %v3138, 2
        %v3140 = vadd.f32 %v3138, %v3139
        %v3141 = vrot.slane %v3140, 1
        %v3142 = vadd.f32 %v3140, %v3141
        %v3143 = vsel %vm2929, %v3069, 0.0
        %v3144 = vrot.slane %v3143, 4
        %v3145 = vadd.f32 %v3143, %v3144
        %v3146 = vrot.slane %v3145, 2
        %v3147 = vadd.f32 %v3145, %v3146
        %v3148 = vrot.slane %v3147, 1
        %v3149 = vadd.f32 %v3147, %v3148
        %v3150 = vsel %vm2929, %v3071, 0.0
        %v3151 = vrot.slane %v3150, 4
        %v3152 = vadd.f32 %v3150, %v3151
        %v3153 = vrot.slane %v3152, 2
        %v3154 = vadd.f32 %v3152, %v3153
        %v3155 = vrot.slane %v3154, 1
        %v3156 = vadd.f32 %v3154, %v3155
        %v3157 = vsel %vm2929, %v3073, 0.0
        %v3158 = vrot.slane %v3157, 4
        %v3159 = vadd.f32 %v3157, %v3158
        %v3160 = vrot.slane %v3159, 2
        %v3161 = vadd.f32 %v3159, %v3160
        %v3162 = vrot.slane %v3161, 1
        %v3163 = vadd.f32 %v3161, %v3162
        %v3164 = vsel %vm2929, %v3075, 0.0
        %v3165 = vrot.slane %v3164, 4
        %v3166 = vadd.f32 %v3164, %v3165
        %v3167 = vrot.slane %v3166, 2
        %v3168 = vadd.f32 %v3166, %v3167
        %v3169 = vrot.slane %v3168, 1
        %v3170 = vadd.f32 %v3168, %v3169
        %v3171 = vsel %vm2929, %v3077, 0.0
        %v3172 = vrot.slane %v3171, 4
        %v3173 = vadd.f32 %v3171, %v3172
        %v3174 = vrot.slane %v3173, 2
        %v3175 = vadd.f32 %v3173, %v3174
        %v3176 = vrot.slane %v3175, 1
        %v3177 = vadd.f32 %v3175, %v3176
        %v3178 = vsel %vm2927, %v3079, 0.0
        %v3179 = vrot.slane %v3178, 4
        %v3180 = vadd.f32 %v3178, %v3179
        %v3181 = vrot.slane %v3180, 2
        %v3182 = vadd.f32 %v3180, %v3181
        %v3183 = vrot.slane %v3182, 1
        %v3184 = vadd.f32 %v3182, %v3183
        %v3185 = vrcp.pop %v3086
        %v3186 = vmul.f32 %v3051, %v3185
        %v3187 = vrcp.pop %v3093
        %v3188 = vmul.f32 %v3053, %v3187
        %v3189 = vrcp.pop %v3100
        %v3190 = vmul.f32 %v3055, %v3189
        %v3191 = vrcp.pop %v3107
        %v3192 = vmul.f32 %v3057, %v3191
        %v3193 = vrcp.pop %v3114
        %v3194 = vmul.f32 %v3059, %v3193
        %v3195 = vrcp.pop %v3121
        %v3196 = vmul.f32 %v3061, %v3195
        %v3197 = vrcp.pop %v3128
        %v3198 = vmul.f32 %v3063, %v3197
        %v3199 = vrcp.pop %v3135
        %v3200 = vmul.f32 %v3065, %v3199
        %v3201 = vrcp.pop %v3142
        %v3202 = vmul.f32 %v3067, %v3201
        %v3203 = vrcp.pop %v3149
        %v3204 = vmul.f32 %v3069, %v3203
        %v3205 = vrcp.pop %v3156
        %v3206 = vmul.f32 %v3071, %v3205
        %v3207 = vrcp.pop %v3163
        %v3208 = vmul.f32 %v3073, %v3207
        %v3209 = vrcp.pop %v3170
        %v3210 = vmul.f32 %v3075, %v3209
        %v3211 = vrcp.pop %v3177
        %v3212 = vmul.f32 %v3077, %v3211
        %v3213 = vrcp.pop %v3184
        %v3214 = vmul.f32 %v3079, %v3213
        %v3229 = vcombine.low %v3186, %v3188
        %v3230 = vcombine.low %v3190, %v3192
        %v3231 = vcombine.low %v3194, %v3196
        %v3232 = vcombine.low %v3198, %v3200
        %v3233 = vcombine.low %v3202, %v3204
        %v3234 = vcombine.low %v3206, %v3208
        %v3235 = vcombine.low %v3210, %v3212
        %3243 = vst [vmem:[%s322] sm:$0x77] %v3229
        %3244 = vst [vmem:[%s322 + $0x8] sm:$0x77] %v3230
        %3245 = vst [vmem:[%s322 + $0x10] sm:$0x77] %v3231
        %3246 = vst [vmem:[%s322 + $0x18] sm:$0x77] %v3232
        %3247 = vst [vmem:[%s322 + $0x20] sm:$0x77] %v3233
        %3248 = vst [vmem:[%s322 + $0x28] sm:$0x77] %v3234
        %3249 = vst [vmem:[%s322 + $0x30] sm:$0x77] %v3235
        %3250 = vst.msk [vmem:[%s322 + $0x38] sm:$0x7] %vm2927, %v3214
        %s3251 = smul.u32 16, %s26
        %p3252 = scmp.lt.s32.totalorder %s25, 1
        %s3253 = scalar_select %p3252, %s25, 1
        %p3254 = scmp.lt.s32.totalorder %s3251, 15
        %s3255 = scalar_select %p3254, %s3251, 15
        %s3256 = smul.addr %s3253, 16
        %s3257 = sadd.s32 %s3255, %s3256
        %s3258 = smul.addr %s3257, 4
        %s3259 = scalar_lea.vmem %s5, %s3258
        %s3260 = smul.u32 16, %s26
        %p3261 = scmp.lt.s32.totalorder %s25, 1
        %s3262 = scalar_select %p3261, %s25, 1
        %p3263 = scmp.lt.s32.totalorder %s3260, 15
        %s3264 = scalar_select %p3263, %s3260, 15
        %s3265 = smul.addr %s3262, 16
        %s3266 = sadd.s32 %s3264, %s3265
        %s3267 = smul.addr %s3266, 4
        %s3268 = scalar_lea.vmem %s6, %s3267
        // Predicated region
        $region45: #{tpu_custom_call.1} parent=39 // pred_check
          %p3269 = pneg %p165
        $region46: #{tpu_custom_call.1} parent=39 // pred_check_branch
          %3271 = sbr.rel (%p3269) target = $region48
        $region47: #{tpu_custom_call.1} parent=39 // pred_region
          %s3272 = smul.u32 16, %s26
        $region48: #{tpu_custom_call.1} parent=39 // pred_fallthru
          _
        // Predicated region
        $region49: #{tpu_custom_call.1} parent=39 // pred_check
          %p3273 = pneg %p193
        $region50: #{tpu_custom_call.1} parent=39 // pred_check_branch
          %3275 = sbr.rel (%p3273) target = $region52
        $region51: #{tpu_custom_call.1} parent=39 // pred_region
          %s3276 = smul.u32 16, %s26
        $region52: #{tpu_custom_call.1} parent=39 // pred_fallthru
          _
      $region40: #{tpu_custom_call.1} parent=5 // pred_fallthru
        _
      %p3277 = scmp.le.s32.totalorder 2, %s16
      // Predicated region
      $region53: #{tpu_custom_call.1} parent=5 // pred_check
        %p3278 = pneg %p3277
      $region54: #{tpu_custom_call.1} parent=5 // pred_check_branch
        %3280 = sbr.rel (%p3278) target = $region56
      $region55: #{tpu_custom_call.1} parent=5 // pred_region
        %s3281 = ssub.s32 %s16, 2
        // Predicated region
        $region57: #{tpu_custom_call.1} parent=55 // pred_check
          %p3282 = pneg %p171
        $region58: #{tpu_custom_call.1} parent=55 // pred_check_branch
          %3284 = sbr.rel (%p3282) target = $region60
        $region59: #{tpu_custom_call.1} parent=55 // pred_region
          %s3285 = smul.u32 16, %s28
          %p3286 = scmp.lt.s32.totalorder %s27, 1
          %s3287 = scalar_select %p3286, %s27, 1
          %p3288 = scmp.lt.s32.totalorder %s3285, 15
          %s3289 = scalar_select %p3288, %s3285, 15
          %s3290 = smul.addr %s3287, 16
          %s3291 = sadd.s32 %s3289, %s3290
          %s3292 = smul.addr %s3291, 4
          %s3293 = scalar_lea.vmem %s5, %s3292
        $region60: #{tpu_custom_call.1} parent=55 // pred_fallthru
          _
        // Predicated region
        $region61: #{tpu_custom_call.1} parent=55 // pred_check
          %p3294 = pneg %p199
        $region62: #{tpu_custom_call.1} parent=55 // pred_check_branch
          %3296 = sbr.rel (%p3294) target = $region64
        $region63: #{tpu_custom_call.1} parent=55 // pred_region
          %s3297 = smul.u32 16, %s28
          %p3298 = scmp.lt.s32.totalorder %s27, 1
          %s3299 = scalar_select %p3298, %s27, 1
          %p3300 = scmp.lt.s32.totalorder %s3297, 15
          %s3301 = scalar_select %p3300, %s3297, 15
          %s3302 = smul.addr %s3299, 16
          %s3303 = sadd.s32 %s3301, %s3302
          %s3304 = smul.addr %s3303, 4
          %s3305 = scalar_lea.vmem %s6, %s3304
        $region64: #{tpu_custom_call.1} parent=55 // pred_fallthru
          _
      $region56: #{tpu_custom_call.1} parent=5 // pred_fallthru
        _
    $region6: #{tpu_custom_call.1} parent=1 // loop_footer
      %s20 = sadd.s32 1, %s16
    $region7: #{tpu_custom_call.1} parent=1 // loop_footer_branch
      %15 = sbr.rel target = $region3
    $region8: #{tpu_custom_call.1} parent=1 // loop_exit
      _
    %3306 = vsyncpa [#allocation3], 1
    %s3307 = scalar_lea.sflag [#allocation3], 1
    %3308 = vsyncpa %s3307, 1

</llo_original>
